<compile_context>
chip_gen: v5e
topology: v5e:2x2
jax: 0.10.0
libtpu: 0.0.40
codegen_flags: <defaults>
</compile_context>

<pallas_src>
import functools

import jax
import jax.numpy as jnp
import numpy as np
from jax import lax
from jax.experimental import pallas as pl
from jax.experimental.pallas import tpu as pltpu

# Conv matmul operands (im2col patches + weights): bf16 -> ~2x MXU throughput on
# v6e/v7x, native path on v5e's bf16 MXU, half the operand VMEM/DMA footprint.
# Accumulation stays f32 via preferred_element_type.
MATMUL_DTYPE = jnp.bfloat16
# Intermediates y (post-conv1) and z (post-conv2) round-trip HBM in bf16; the
# BN+conv2 and BN+ReLU passes are memory-bound, so this halves their HBM traffic.
INTERMEDIATE_DTYPE = jnp.bfloat16
# Channel slabs inside the im2col patch matrix are padded to this many rows so
# every tap store into the patch scratch is a whole, pack-aligned sublane tile
# (16 rows for 2-byte dtypes, 8 for 4-byte). Realistic decoder channel counts
# are already multiples of this, so the padding only costs at toy sizes.
_CHANNEL_ALIGN = 16 if jnp.dtype(MATMUL_DTYPE).itemsize < 4 else 8


def _ceil_to(x, m):
    return ((x + m - 1) // m) * m


def _vmem_limit_bytes():
    # Size the scoped-VMEM cap per chip generation (~96 MiB on v5e/v6e's 128 MiB,
    # ~48 MiB on v7x's 64 MiB) instead of a fixed small cap.
    try:
        cap = int(pltpu.get_tpu_info().vmem_capacity_bytes)
    except Exception:  # conservative fallback if the query is unavailable
        cap = 64 * 1024 * 1024
    return cap * 3 // 4


def _compiler_params():
    return pltpu.CompilerParams(
        dimension_semantics=("parallel",),
        vmem_limit_bytes=_vmem_limit_bytes(),
    )


# ----------------------------------------------------------------------------
# Host-side (trace-time numpy) constants: interpolation + tap geometry
# ----------------------------------------------------------------------------
def _interp_matrix(n_in, n_out):
    """Linear interpolation matrix (n_out, n_in), align_corners=True."""
    if n_in == 1:
        return np.ones((n_out, 1), np.float32)
    src = np.arange(n_out, dtype=np.float64) * (n_in - 1) / (n_out - 1)
    lo = np.clip(np.floor(src).astype(np.int64), 0, n_in - 2)
    frac = (src - lo).astype(np.float32)
    rows = np.arange(n_out)
    m = np.zeros((n_out, n_in), np.float32)
    m[rows, lo] += 1.0 - frac
    m[rows, lo + 1] += frac
    return m


def _hw_upsample_matrix_t(h0, w0):
    """(H0*W0, H*W) matrix: x(R, H0*W0) @ M == bilinear-2x upsample of the
    trailing (H0, W0) grid, flattened.  Quadratic only in H0*W0 (KB..MB scale),
    unlike the full 3-D Kronecker which is quadratic in the whole volume."""
    m = np.kron(_interp_matrix(h0, 2 * h0), _interp_matrix(w0, 2 * w0))
    return np.ascontiguousarray(m.T).astype(np.float32)          # (H0W0, HW)


def _d_lerp_taps(d0, d):
    """Static (lo, hi, frac) per output depth plane for the separable D-upsample."""
    if d0 == 1:
        return tuple((0, 0, 0.0) for _ in range(d))
    taps = []
    for i in range(d):
        src = i * (d0 - 1) / (d - 1)
        lo = min(int(np.floor(src)), d0 - 2)
        taps.append((lo, lo + 1, float(src - lo)))
    return tuple(taps)


def _tap_offsets_and_masks(d, h, w):
    """Flat-spatial offsets + validity masks for the 27 conv taps (padding=1)."""
    s = np.arange(d * h * w)
    di = s // (h * w)
    hi = (s // w) % h
    wi = s % w
    offs, masks = [], []
    for kd in range(3):
        for kh in range(3):
            for kw in range(3):
                od, oh, ow = kd - 1, kh - 1, kw - 1
                offs.append(od * h * w + oh * w + ow)
                valid = ((di + od >= 0) & (di + od < d) &
                         (hi + oh >= 0) & (hi + oh < h) &
                         (wi + ow >= 0) & (wi + ow < w))
                masks.append(valid.astype(np.float32))
    return tuple(offs), np.stack(masks, axis=0)                  # (27, S)


# ----------------------------------------------------------------------------
# In-kernel helpers (traced Python)
# ----------------------------------------------------------------------------
def _conv_taps(a, mask_ref, w_ref, patch_ref, offs):
    """3x3x3 conv (padding=1) on a flat-spatial slab via one im2col MXU matmul.

    a:         (C_p, S)        f32 input slab (already activated)
    mask_ref:  (27, S)         f32 tap validity masks (implements zero padding)
    w_ref:     (Cout, 27*C_p)  MATMUL_DTYPE weights, tap-major / channel-minor
    patch_ref: (27*C_p, S)     MATMUL_DTYPE persistent VMEM im2col scratch
    Returns (Cout, S) float32 (lane-dense accumulator).
    """
    c_p, s = a.shape
    for t, off in enumerate(offs):
        # slab[:, p] = a[:, p + off] where the tap stays in bounds, else 0
        # (== zero padding).  pltpu.roll uses the XLU rotate slot, keeping the
        # VALU / load-store slots free; wrapped values only survive at
        # masked-off positions.
        shifted = a if off == 0 else pltpu.roll(a, shift=(-off) % s, axis=1)
        patch_ref[pl.ds(t * c_p, c_p), :] = (
            shifted * mask_ref[pl.ds(t, 1), :]).astype(patch_ref.dtype)
    return jnp.dot(w_ref[...], patch_ref[...],
                   preferred_element_type=jnp.float32)


def _channel_stats(v):
    """Per-channel [sum, sum-of-squares] over the flat spatial axis -> (C, 2)."""
    # TODO(synk): E[x^2]-E[x]^2 cancels badly when |mean| >> std at huge N*S;
    # switch to a two-pass / Welford-style combine before scaling to big volumes.
    return jnp.concatenate(
        [jnp.sum(v, axis=1, keepdims=True),
         jnp.sum(v * v, axis=1, keepdims=True)], axis=1)


# ----------------------------------------------------------------------------
# Pallas kernels
# ----------------------------------------------------------------------------
def _up_conv1_kernel(x_ref, khw_ref, mask_ref, w_ref, y_ref, stat_ref, patch_ref,
                     *, offs, d_taps, cin_pad):
    """Fused separable trilinear-2x upsample + first 3x3x3 conv, one sample.

    x_ref:     (1, D0*Cin_p, H0*W0)  pre-upsample input, rows d-major / ch-minor
    khw_ref:   (H0*W0, H*W)          bilinear HW interpolation matrix (f32)
    mask_ref:  (27, S)               tap validity masks (zero padding)
    w_ref:     (Cmid_p, 27*Cin_p)    conv1 weights (MATMUL_DTYPE)
    y_ref:     (1, Cmid_p, S)        raw conv1 output (pre-BN), lane-dense
    stat_ref:  (1, Cmid_p, 2)        per-channel [sum, sumsq] of y (for BN1)
    patch_ref: (27*Cin_p, S)         im2col VMEM scratch
    """
    # HW upsample: one small lane matmul.  Kept f32: the align_corners
    # fractions are not bf16-exact and this is a tiny fraction of conv FLOPs.
    u = jnp.dot(x_ref[0], khw_ref[...],
                preferred_element_type=jnp.float32)              # (D0*Cin_p, HW)
    # D upsample: static 2-tap lerp per output plane (no quadratic matrix).
    planes = []
    for lo, hi, frac in d_taps:
        p_lo = u[lo * cin_pad:(lo + 1) * cin_pad, :]
        if frac == 0.0:
            planes.append(p_lo)
        else:
            p_hi = u[hi * cin_pad:(hi + 1) * cin_pad, :]
            planes.append(p_lo * (1.0 - frac) + p_hi * frac)
    up = jnp.concatenate(planes, axis=1)                         # (Cin_p, S)
    y = _conv_taps(up, mask_ref, w_ref, patch_ref, offs)         # (Cmid_p, S) f32
    y_ref[0] = y.astype(y_ref.dtype)
    stat_ref[0] = _channel_stats(y)


def _bnrelu_conv2_kernel(y_ref, scale_ref, shift_ref, mask_ref, w_ref,
                         z_ref, stat_ref, patch_ref, *, offs):
    """Fused BN1+ReLU1 (on the input tile) + second 3x3x3 conv + BN2 stats.

    Applying scale/shift to the *unpadded* tile and zeroing out-of-range taps
    via the masks reproduces PyTorch's zero padding of the activated tensor
    exactly (the shift term never leaks into the border)."""
    a = jnp.maximum(
        y_ref[0].astype(jnp.float32) * scale_ref[...] + shift_ref[...], 0.0)
    z = _conv_taps(a, mask_ref, w_ref, patch_ref, offs)          # (Cout, S) f32
    z_ref[0] = z.astype(z_ref.dtype)
    stat_ref[0] = _channel_stats(z)


def _bn_relu_kernel(z_ref, scale_ref, shift_ref, o_ref):
    """Final folded BatchNorm + ReLU, lane-dense (last dim = D*H*W)."""
    o_ref[0] = jnp.maximum(
        z_ref[0].astype(jnp.float32) * scale_ref[...] + shift_ref[...],
        0.0).astype(o_ref.dtype)


# ----------------------------------------------------------------------------
# Pallas wrappers
# ----------------------------------------------------------------------------
def up_conv1_pallas(x2d, khw_t, masks, w1k, offs, d_taps, cin_p):
    n, rows, hw0 = x2d.shape
    hw = khw_t.shape[1]
    s = hw * len(d_taps)
    cmid_p = w1k.shape[0]
    kernel = functools.partial(_up_conv1_kernel, offs=offs, d_taps=d_taps,
                               cin_pad=cin_p)
    # TODO(synk): for large N with tiny channel counts, stack several samples'
    # patch matrices along the lane axis per grid step to amortize weight pushes
    # (kept 1 sample/step here so megacore still gets >=2 parallel blocks).
    return pl.pallas_call(
        kernel,
        out_shape=(jax.ShapeDtypeStruct((n, cmid_p, s), INTERMEDIATE_DTYPE),
                   jax.ShapeDtypeStruct((n, cmid_p, 2), jnp.float32)),
        grid=(n,),
        in_specs=[
            pl.BlockSpec((1, rows, hw0), lambda i: (i, 0, 0)),
            # Grid-invariant operands (constant index_map).
            # TODO(synk): pipeline_mode=pl.Buffered(1) would halve their VMEM
            # footprint on v7x once single-buffering is supported.
            pl.BlockSpec((khw_t.shape[0], hw), lambda i: (0, 0)),
            pl.BlockSpec((27, s), lambda i: (0, 0)),
            pl.BlockSpec((cmid_p, 27 * cin_p), lambda i: (0, 0)),
        ],
        out_specs=(pl.BlockSpec((1, cmid_p, s), lambda i: (i, 0, 0)),
                   pl.BlockSpec((1, cmid_p, 2), lambda i: (i, 0, 0))),
        scratch_shapes=[pltpu.VMEM((27 * cin_p, s), MATMUL_DTYPE)],
        compiler_params=_compiler_params(),
    )(x2d, khw_t, masks, w1k)


def bnrelu_conv2_pallas(y, scale, shift, masks, w2k, offs):
    n, cmid_p, s = y.shape
    cout = w2k.shape[0]
    kernel = functools.partial(_bnrelu_conv2_kernel, offs=offs)
    return pl.pallas_call(
        kernel,
        out_shape=(jax.ShapeDtypeStruct((n, cout, s), INTERMEDIATE_DTYPE),
                   jax.ShapeDtypeStruct((n, cout, 2), jnp.float32)),
        grid=(n,),
        in_specs=[
            pl.BlockSpec((1, cmid_p, s), lambda i: (i, 0, 0)),
            pl.BlockSpec((cmid_p, 1), lambda i: (0, 0)),
            pl.BlockSpec((cmid_p, 1), lambda i: (0, 0)),
            pl.BlockSpec((27, s), lambda i: (0, 0)),
            pl.BlockSpec((cout, 27 * cmid_p), lambda i: (0, 0)),
        ],
        out_specs=(pl.BlockSpec((1, cout, s), lambda i: (i, 0, 0)),
                   pl.BlockSpec((1, cout, 2), lambda i: (i, 0, 0))),
        scratch_shapes=[pltpu.VMEM((27 * cmid_p, s), MATMUL_DTYPE)],
        compiler_params=_compiler_params(),
    )(y, scale, shift, masks, w2k)


def bn_relu_pallas(z, scale, shift):
    n, c, s = z.shape
    # TODO(synk): fuse this elementwise pass into the downstream consumer (or
    # alias z as the output once dtypes match) to drop one full HBM round trip.
    return pl.pallas_call(
        _bn_relu_kernel,
        out_shape=jax.ShapeDtypeStruct((n, c, s), jnp.float32),
        grid=(n,),
        in_specs=[
            pl.BlockSpec((1, c, s), lambda i: (i, 0, 0)),
            pl.BlockSpec((c, 1), lambda i: (0, 0)),
            pl.BlockSpec((c, 1), lambda i: (0, 0)),
        ],
        out_specs=pl.BlockSpec((1, c, s), lambda i: (i, 0, 0)),
        compiler_params=_compiler_params(),
    )(z, scale, shift)


# ----------------------------------------------------------------------------
# Forward pass
# ----------------------------------------------------------------------------
def _fold_bn(stats, count, gamma, beta, eps):
    """Fold training-mode BatchNorm (biased variance, as in PyTorch's training
    forward) into per-channel scale/shift from per-sample (sum, sumsq) stats."""
    total = jnp.sum(stats, axis=0)                # (C, 2)
    mean = total[:, 0] / count
    var = total[:, 1] / count - mean * mean
    scale = gamma / jnp.sqrt(var + eps)
    shift = beta - mean * scale
    return scale, shift


def up_3d_forward(x_ncdhw, w1, g1, b1, w2, g2, b2, eps=1e-5):
    """Up_3d(bilinear=True).forward; input/output in PyTorch NCDHW layout."""
    N, Cin, D0, H0, W0 = x_ncdhw.shape
    D, H, W = 2 * D0, 2 * H0, 2 * W0
    HW0, S = H0 * W0, D * H * W
    Cmid, Cout = w1.shape[-1], w2.shape[-1]
    Cin_p = _ceil_to(Cin, _CHANNEL_ALIGN)
    Cmid_p = _ceil_to(Cmid, _CHANNEL_ALIGN)

    # TODO(synk): for volumes whose whole-sample tiles exceed ~half of v7x's
    # 64 MiB VMEM, add a D-plane grid axis (1-plane halo for the conv taps,
    # 2-plane halo for the D-lerp) so the (27*C, S_tile) im2col scratch stays
    # resident; at these decoder shapes whole-sample tiles are a few hundred KiB.

    # Pre-upsample input: pad channels to the alignment and reorder rows
    # d-major / channel-minor so the in-kernel D-lerp reads contiguous,
    # pack-aligned row blocks (cheap XLA shuffle of the *small* tensor).
    x = x_ncdhw.astype(jnp.float32).reshape(N, Cin, D0, HW0)
    if Cin_p != Cin:
        x = jnp.pad(x, ((0, 0), (0, Cin_p - Cin), (0, 0), (0, 0)))
    x2d = jnp.transpose(x, (0, 2, 1, 3)).reshape(N, D0 * Cin_p, HW0)

    khw_t = jnp.asarray(_hw_upsample_matrix_t(H0, W0))           # (HW0, H*W) f32
    d_taps = _d_lerp_taps(D0, D)
    offs, masks_np = _tap_offsets_and_masks(D, H, W)
    masks = jnp.asarray(masks_np)                                # (27, S) f32

    # Conv weights DHWIO -> (out_ch, 27*in_ch_padded), tap-major / channel-minor
    # columns, zero-padded channels, stored bf16 (halves weight VMEM/DMA).
    w1r = jnp.pad(w1.astype(jnp.float32).reshape(27, Cin, Cmid),
                  ((0, 0), (0, Cin_p - Cin), (0, 0)))
    w1k = jnp.pad(jnp.transpose(w1r, (2, 0, 1)).reshape(Cmid, 27 * Cin_p),
                  ((0, Cmid_p - Cmid), (0, 0))).astype(MATMUL_DTYPE)
    w2r = jnp.pad(w2.astype(jnp.float32).reshape(27, Cmid, Cout),
                  ((0, 0), (0, Cmid_p - Cmid), (0, 0)))
    w2k = jnp.transpose(w2r, (2, 0, 1)).reshape(Cout, 27 * Cmid_p).astype(MATMUL_DTYPE)

    # Padded BN1 channels get gamma=beta=0 -> scale=shift=0 -> stay exactly zero.
    g1p = jnp.pad(g1.astype(jnp.float32), (0, Cmid_p - Cmid))
    b1p = jnp.pad(b1.astype(jnp.float32), (0, Cmid_p - Cmid))

    y, st1 = up_conv1_pallas(x2d, khw_t, masks, w1k, offs, d_taps, Cin_p)
    scale1, shift1 = _fold_bn(st1, N * S, g1p, b1p, eps)
    z, st2 = bnrelu_conv2_pallas(y, scale1.reshape(Cmid_p, 1),
                                 shift1.reshape(Cmid_p, 1), masks, w2k, offs)
    scale2, shift2 = _fold_bn(st2, N * S, g2.astype(jnp.float32),
                              b2.astype(jnp.float32), eps)
    out = bn_relu_pallas(z, scale2.reshape(Cout, 1), shift2.reshape(Cout, 1))
    return out.reshape(N, Cout, D, H, W)


# ----------------------------------------------------------------------------
# Pure-JAX reference (lax.conv) for correctness checking.
# ----------------------------------------------------------------------------
def _trilinear_upsample2x_ref(x):
    n, d, h, w, c = x.shape
    md = jnp.asarray(_interp_matrix(d, 2 * d))
    mh = jnp.asarray(_interp_matrix(h, 2 * h))
    mw = jnp.asarray(_interp_matrix(w, 2 * w))
    return jnp.einsum("pa,qb,rc,nabck->npqrk", md, mh, mw, x)


def up_3d_reference(x_ncdhw, w1, g1, b1, w2, g2, b2, eps=1e-5):
    x = jnp.transpose(x_ncdhw, (0, 2, 3, 4, 1)).astype(jnp.float32)   # -> NDHWC
    x = _trilinear_upsample2x_ref(x)

    def conv(a, wk):
        return lax.conv_general_dilated(
            a, wk, window_strides=(1, 1, 1),
            padding=((1, 1), (1, 1), (1, 1)),
            dimension_numbers=("NDHWC", "DHWIO", "NDHWC"))

    def bn_relu(v, g, b):
        mean = jnp.mean(v, axis=(0, 1, 2, 3))
        var = jnp.var(v, axis=(0, 1, 2, 3))      # biased, PyTorch training forward
        scale = g / jnp.sqrt(var + eps)
        shift = b - mean * scale
        return jnp.maximum(v * scale + shift, 0.0)

    y = bn_relu(conv(x, w1), g1, b1)
    y = bn_relu(conv(y, w2), g2, b2)
    return jnp.transpose(y, (0, 4, 1, 2, 3))     # -> NCDHW


# ----------------------------------------------------------------------------
if __name__ == "__main__":
    # Up_3d(in_channels=8, out_channels=4, bilinear=True): mid = in // 2 = 4.
    N, Cin, D0, H0, W0 = 2, 8, 4, 4, 4
    Cmid, Cout = Cin // 2, 4

    key = jax.random.PRNGKey(0)
    kx, kw1, kw2 = jax.random.split(key, 3)
    x1 = jax.random.normal(kx, (N, Cin, D0, H0, W0), jnp.float32)
    # Conv weights stored DHWIO (PyTorch Conv3d weight (O, I, 3, 3, 3) transposed).
    w1 = 0.1 * jax.random.normal(kw1, (3, 3, 3, Cin, Cmid), jnp.float32)
    w2 = 0.1 * jax.random.normal(kw2, (3, 3, 3, Cmid, Cout), jnp.float32)
    # BatchNorm affine params at PyTorch init: weight=1, bias=0.
    g1, b1 = jnp.ones((Cmid,), jnp.float32), jnp.zeros((Cmid,), jnp.float32)
    g2, b2 = jnp.ones((Cout,), jnp.float32), jnp.zeros((Cout,), jnp.float32)

    out = jax.block_until_ready(jax.jit(up_3d_forward)(x1, w1, g1, b1, w2, g2, b2))
    ref = jax.block_until_ready(jax.jit(up_3d_reference)(x1, w1, g1, b1, w2, g2, b2))

    assert out.shape == (N, Cout, 2 * D0, 2 * H0, 2 * W0), out.shape
    max_err = float(jnp.max(jnp.abs(out - ref)))
    # bf16 matmul operands + bf16 y/z intermediates -> ~1e-2 expected deviation
    # from the all-f32 reference; real bugs (wrong tap/mask/BN) blow far past this.
    assert jnp.allclose(out, ref, atol=5e-2, rtol=5e-2), max_err
    print("KERNEL_OK")
</pallas_src>

<mosaic_0001>
module attributes {stable_mosaic.version = 11 : i64} {
  func.func @_up_conv1_kernel(%arg0: i32, %arg1: memref<1x64x16xf32, #tpu.memory_space<vmem>>, %arg2: memref<16x64xf32, #tpu.memory_space<vmem>>, %arg3: memref<27x512xf32, #tpu.memory_space<vmem>>, %arg4: memref<16x432xbf16, #tpu.memory_space<vmem>>, %arg5: memref<1x16x512xbf16, #tpu.memory_space<vmem>>, %arg6: memref<1x16x2xf32, #tpu.memory_space<vmem>>, %arg7: memref<432x512xbf16, #tpu.memory_space<vmem>>) attributes {dimension_semantics = [#tpu.dimension_semantics<parallel>], iteration_bounds = array<i64: 2>, scalar_prefetch = 0 : i64, scratch_operands = 1 : i64, tpu.core_type = #tpu.core_type<tc>, window_params = [{transform_indices = @transform_0, window_bounds = array<i64: 1, 64, 16>}, {pipeline_mode = #tpu.pipeline_mode<synchronous>, transform_indices = @transform_1, window_bounds = array<i64: 16, 64>}, {pipeline_mode = #tpu.pipeline_mode<synchronous>, transform_indices = @transform_2, window_bounds = array<i64: 27, 512>}, {pipeline_mode = #tpu.pipeline_mode<synchronous>, transform_indices = @transform_3, window_bounds = array<i64: 16, 432>}, {transform_indices = @transform_4, window_bounds = array<i64: 1, 16, 512>}, {transform_indices = @transform_5, window_bounds = array<i64: 1, 16, 2>}]} {
    %c0 = arith.constant 0 : index
    %c0_0 = arith.constant 0 : index
    %c0_1 = arith.constant 0 : index
    %0 = vector.load %arg1[%c0, %c0_0, %c0_1] : memref<1x64x16xf32, #tpu.memory_space<vmem>>, vector<1x64x16xf32>
    %1 = vector.shape_cast %0 : vector<1x64x16xf32> to vector<64x16xf32>
    %c0_2 = arith.constant 0 : index
    %c0_3 = arith.constant 0 : index
    %2 = vector.load %arg2[%c0_2, %c0_3] : memref<16x64xf32, #tpu.memory_space<vmem>>, vector<16x64xf32>
    %cst = arith.constant dense<0.000000e+00> : vector<64x64xf32>
    %3 = tpu.matmul %1, %2, %cst {dimension_numbers = #tpu.dot_dimension_numbers<[1], [0], [0], [1], [0, 0, 1, 1], [], []>} : vector<64x16xf32>, vector<16x64xf32>, vector<64x64xf32> -> vector<64x64xf32>
    %4 = vector.extract_strided_slice %3 {offsets = [0, 0], sizes = [16, 64], strides = [1, 1]} : vector<64x64xf32> to vector<16x64xf32>
    %5 = vector.extract_strided_slice %3 {offsets = [0, 0], sizes = [16, 64], strides = [1, 1]} : vector<64x64xf32> to vector<16x64xf32>
    %6 = vector.extract_strided_slice %3 {offsets = [16, 0], sizes = [16, 64], strides = [1, 1]} : vector<64x64xf32> to vector<16x64xf32>
    %cst_4 = arith.constant 0.571428597 : f32
    %7 = vector.broadcast %cst_4 : f32 to vector<16x64xf32>
    %8 = arith.mulf %5, %7 : vector<16x64xf32>
    %cst_5 = arith.constant 0.428571433 : f32
    %9 = vector.broadcast %cst_5 : f32 to vector<16x64xf32>
    %10 = arith.mulf %6, %9 : vector<16x64xf32>
    %11 = arith.addf %8, %10 : vector<16x64xf32>
    %12 = vector.extract_strided_slice %3 {offsets = [0, 0], sizes = [16, 64], strides = [1, 1]} : vector<64x64xf32> to vector<16x64xf32>
    %13 = vector.extract_strided_slice %3 {offsets = [16, 0], sizes = [16, 64], strides = [1, 1]} : vector<64x64xf32> to vector<16x64xf32>
    %cst_6 = arith.constant 0.142857149 : f32
    %14 = vector.broadcast %cst_6 : f32 to vector<16x64xf32>
    %15 = arith.mulf %12, %14 : vector<16x64xf32>
    %cst_7 = arith.constant 0.857142865 : f32
    %16 = vector.broadcast %cst_7 : f32 to vector<16x64xf32>
    %17 = arith.mulf %13, %16 : vector<16x64xf32>
    %18 = arith.addf %15, %17 : vector<16x64xf32>
    %19 = vector.extract_strided_slice %3 {offsets = [16, 0], sizes = [16, 64], strides = [1, 1]} : vector<64x64xf32> to vector<16x64xf32>
    %20 = vector.extract_strided_slice %3 {offsets = [32, 0], sizes = [16, 64], strides = [1, 1]} : vector<64x64xf32> to vector<16x64xf32>
    %cst_8 = arith.constant 0.714285731 : f32
    %21 = vector.broadcast %cst_8 : f32 to vector<16x64xf32>
    %22 = arith.mulf %19, %21 : vector<16x64xf32>
    %cst_9 = arith.constant 0.285714298 : f32
    %23 = vector.broadcast %cst_9 : f32 to vector<16x64xf32>
    %24 = arith.mulf %20, %23 : vector<16x64xf32>
    %25 = arith.addf %22, %24 : vector<16x64xf32>
    %26 = vector.extract_strided_slice %3 {offsets = [16, 0], sizes = [16, 64], strides = [1, 1]} : vector<64x64xf32> to vector<16x64xf32>
    %27 = vector.extract_strided_slice %3 {offsets = [32, 0], sizes = [16, 64], strides = [1, 1]} : vector<64x64xf32> to vector<16x64xf32>
    %cst_10 = arith.constant 0.285714298 : f32
    %28 = vector.broadcast %cst_10 : f32 to vector<16x64xf32>
    %29 = arith.mulf %26, %28 : vector<16x64xf32>
    %cst_11 = arith.constant 0.714285731 : f32
    %30 = vector.broadcast %cst_11 : f32 to vector<16x64xf32>
    %31 = arith.mulf %27, %30 : vector<16x64xf32>
    %32 = arith.addf %29, %31 : vector<16x64xf32>
    %33 = vector.extract_strided_slice %3 {offsets = [32, 0], sizes = [16, 64], strides = [1, 1]} : vector<64x64xf32> to vector<16x64xf32>
    %34 = vector.extract_strided_slice %3 {offsets = [48, 0], sizes = [16, 64], strides = [1, 1]} : vector<64x64xf32> to vector<16x64xf32>
    %cst_12 = arith.constant 0.857142865 : f32
    %35 = vector.broadcast %cst_12 : f32 to vector<16x64xf32>
    %36 = arith.mulf %33, %35 : vector<16x64xf32>
    %cst_13 = arith.constant 0.142857149 : f32
    %37 = vector.broadcast %cst_13 : f32 to vector<16x64xf32>
    %38 = arith.mulf %34, %37 : vector<16x64xf32>
    %39 = arith.addf %36, %38 : vector<16x64xf32>
    %40 = vector.extract_strided_slice %3 {offsets = [32, 0], sizes = [16, 64], strides = [1, 1]} : vector<64x64xf32> to vector<16x64xf32>
    %41 = vector.extract_strided_slice %3 {offsets = [48, 0], sizes = [16, 64], strides = [1, 1]} : vector<64x64xf32> to vector<16x64xf32>
    %cst_14 = arith.constant 0.428571433 : f32
    %42 = vector.broadcast %cst_14 : f32 to vector<16x64xf32>
    %43 = arith.mulf %40, %42 : vector<16x64xf32>
    %cst_15 = arith.constant 0.571428597 : f32
    %44 = vector.broadcast %cst_15 : f32 to vector<16x64xf32>
    %45 = arith.mulf %41, %44 : vector<16x64xf32>
    %46 = arith.addf %43, %45 : vector<16x64xf32>
    %47 = vector.extract_strided_slice %3 {offsets = [32, 0], sizes = [16, 64], strides = [1, 1]} : vector<64x64xf32> to vector<16x64xf32>
    %48 = vector.extract_strided_slice %3 {offsets = [48, 0], sizes = [16, 64], strides = [1, 1]} : vector<64x64xf32> to vector<16x64xf32>
    %cst_16 = arith.constant 0.000000e+00 : f32
    %49 = vector.broadcast %cst_16 : f32 to vector<16x64xf32>
    %50 = arith.mulf %47, %49 : vector<16x64xf32>
    %cst_17 = arith.constant 1.000000e+00 : f32
    %51 = vector.broadcast %cst_17 : f32 to vector<16x64xf32>
    %52 = arith.mulf %48, %51 : vector<16x64xf32>
    %53 = arith.addf %50, %52 : vector<16x64xf32>
    %54 = tpu.concatenate %4, %11, %18, %25, %32, %39, %46, %53 in 1 : vector<16x64xf32>, vector<16x64xf32>, vector<16x64xf32>, vector<16x64xf32>, vector<16x64xf32>, vector<16x64xf32>, vector<16x64xf32>, vector<16x64xf32> -> vector<16x512xf32>
    %c73_i32 = arith.constant 73 : i32
    %55 = tpu.dynamic_rotate %54 by %c73_i32 dim 1 : vector<16x512xf32>, i32 -> vector<16x512xf32>
    %c0_18 = arith.constant 0 : index
    %c0_19 = arith.constant 0 : index
    %56 = vector.load %arg3[%c0_18, %c0_19] : memref<27x512xf32, #tpu.memory_space<vmem>>, vector<1x512xf32>
    %57 = vector.broadcast %56 : vector<1x512xf32> to vector<16x512xf32>
    %58 = arith.mulf %55, %57 : vector<16x512xf32>
    %59 = arith.truncf %58 : vector<16x512xf32> to vector<16x512xbf16>
    %c0_20 = arith.constant 0 : index
    %c0_21 = arith.constant 0 : index
    %60 = vector.load %arg7[%c0_20, %c0_21] : memref<432x512xbf16, #tpu.memory_space<vmem>>, vector<16x512xbf16>
    tpu.vector_store %arg7[%c0_20, %c0_21], %59 {strides = array<i32>} : memref<432x512xbf16, #tpu.memory_space<vmem>>, vector<16x512xbf16>,
    %c72_i32 = arith.constant 72 : i32
    %61 = tpu.dynamic_rotate %54 by %c72_i32 dim 1 : vector<16x512xf32>, i32 -> vector<16x512xf32>
    %c1 = arith.constant 1 : index
    %c0_22 = arith.constant 0 : index
    %62 = vector.load %arg3[%c1, %c0_22] : memref<27x512xf32, #tpu.memory_space<vmem>>, vector<1x512xf32>
    %63 = vector.broadcast %62 : vector<1x512xf32> to vector<16x512xf32>
    %64 = arith.mulf %61, %63 : vector<16x512xf32>
    %65 = arith.truncf %64 : vector<16x512xf32> to vector<16x512xbf16>
    %c16 = arith.constant 16 : index
    %c0_23 = arith.constant 0 : index
    %66 = vector.load %arg7[%c16, %c0_23] : memref<432x512xbf16, #tpu.memory_space<vmem>>, vector<16x512xbf16>
    tpu.vector_store %arg7[%c16, %c0_23], %65 {strides = array<i32>} : memref<432x512xbf16, #tpu.memory_space<vmem>>, vector<16x512xbf16>,
    %c71_i32 = arith.constant 71 : i32
    %67 = tpu.dynamic_rotate %54 by %c71_i32 dim 1 : vector<16x512xf32>, i32 -> vector<16x512xf32>
    %c2 = arith.constant 2 : index
    %c0_24 = arith.constant 0 : index
    %68 = vector.load %arg3[%c2, %c0_24] : memref<27x512xf32, #tpu.memory_space<vmem>>, vector<1x512xf32>
    %69 = vector.broadcast %68 : vector<1x512xf32> to vector<16x512xf32>
    %70 = arith.mulf %67, %69 : vector<16x512xf32>
    %71 = arith.truncf %70 : vector<16x512xf32> to vector<16x512xbf16>
    %c32 = arith.constant 32 : index
    %c0_25 = arith.constant 0 : index
    %72 = vector.load %arg7[%c32, %c0_25] : memref<432x512xbf16, #tpu.memory_space<vmem>>, vector<16x512xbf16>
    tpu.vector_store %arg7[%c32, %c0_25], %71 {strides = array<i32>} : memref<432x512xbf16, #tpu.memory_space<vmem>>, vector<16x512xbf16>,
    %c65_i32 = arith.constant 65 : i32
    %73 = tpu.dynamic_rotate %54 by %c65_i32 dim 1 : vector<16x512xf32>, i32 -> vector<16x512xf32>
    %c3 = arith.constant 3 : index
    %c0_26 = arith.constant 0 : index
    %74 = vector.load %arg3[%c3, %c0_26] : memref<27x512xf32, #tpu.memory_space<vmem>>, vector<1x512xf32>
    %75 = vector.broadcast %74 : vector<1x512xf32> to vector<16x512xf32>
    %76 = arith.mulf %73, %75 : vector<16x512xf32>
    %77 = arith.truncf %76 : vector<16x512xf32> to vector<16x512xbf16>
    %c48 = arith.constant 48 : index
    %c0_27 = arith.constant 0 : index
    %78 = vector.load %arg7[%c48, %c0_27] : memref<432x512xbf16, #tpu.memory_space<vmem>>, vector<16x512xbf16>
    tpu.vector_store %arg7[%c48, %c0_27], %77 {strides = array<i32>} : memref<432x512xbf16, #tpu.memory_space<vmem>>, vector<16x512xbf16>,
    %c64_i32 = arith.constant 64 : i32
    %79 = tpu.dynamic_rotate %54 by %c64_i32 dim 1 : vector<16x512xf32>, i32 -> vector<16x512xf32>
    %c4 = arith.constant 4 : index
    %c0_28 = arith.constant 0 : index
    %80 = vector.load %arg3[%c4, %c0_28] : memref<27x512xf32, #tpu.memory_space<vmem>>, vector<1x512xf32>
    %81 = vector.broadcast %80 : vector<1x512xf32> to vector<16x512xf32>
    %82 = arith.mulf %79, %81 : vector<16x512xf32>
    %83 = arith.truncf %82 : vector<16x512xf32> to vector<16x512xbf16>
    %c64 = arith.constant 64 : index
    %c0_29 = arith.constant 0 : index
    %84 = vector.load %arg7[%c64, %c0_29] : memref<432x512xbf16, #tpu.memory_space<vmem>>, vector<16x512xbf16>
    tpu.vector_store %arg7[%c64, %c0_29], %83 {strides = array<i32>} : memref<432x512xbf16, #tpu.memory_space<vmem>>, vector<16x512xbf16>,
    %c63_i32 = arith.constant 63 : i32
    %85 = tpu.dynamic_rotate %54 by %c63_i32 dim 1 : vector<16x512xf32>, i32 -> vector<16x512xf32>
    %c5 = arith.constant 5 : index
    %c0_30 = arith.constant 0 : index
    %86 = vector.load %arg3[%c5, %c0_30] : memref<27x512xf32, #tpu.memory_space<vmem>>, vector<1x512xf32>
    %87 = vector.broadcast %86 : vector<1x512xf32> to vector<16x512xf32>
    %88 = arith.mulf %85, %87 : vector<16x512xf32>
    %89 = arith.truncf %88 : vector<16x512xf32> to vector<16x512xbf16>
    %c80 = arith.constant 80 : index
    %c0_31 = arith.constant 0 : index
    %90 = vector.load %arg7[%c80, %c0_31] : memref<432x512xbf16, #tpu.memory_space<vmem>>, vector<16x512xbf16>
    tpu.vector_store %arg7[%c80, %c0_31], %89 {strides = array<i32>} : memref<432x512xbf16, #tpu.memory_space<vmem>>, vector<16x512xbf16>,
    %c57_i32 = arith.constant 57 : i32
    %91 = tpu.dynamic_rotate %54 by %c57_i32 dim 1 : vector<16x512xf32>, i32 -> vector<16x512xf32>
    %c6 = arith.constant 6 : index
    %c0_32 = arith.constant 0 : index
    %92 = vector.load %arg3[%c6, %c0_32] : memref<27x512xf32, #tpu.memory_space<vmem>>, vector<1x512xf32>
    %93 = vector.broadcast %92 : vector<1x512xf32> to vector<16x512xf32>
    %94 = arith.mulf %91, %93 : vector<16x512xf32>
    %95 = arith.truncf %94 : vector<16x512xf32> to vector<16x512xbf16>
    %c96 = arith.constant 96 : index
    %c0_33 = arith.constant 0 : index
    %96 = vector.load %arg7[%c96, %c0_33] : memref<432x512xbf16, #tpu.memory_space<vmem>>, vector<16x512xbf16>
    tpu.vector_store %arg7[%c96, %c0_33], %95 {strides = array<i32>} : memref<432x512xbf16, #tpu.memory_space<vmem>>, vector<16x512xbf16>,
    %c56_i32 = arith.constant 56 : i32
    %97 = tpu.dynamic_rotate %54 by %c56_i32 dim 1 : vector<16x512xf32>, i32 -> vector<16x512xf32>
    %c7 = arith.constant 7 : index
    %c0_34 = arith.constant 0 : index
    %98 = vector.load %arg3[%c7, %c0_34] : memref<27x512xf32, #tpu.memory_space<vmem>>, vector<1x512xf32>
    %99 = vector.broadcast %98 : vector<1x512xf32> to vector<16x512xf32>
    %100 = arith.mulf %97, %99 : vector<16x512xf32>
    %101 = arith.truncf %100 : vector<16x512xf32> to vector<16x512xbf16>
    %c112 = arith.constant 112 : index
    %c0_35 = arith.constant 0 : index
    %102 = vector.load %arg7[%c112, %c0_35] : memref<432x512xbf16, #tpu.memory_space<vmem>>, vector<16x512xbf16>
    tpu.vector_store %arg7[%c112, %c0_35], %101 {strides = array<i32>} : memref<432x512xbf16, #tpu.memory_space<vmem>>, vector<16x512xbf16>,
    %c55_i32 = arith.constant 55 : i32
    %103 = tpu.dynamic_rotate %54 by %c55_i32 dim 1 : vector<16x512xf32>, i32 -> vector<16x512xf32>
    %c8 = arith.constant 8 : index
    %c0_36 = arith.constant 0 : index
    %104 = vector.load %arg3[%c8, %c0_36] : memref<27x512xf32, #tpu.memory_space<vmem>>, vector<1x512xf32>
    %105 = vector.broadcast %104 : vector<1x512xf32> to vector<16x512xf32>
    %106 = arith.mulf %103, %105 : vector<16x512xf32>
    %107 = arith.truncf %106 : vector<16x512xf32> to vector<16x512xbf16>
    %c128 = arith.constant 128 : index
    %c0_37 = arith.constant 0 : index
    %108 = vector.load %arg7[%c128, %c0_37] : memref<432x512xbf16, #tpu.memory_space<vmem>>, vector<16x512xbf16>
    tpu.vector_store %arg7[%c128, %c0_37], %107 {strides = array<i32>} : memref<432x512xbf16, #tpu.memory_space<vmem>>, vector<16x512xbf16>,
    %c9_i32 = arith.constant 9 : i32
    %109 = tpu.dynamic_rotate %54 by %c9_i32 dim 1 : vector<16x512xf32>, i32 -> vector<16x512xf32>
    %c9 = arith.constant 9 : index
    %c0_38 = arith.constant 0 : index
    %110 = vector.load %arg3[%c9, %c0_38] : memref<27x512xf32, #tpu.memory_space<vmem>>, vector<1x512xf32>
    %111 = vector.broadcast %110 : vector<1x512xf32> to vector<16x512xf32>
    %112 = arith.mulf %109, %111 : vector<16x512xf32>
    %113 = arith.truncf %112 : vector<16x512xf32> to vector<16x512xbf16>
    %c144 = arith.constant 144 : index
    %c0_39 = arith.constant 0 : index
    %114 = vector.load %arg7[%c144, %c0_39] : memref<432x512xbf16, #tpu.memory_space<vmem>>, vector<16x512xbf16>
    tpu.vector_store %arg7[%c144, %c0_39], %113 {strides = array<i32>} : memref<432x512xbf16, #tpu.memory_space<vmem>>, vector<16x512xbf16>,
    %c8_i32 = arith.constant 8 : i32
    %115 = tpu.dynamic_rotate %54 by %c8_i32 dim 1 : vector<16x512xf32>, i32 -> vector<16x512xf32>
    %c10 = arith.constant 10 : index
    %c0_40 = arith.constant 0 : index
    %116 = vector.load %arg3[%c10, %c0_40] : memref<27x512xf32, #tpu.memory_space<vmem>>, vector<1x512xf32>
    %117 = vector.broadcast %116 : vector<1x512xf32> to vector<16x512xf32>
    %118 = arith.mulf %115, %117 : vector<16x512xf32>
    %119 = arith.truncf %118 : vector<16x512xf32> to vector<16x512xbf16>
    %c160 = arith.constant 160 : index
    %c0_41 = arith.constant 0 : index
    %120 = vector.load %arg7[%c160, %c0_41] : memref<432x512xbf16, #tpu.memory_space<vmem>>, vector<16x512xbf16>
    tpu.vector_store %arg7[%c160, %c0_41], %119 {strides = array<i32>} : memref<432x512xbf16, #tpu.memory_space<vmem>>, vector<16x512xbf16>,
    %c7_i32 = arith.constant 7 : i32
    %121 = tpu.dynamic_rotate %54 by %c7_i32 dim 1 : vector<16x512xf32>, i32 -> vector<16x512xf32>
    %c11 = arith.constant 11 : index
    %c0_42 = arith.constant 0 : index
    %122 = vector.load %arg3[%c11, %c0_42] : memref<27x512xf32, #tpu.memory_space<vmem>>, vector<1x512xf32>
    %123 = vector.broadcast %122 : vector<1x512xf32> to vector<16x512xf32>
    %124 = arith.mulf %121, %123 : vector<16x512xf32>
    %125 = arith.truncf %124 : vector<16x512xf32> to vector<16x512xbf16>
    %c176 = arith.constant 176 : index
    %c0_43 = arith.constant 0 : index
    %126 = vector.load %arg7[%c176, %c0_43] : memref<432x512xbf16, #tpu.memory_space<vmem>>, vector<16x512xbf16>
    tpu.vector_store %arg7[%c176, %c0_43], %125 {strides = array<i32>} : memref<432x512xbf16, #tpu.memory_space<vmem>>, vector<16x512xbf16>,
    %c1_i32 = arith.constant 1 : i32
    %127 = tpu.dynamic_rotate %54 by %c1_i32 dim 1 : vector<16x512xf32>, i32 -> vector<16x512xf32>
    %c12 = arith.constant 12 : index
    %c0_44 = arith.constant 0 : index
    %128 = vector.load %arg3[%c12, %c0_44] : memref<27x512xf32, #tpu.memory_space<vmem>>, vector<1x512xf32>
    %129 = vector.broadcast %128 : vector<1x512xf32> to vector<16x512xf32>
    %130 = arith.mulf %127, %129 : vector<16x512xf32>
    %131 = arith.truncf %130 : vector<16x512xf32> to vector<16x512xbf16>
    %c192 = arith.constant 192 : index
    %c0_45 = arith.constant 0 : index
    %132 = vector.load %arg7[%c192, %c0_45] : memref<432x512xbf16, #tpu.memory_space<vmem>>, vector<16x512xbf16>
    tpu.vector_store %arg7[%c192, %c0_45], %131 {strides = array<i32>} : memref<432x512xbf16, #tpu.memory_space<vmem>>, vector<16x512xbf16>,
    %c13 = arith.constant 13 : index
    %c0_46 = arith.constant 0 : index
    %133 = vector.load %arg3[%c13, %c0_46] : memref<27x512xf32, #tpu.memory_space<vmem>>, vector<1x512xf32>
    %134 = vector.broadcast %133 : vector<1x512xf32> to vector<16x512xf32>
    %135 = arith.mulf %54, %134 : vector<16x512xf32>
    %136 = arith.truncf %135 : vector<16x512xf32> to vector<16x512xbf16>
    %c208 = arith.constant 208 : index
    %c0_47 = arith.constant 0 : index
    %137 = vector.load %arg7[%c208, %c0_47] : memref<432x512xbf16, #tpu.memory_space<vmem>>, vector<16x512xbf16>
    tpu.vector_store %arg7[%c208, %c0_47], %136 {strides = array<i32>} : memref<432x512xbf16, #tpu.memory_space<vmem>>, vector<16x512xbf16>,
    %c511_i32 = arith.constant 511 : i32
    %138 = tpu.dynamic_rotate %54 by %c511_i32 dim 1 : vector<16x512xf32>, i32 -> vector<16x512xf32>
    %c14 = arith.constant 14 : index
    %c0_48 = arith.constant 0 : index
    %139 = vector.load %arg3[%c14, %c0_48] : memref<27x512xf32, #tpu.memory_space<vmem>>, vector<1x512xf32>
    %140 = vector.broadcast %139 : vector<1x512xf32> to vector<16x512xf32>
    %141 = arith.mulf %138, %140 : vector<16x512xf32>
    %142 = arith.truncf %141 : vector<16x512xf32> to vector<16x512xbf16>
    %c224 = arith.constant 224 : index
    %c0_49 = arith.constant 0 : index
    %143 = vector.load %arg7[%c224, %c0_49] : memref<432x512xbf16, #tpu.memory_space<vmem>>, vector<16x512xbf16>
    tpu.vector_store %arg7[%c224, %c0_49], %142 {strides = array<i32>} : memref<432x512xbf16, #tpu.memory_space<vmem>>, vector<16x512xbf16>,
    %c505_i32 = arith.constant 505 : i32
    %144 = tpu.dynamic_rotate %54 by %c505_i32 dim 1 : vector<16x512xf32>, i32 -> vector<16x512xf32>
    %c15 = arith.constant 15 : index
    %c0_50 = arith.constant 0 : index
    %145 = vector.load %arg3[%c15, %c0_50] : memref<27x512xf32, #tpu.memory_space<vmem>>, vector<1x512xf32>
    %146 = vector.broadcast %145 : vector<1x512xf32> to vector<16x512xf32>
    %147 = arith.mulf %144, %146 : vector<16x512xf32>
    %148 = arith.truncf %147 : vector<16x512xf32> to vector<16x512xbf16>
    %c240 = arith.constant 240 : index
    %c0_51 = arith.constant 0 : index
    %149 = vector.load %arg7[%c240, %c0_51] : memref<432x512xbf16, #tpu.memory_space<vmem>>, vector<16x512xbf16>
    tpu.vector_store %arg7[%c240, %c0_51], %148 {strides = array<i32>} : memref<432x512xbf16, #tpu.memory_space<vmem>>, vector<16x512xbf16>,
    %c504_i32 = arith.constant 504 : i32
    %150 = tpu.dynamic_rotate %54 by %c504_i32 dim 1 : vector<16x512xf32>, i32 -> vector<16x512xf32>
    %c16_52 = arith.constant 16 : index
    %c0_53 = arith.constant 0 : index
    %151 = vector.load %arg3[%c16_52, %c0_53] : memref<27x512xf32, #tpu.memory_space<vmem>>, vector<1x512xf32>
    %152 = vector.broadcast %151 : vector<1x512xf32> to vector<16x512xf32>
    %153 = arith.mulf %150, %152 : vector<16x512xf32>
    %154 = arith.truncf %153 : vector<16x512xf32> to vector<16x512xbf16>
    %c256 = arith.constant 256 : index
    %c0_54 = arith.constant 0 : index
    %155 = vector.load %arg7[%c256, %c0_54] : memref<432x512xbf16, #tpu.memory_space<vmem>>, vector<16x512xbf16>
    tpu.vector_store %arg7[%c256, %c0_54], %154 {strides = array<i32>} : memref<432x512xbf16, #tpu.memory_space<vmem>>, vector<16x512xbf16>,
    %c503_i32 = arith.constant 503 : i32
    %156 = tpu.dynamic_rotate %54 by %c503_i32 dim 1 : vector<16x512xf32>, i32 -> vector<16x512xf32>
    %c17 = arith.constant 17 : index
    %c0_55 = arith.constant 0 : index
    %157 = vector.load %arg3[%c17, %c0_55] : memref<27x512xf32, #tpu.memory_space<vmem>>, vector<1x512xf32>
    %158 = vector.broadcast %157 : vector<1x512xf32> to vector<16x512xf32>
    %159 = arith.mulf %156, %158 : vector<16x512xf32>
    %160 = arith.truncf %159 : vector<16x512xf32> to vector<16x512xbf16>
    %c272 = arith.constant 272 : index
    %c0_56 = arith.constant 0 : index
    %161 = vector.load %arg7[%c272, %c0_56] : memref<432x512xbf16, #tpu.memory_space<vmem>>, vector<16x512xbf16>
    tpu.vector_store %arg7[%c272, %c0_56], %160 {strides = array<i32>} : memref<432x512xbf16, #tpu.memory_space<vmem>>, vector<16x512xbf16>,
    %c457_i32 = arith.constant 457 : i32
    %162 = tpu.dynamic_rotate %54 by %c457_i32 dim 1 : vector<16x512xf32>, i32 -> vector<16x512xf32>
    %c18 = arith.constant 18 : index
    %c0_57 = arith.constant 0 : index
    %163 = vector.load %arg3[%c18, %c0_57] : memref<27x512xf32, #tpu.memory_space<vmem>>, vector<1x512xf32>
    %164 = vector.broadcast %163 : vector<1x512xf32> to vector<16x512xf32>
    %165 = arith.mulf %162, %164 : vector<16x512xf32>
    %166 = arith.truncf %165 : vector<16x512xf32> to vector<16x512xbf16>
    %c288 = arith.constant 288 : index
    %c0_58 = arith.constant 0 : index
    %167 = vector.load %arg7[%c288, %c0_58] : memref<432x512xbf16, #tpu.memory_space<vmem>>, vector<16x512xbf16>
    tpu.vector_store %arg7[%c288, %c0_58], %166 {strides = array<i32>} : memref<432x512xbf16, #tpu.memory_space<vmem>>, vector<16x512xbf16>,
    %c456_i32 = arith.constant 456 : i32
    %168 = tpu.dynamic_rotate %54 by %c456_i32 dim 1 : vector<16x512xf32>, i32 -> vector<16x512xf32>
    %c19 = arith.constant 19 : index
    %c0_59 = arith.constant 0 : index
    %169 = vector.load %arg3[%c19, %c0_59] : memref<27x512xf32, #tpu.memory_space<vmem>>, vector<1x512xf32>
    %170 = vector.broadcast %169 : vector<1x512xf32> to vector<16x512xf32>
    %171 = arith.mulf %168, %170 : vector<16x512xf32>
    %172 = arith.truncf %171 : vector<16x512xf32> to vector<16x512xbf16>
    %c304 = arith.constant 304 : index
    %c0_60 = arith.constant 0 : index
    %173 = vector.load %arg7[%c304, %c0_60] : memref<432x512xbf16, #tpu.memory_space<vmem>>, vector<16x512xbf16>
    tpu.vector_store %arg7[%c304, %c0_60], %172 {strides = array<i32>} : memref<432x512xbf16, #tpu.memory_space<vmem>>, vector<16x512xbf16>,
    %c455_i32 = arith.constant 455 : i32
    %174 = tpu.dynamic_rotate %54 by %c455_i32 dim 1 : vector<16x512xf32>, i32 -> vector<16x512xf32>
    %c20 = arith.constant 20 : index
    %c0_61 = arith.constant 0 : index
    %175 = vector.load %arg3[%c20, %c0_61] : memref<27x512xf32, #tpu.memory_space<vmem>>, vector<1x512xf32>
    %176 = vector.broadcast %175 : vector<1x512xf32> to vector<16x512xf32>
    %177 = arith.mulf %174, %176 : vector<16x512xf32>
    %178 = arith.truncf %177 : vector<16x512xf32> to vector<16x512xbf16>
    %c320 = arith.constant 320 : index
    %c0_62 = arith.constant 0 : index
    %179 = vector.load %arg7[%c320, %c0_62] : memref<432x512xbf16, #tpu.memory_space<vmem>>, vector<16x512xbf16>
    tpu.vector_store %arg7[%c320, %c0_62], %178 {strides = array<i32>} : memref<432x512xbf16, #tpu.memory_space<vmem>>, vector<16x512xbf16>,
    %c449_i32 = arith.constant 449 : i32
    %180 = tpu.dynamic_rotate %54 by %c449_i32 dim 1 : vector<16x512xf32>, i32 -> vector<16x512xf32>
    %c21 = arith.constant 21 : index
    %c0_63 = arith.constant 0 : index
    %181 = vector.load %arg3[%c21, %c0_63] : memref<27x512xf32, #tpu.memory_space<vmem>>, vector<1x512xf32>
    %182 = vector.broadcast %181 : vector<1x512xf32> to vector<16x512xf32>
    %183 = arith.mulf %180, %182 : vector<16x512xf32>
    %184 = arith.truncf %183 : vector<16x512xf32> to vector<16x512xbf16>
    %c336 = arith.constant 336 : index
    %c0_64 = arith.constant 0 : index
    %185 = vector.load %arg7[%c336, %c0_64] : memref<432x512xbf16, #tpu.memory_space<vmem>>, vector<16x512xbf16>
    tpu.vector_store %arg7[%c336, %c0_64], %184 {strides = array<i32>} : memref<432x512xbf16, #tpu.memory_space<vmem>>, vector<16x512xbf16>,
    %c448_i32 = arith.constant 448 : i32
    %186 = tpu.dynamic_rotate %54 by %c448_i32 dim 1 : vector<16x512xf32>, i32 -> vector<16x512xf32>
    %c22 = arith.constant 22 : index
    %c0_65 = arith.constant 0 : index
    %187 = vector.load %arg3[%c22, %c0_65] : memref<27x512xf32, #tpu.memory_space<vmem>>, vector<1x512xf32>
    %188 = vector.broadcast %187 : vector<1x512xf32> to vector<16x512xf32>
    %189 = arith.mulf %186, %188 : vector<16x512xf32>
    %190 = arith.truncf %189 : vector<16x512xf32> to vector<16x512xbf16>
    %c352 = arith.constant 352 : index
    %c0_66 = arith.constant 0 : index
    %191 = vector.load %arg7[%c352, %c0_66] : memref<432x512xbf16, #tpu.memory_space<vmem>>, vector<16x512xbf16>
    tpu.vector_store %arg7[%c352, %c0_66], %190 {strides = array<i32>} : memref<432x512xbf16, #tpu.memory_space<vmem>>, vector<16x512xbf16>,
    %c447_i32 = arith.constant 447 : i32
    %192 = tpu.dynamic_rotate %54 by %c447_i32 dim 1 : vector<16x512xf32>, i32 -> vector<16x512xf32>
    %c23 = arith.constant 23 : index
    %c0_67 = arith.constant 0 : index
    %193 = vector.load %arg3[%c23, %c0_67] : memref<27x512xf32, #tpu.memory_space<vmem>>, vector<1x512xf32>
    %194 = vector.broadcast %193 : vector<1x512xf32> to vector<16x512xf32>
    %195 = arith.mulf %192, %194 : vector<16x512xf32>
    %196 = arith.truncf %195 : vector<16x512xf32> to vector<16x512xbf16>
    %c368 = arith.constant 368 : index
    %c0_68 = arith.constant 0 : index
    %197 = vector.load %arg7[%c368, %c0_68] : memref<432x512xbf16, #tpu.memory_space<vmem>>, vector<16x512xbf16>
    tpu.vector_store %arg7[%c368, %c0_68], %196 {strides = array<i32>} : memref<432x512xbf16, #tpu.memory_space<vmem>>, vector<16x512xbf16>,
    %c441_i32 = arith.constant 441 : i32
    %198 = tpu.dynamic_rotate %54 by %c441_i32 dim 1 : vector<16x512xf32>, i32 -> vector<16x512xf32>
    %c24 = arith.constant 24 : index
    %c0_69 = arith.constant 0 : index
    %199 = vector.load %arg3[%c24, %c0_69] : memref<27x512xf32, #tpu.memory_space<vmem>>, vector<1x512xf32>
    %200 = vector.broadcast %199 : vector<1x512xf32> to vector<16x512xf32>
    %201 = arith.mulf %198, %200 : vector<16x512xf32>
    %202 = arith.truncf %201 : vector<16x512xf32> to vector<16x512xbf16>
    %c384 = arith.constant 384 : index
    %c0_70 = arith.constant 0 : index
    %203 = vector.load %arg7[%c384, %c0_70] : memref<432x512xbf16, #tpu.memory_space<vmem>>, vector<16x512xbf16>
    tpu.vector_store %arg7[%c384, %c0_70], %202 {strides = array<i32>} : memref<432x512xbf16, #tpu.memory_space<vmem>>, vector<16x512xbf16>,
    %c440_i32 = arith.constant 440 : i32
    %204 = tpu.dynamic_rotate %54 by %c440_i32 dim 1 : vector<16x512xf32>, i32 -> vector<16x512xf32>
    %c25 = arith.constant 25 : index
    %c0_71 = arith.constant 0 : index
    %205 = vector.load %arg3[%c25, %c0_71] : memref<27x512xf32, #tpu.memory_space<vmem>>, vector<1x512xf32>
    %206 = vector.broadcast %205 : vector<1x512xf32> to vector<16x512xf32>
    %207 = arith.mulf %204, %206 : vector<16x512xf32>
    %208 = arith.truncf %207 : vector<16x512xf32> to vector<16x512xbf16>
    %c400 = arith.constant 400 : index
    %c0_72 = arith.constant 0 : index
    %209 = vector.load %arg7[%c400, %c0_72] : memref<432x512xbf16, #tpu.memory_space<vmem>>, vector<16x512xbf16>
    tpu.vector_store %arg7[%c400, %c0_72], %208 {strides = array<i32>} : memref<432x512xbf16, #tpu.memory_space<vmem>>, vector<16x512xbf16>,
    %c439_i32 = arith.constant 439 : i32
    %210 = tpu.dynamic_rotate %54 by %c439_i32 dim 1 : vector<16x512xf32>, i32 -> vector<16x512xf32>
    %c26 = arith.constant 26 : index
    %c0_73 = arith.constant 0 : index
    %211 = vector.load %arg3[%c26, %c0_73] : memref<27x512xf32, #tpu.memory_space<vmem>>, vector<1x512xf32>
    %212 = vector.broadcast %211 : vector<1x512xf32> to vector<16x512xf32>
    %213 = arith.mulf %210, %212 : vector<16x512xf32>
    %214 = arith.truncf %213 : vector<16x512xf32> to vector<16x512xbf16>
    %c416 = arith.constant 416 : index
    %c0_74 = arith.constant 0 : index
    %215 = vector.load %arg7[%c416, %c0_74] : memref<432x512xbf16, #tpu.memory_space<vmem>>, vector<16x512xbf16>
    tpu.vector_store %arg7[%c416, %c0_74], %214 {strides = array<i32>} : memref<432x512xbf16, #tpu.memory_space<vmem>>, vector<16x512xbf16>,
    %c0_75 = arith.constant 0 : index
    %c0_76 = arith.constant 0 : index
    %216 = vector.load %arg4[%c0_75, %c0_76] : memref<16x432xbf16, #tpu.memory_space<vmem>>, vector<16x432xbf16>
    %c0_77 = arith.constant 0 : index
    %c0_78 = arith.constant 0 : index
    %217 = vector.load %arg7[%c0_77, %c0_78] : memref<432x512xbf16, #tpu.memory_space<vmem>>, vector<432x512xbf16>
    %cst_79 = arith.constant dense<0.000000e+00> : vector<16x512xf32>
    %218 = tpu.matmul %216, %217, %cst_79 {dimension_numbers = #tpu.dot_dimension_numbers<[1], [0], [0], [1], [0, 0, 1, 1], [], []>} : vector<16x432xbf16>, vector<432x512xbf16>, vector<16x512xf32> -> vector<16x512xf32>
    %219 = arith.truncf %218 : vector<16x512xf32> to vector<16x512xbf16>
    %c0_80 = arith.constant 0 : index
    %c0_81 = arith.constant 0 : index
    %c0_82 = arith.constant 0 : index
    %220 = vector.load %arg5[%c0_80, %c0_81, %c0_82] : memref<1x16x512xbf16, #tpu.memory_space<vmem>>, vector<1x16x512xbf16>
    %221 = vector.shape_cast %220 : vector<1x16x512xbf16> to vector<16x512xbf16>
    %222 = vector.shape_cast %219 : vector<16x512xbf16> to vector<1x16x512xbf16>
    tpu.vector_store %arg5[%c0_80, %c0_81, %c0_82], %222 {strides = array<i32>} : memref<1x16x512xbf16, #tpu.memory_space<vmem>>, vector<1x16x512xbf16>,
    %cst_83 = arith.constant dense<0.000000e+00> : vector<16xf32>
    %223 = vector.multi_reduction <add>, %218, %cst_83 [1] : vector<16x512xf32> to vector<16xf32>
    %224 = vector.shape_cast %223 : vector<16xf32> to vector<16x1xf32>
    %225 = arith.mulf %218, %218 : vector<16x512xf32>
    %cst_84 = arith.constant dense<0.000000e+00> : vector<16xf32>
    %226 = vector.multi_reduction <add>, %225, %cst_84 [1] : vector<16x512xf32> to vector<16xf32>
    %227 = vector.shape_cast %226 : vector<16xf32> to vector<16x1xf32>
    %228 = tpu.concatenate %224, %227 in 1 : vector<16x1xf32>, vector<16x1xf32> -> vector<16x2xf32>
    %c0_85 = arith.constant 0 : index
    %c0_86 = arith.constant 0 : index
    %c0_87 = arith.constant 0 : index
    %229 = vector.load %arg6[%c0_85, %c0_86, %c0_87] : memref<1x16x2xf32, #tpu.memory_space<vmem>>, vector<1x16x2xf32>
    %230 = vector.shape_cast %229 : vector<1x16x2xf32> to vector<16x2xf32>
    %231 = vector.shape_cast %228 : vector<16x2xf32> to vector<1x16x2xf32>
    tpu.vector_store %arg6[%c0_85, %c0_86, %c0_87], %231 {strides = array<i32>} : memref<1x16x2xf32, #tpu.memory_space<vmem>>, vector<1x16x2xf32>,
    return
  }
  func.func @transform_0(%arg0: i32) -> (i32, i32, i32) {
    %c0_i32 = arith.constant 0 : i32
    %c0_i32_0 = arith.constant 0 : i32
    %c0_i32_1 = arith.constant 0 : i32
    return %arg0, %c0_i32, %c0_i32_0 : i32, i32, i32
  }
  func.func @transform_1(%arg0: i32) -> (i32, i32) {
    %c0_i32 = arith.constant 0 : i32
    %c0_i32_0 = arith.constant 0 : i32
    %c0_i32_1 = arith.constant 0 : i32
    return %c0_i32, %c0_i32_0 : i32, i32
  }
  func.func @transform_2(%arg0: i32) -> (i32, i32) {
    %c0_i32 = arith.constant 0 : i32
    %c0_i32_0 = arith.constant 0 : i32
    %c0_i32_1 = arith.constant 0 : i32
    return %c0_i32, %c0_i32_0 : i32, i32
  }
  func.func @transform_3(%arg0: i32) -> (i32, i32) {
    %c0_i32 = arith.constant 0 : i32
    %c0_i32_0 = arith.constant 0 : i32
    %c0_i32_1 = arith.constant 0 : i32
    return %c0_i32, %c0_i32_0 : i32, i32
  }
  func.func @transform_4(%arg0: i32) -> (i32, i32, i32) {
    %c0_i32 = arith.constant 0 : i32
    %c0_i32_0 = arith.constant 0 : i32
    %c0_i32_1 = arith.constant 0 : i32
    return %arg0, %c0_i32, %c0_i32_0 : i32, i32, i32
  }
  func.func @transform_5(%arg0: i32) -> (i32, i32, i32) {
    %c0_i32 = arith.constant 0 : i32
    %c0_i32_0 = arith.constant 0 : i32
    %c0_i32_1 = arith.constant 0 : i32
    return %arg0, %c0_i32, %c0_i32_0 : i32, i32, i32
  }
}

module attributes {stable_mosaic.version = 11 : i64} {
  func.func @_bnrelu_conv2_kernel(%arg0: i32, %arg1: memref<1x16x512xbf16, #tpu.memory_space<vmem>>, %arg2: memref<16x1xf32, #tpu.memory_space<vmem>>, %arg3: memref<16x1xf32, #tpu.memory_space<vmem>>, %arg4: memref<27x512xf32, #tpu.memory_space<vmem>>, %arg5: memref<4x432xbf16, #tpu.memory_space<vmem>>, %arg6: memref<1x4x512xbf16, #tpu.memory_space<vmem>>, %arg7: memref<1x4x2xf32, #tpu.memory_space<vmem>>, %arg8: memref<432x512xbf16, #tpu.memory_space<vmem>>) attributes {dimension_semantics = [#tpu.dimension_semantics<parallel>], iteration_bounds = array<i64: 2>, scalar_prefetch = 0 : i64, scratch_operands = 1 : i64, tpu.core_type = #tpu.core_type<tc>, window_params = [{transform_indices = @transform_0, window_bounds = array<i64: 1, 16, 512>}, {pipeline_mode = #tpu.pipeline_mode<synchronous>, transform_indices = @transform_1, window_bounds = array<i64: 16, 1>}, {pipeline_mode = #tpu.pipeline_mode<synchronous>, transform_indices = @transform_2, window_bounds = array<i64: 16, 1>}, {pipeline_mode = #tpu.pipeline_mode<synchronous>, transform_indices = @transform_3, window_bounds = array<i64: 27, 512>}, {pipeline_mode = #tpu.pipeline_mode<synchronous>, transform_indices = @transform_4, window_bounds = array<i64: 4, 432>}, {transform_indices = @transform_5, window_bounds = array<i64: 1, 4, 512>}, {transform_indices = @transform_6, window_bounds = array<i64: 1, 4, 2>}]} {
    %c0 = arith.constant 0 : index
    %c0_0 = arith.constant 0 : index
    %c0_1 = arith.constant 0 : index
    %0 = vector.load %arg1[%c0, %c0_0, %c0_1] : memref<1x16x512xbf16, #tpu.memory_space<vmem>>, vector<1x16x512xbf16>
    %1 = vector.shape_cast %0 : vector<1x16x512xbf16> to vector<16x512xbf16>
    %2 = arith.extf %1 : vector<16x512xbf16> to vector<16x512xf32>
    %c0_2 = arith.constant 0 : index
    %c0_3 = arith.constant 0 : index
    %3 = vector.load %arg2[%c0_2, %c0_3] : memref<16x1xf32, #tpu.memory_space<vmem>>, vector<16x1xf32>
    %4 = vector.broadcast %3 : vector<16x1xf32> to vector<16x512xf32>
    %5 = arith.mulf %2, %4 : vector<16x512xf32>
    %c0_4 = arith.constant 0 : index
    %c0_5 = arith.constant 0 : index
    %6 = vector.load %arg3[%c0_4, %c0_5] : memref<16x1xf32, #tpu.memory_space<vmem>>, vector<16x1xf32>
    %7 = vector.broadcast %6 : vector<16x1xf32> to vector<16x512xf32>
    %8 = arith.addf %5, %7 : vector<16x512xf32>
    %cst = arith.constant 0.000000e+00 : f32
    %9 = vector.broadcast %cst : f32 to vector<16x512xf32>
    %10 = arith.maximumf %8, %9 : vector<16x512xf32>
    %c73_i32 = arith.constant 73 : i32
    %11 = tpu.dynamic_rotate %10 by %c73_i32 dim 1 : vector<16x512xf32>, i32 -> vector<16x512xf32>
    %c0_6 = arith.constant 0 : index
    %c0_7 = arith.constant 0 : index
    %12 = vector.load %arg4[%c0_6, %c0_7] : memref<27x512xf32, #tpu.memory_space<vmem>>, vector<1x512xf32>
    %13 = vector.broadcast %12 : vector<1x512xf32> to vector<16x512xf32>
    %14 = arith.mulf %11, %13 : vector<16x512xf32>
    %15 = arith.truncf %14 : vector<16x512xf32> to vector<16x512xbf16>
    %c0_8 = arith.constant 0 : index
    %c0_9 = arith.constant 0 : index
    %16 = vector.load %arg8[%c0_8, %c0_9] : memref<432x512xbf16, #tpu.memory_space<vmem>>, vector<16x512xbf16>
    tpu.vector_store %arg8[%c0_8, %c0_9], %15 {strides = array<i32>} : memref<432x512xbf16, #tpu.memory_space<vmem>>, vector<16x512xbf16>,
    %c72_i32 = arith.constant 72 : i32
    %17 = tpu.dynamic_rotate %10 by %c72_i32 dim 1 : vector<16x512xf32>, i32 -> vector<16x512xf32>
    %c1 = arith.constant 1 : index
    %c0_10 = arith.constant 0 : index
    %18 = vector.load %arg4[%c1, %c0_10] : memref<27x512xf32, #tpu.memory_space<vmem>>, vector<1x512xf32>
    %19 = vector.broadcast %18 : vector<1x512xf32> to vector<16x512xf32>
    %20 = arith.mulf %17, %19 : vector<16x512xf32>
    %21 = arith.truncf %20 : vector<16x512xf32> to vector<16x512xbf16>
    %c16 = arith.constant 16 : index
    %c0_11 = arith.constant 0 : index
    %22 = vector.load %arg8[%c16, %c0_11] : memref<432x512xbf16, #tpu.memory_space<vmem>>, vector<16x512xbf16>
    tpu.vector_store %arg8[%c16, %c0_11], %21 {strides = array<i32>} : memref<432x512xbf16, #tpu.memory_space<vmem>>, vector<16x512xbf16>,
    %c71_i32 = arith.constant 71 : i32
    %23 = tpu.dynamic_rotate %10 by %c71_i32 dim 1 : vector<16x512xf32>, i32 -> vector<16x512xf32>
    %c2 = arith.constant 2 : index
    %c0_12 = arith.constant 0 : index
    %24 = vector.load %arg4[%c2, %c0_12] : memref<27x512xf32, #tpu.memory_space<vmem>>, vector<1x512xf32>
    %25 = vector.broadcast %24 : vector<1x512xf32> to vector<16x512xf32>
    %26 = arith.mulf %23, %25 : vector<16x512xf32>
    %27 = arith.truncf %26 : vector<16x512xf32> to vector<16x512xbf16>
    %c32 = arith.constant 32 : index
    %c0_13 = arith.constant 0 : index
    %28 = vector.load %arg8[%c32, %c0_13] : memref<432x512xbf16, #tpu.memory_space<vmem>>, vector<16x512xbf16>
    tpu.vector_store %arg8[%c32, %c0_13], %27 {strides = array<i32>} : memref<432x512xbf16, #tpu.memory_space<vmem>>, vector<16x512xbf16>,
    %c65_i32 = arith.constant 65 : i32
    %29 = tpu.dynamic_rotate %10 by %c65_i32 dim 1 : vector<16x512xf32>, i32 -> vector<16x512xf32>
    %c3 = arith.constant 3 : index
    %c0_14 = arith.constant 0 : index
    %30 = vector.load %arg4[%c3, %c0_14] : memref<27x512xf32, #tpu.memory_space<vmem>>, vector<1x512xf32>
    %31 = vector.broadcast %30 : vector<1x512xf32> to vector<16x512xf32>
    %32 = arith.mulf %29, %31 : vector<16x512xf32>
    %33 = arith.truncf %32 : vector<16x512xf32> to vector<16x512xbf16>
    %c48 = arith.constant 48 : index
    %c0_15 = arith.constant 0 : index
    %34 = vector.load %arg8[%c48, %c0_15] : memref<432x512xbf16, #tpu.memory_space<vmem>>, vector<16x512xbf16>
    tpu.vector_store %arg8[%c48, %c0_15], %33 {strides = array<i32>} : memref<432x512xbf16, #tpu.memory_space<vmem>>, vector<16x512xbf16>,
    %c64_i32 = arith.constant 64 : i32
    %35 = tpu.dynamic_rotate %10 by %c64_i32 dim 1 : vector<16x512xf32>, i32 -> vector<16x512xf32>
    %c4 = arith.constant 4 : index
    %c0_16 = arith.constant 0 : index
    %36 = vector.load %arg4[%c4, %c0_16] : memref<27x512xf32, #tpu.memory_space<vmem>>, vector<1x512xf32>
    %37 = vector.broadcast %36 : vector<1x512xf32> to vector<16x512xf32>
    %38 = arith.mulf %35, %37 : vector<16x512xf32>
    %39 = arith.truncf %38 : vector<16x512xf32> to vector<16x512xbf16>
    %c64 = arith.constant 64 : index
    %c0_17 = arith.constant 0 : index
    %40 = vector.load %arg8[%c64, %c0_17] : memref<432x512xbf16, #tpu.memory_space<vmem>>, vector<16x512xbf16>
    tpu.vector_store %arg8[%c64, %c0_17], %39 {strides = array<i32>} : memref<432x512xbf16, #tpu.memory_space<vmem>>, vector<16x512xbf16>,
    %c63_i32 = arith.constant 63 : i32
    %41 = tpu.dynamic_rotate %10 by %c63_i32 dim 1 : vector<16x512xf32>, i32 -> vector<16x512xf32>
    %c5 = arith.constant 5 : index
    %c0_18 = arith.constant 0 : index
    %42 = vector.load %arg4[%c5, %c0_18] : memref<27x512xf32, #tpu.memory_space<vmem>>, vector<1x512xf32>
    %43 = vector.broadcast %42 : vector<1x512xf32> to vector<16x512xf32>
    %44 = arith.mulf %41, %43 : vector<16x512xf32>
    %45 = arith.truncf %44 : vector<16x512xf32> to vector<16x512xbf16>
    %c80 = arith.constant 80 : index
    %c0_19 = arith.constant 0 : index
    %46 = vector.load %arg8[%c80, %c0_19] : memref<432x512xbf16, #tpu.memory_space<vmem>>, vector<16x512xbf16>
    tpu.vector_store %arg8[%c80, %c0_19], %45 {strides = array<i32>} : memref<432x512xbf16, #tpu.memory_space<vmem>>, vector<16x512xbf16>,
    %c57_i32 = arith.constant 57 : i32
    %47 = tpu.dynamic_rotate %10 by %c57_i32 dim 1 : vector<16x512xf32>, i32 -> vector<16x512xf32>
    %c6 = arith.constant 6 : index
    %c0_20 = arith.constant 0 : index
    %48 = vector.load %arg4[%c6, %c0_20] : memref<27x512xf32, #tpu.memory_space<vmem>>, vector<1x512xf32>
    %49 = vector.broadcast %48 : vector<1x512xf32> to vector<16x512xf32>
    %50 = arith.mulf %47, %49 : vector<16x512xf32>
    %51 = arith.truncf %50 : vector<16x512xf32> to vector<16x512xbf16>
    %c96 = arith.constant 96 : index
    %c0_21 = arith.constant 0 : index
    %52 = vector.load %arg8[%c96, %c0_21] : memref<432x512xbf16, #tpu.memory_space<vmem>>, vector<16x512xbf16>
    tpu.vector_store %arg8[%c96, %c0_21], %51 {strides = array<i32>} : memref<432x512xbf16, #tpu.memory_space<vmem>>, vector<16x512xbf16>,
    %c56_i32 = arith.constant 56 : i32
    %53 = tpu.dynamic_rotate %10 by %c56_i32 dim 1 : vector<16x512xf32>, i32 -> vector<16x512xf32>
    %c7 = arith.constant 7 : index
    %c0_22 = arith.constant 0 : index
    %54 = vector.load %arg4[%c7, %c0_22] : memref<27x512xf32, #tpu.memory_space<vmem>>, vector<1x512xf32>
    %55 = vector.broadcast %54 : vector<1x512xf32> to vector<16x512xf32>
    %56 = arith.mulf %53, %55 : vector<16x512xf32>
    %57 = arith.truncf %56 : vector<16x512xf32> to vector<16x512xbf16>
    %c112 = arith.constant 112 : index
    %c0_23 = arith.constant 0 : index
    %58 = vector.load %arg8[%c112, %c0_23] : memref<432x512xbf16, #tpu.memory_space<vmem>>, vector<16x512xbf16>
    tpu.vector_store %arg8[%c112, %c0_23], %57 {strides = array<i32>} : memref<432x512xbf16, #tpu.memory_space<vmem>>, vector<16x512xbf16>,
    %c55_i32 = arith.constant 55 : i32
    %59 = tpu.dynamic_rotate %10 by %c55_i32 dim 1 : vector<16x512xf32>, i32 -> vector<16x512xf32>
    %c8 = arith.constant 8 : index
    %c0_24 = arith.constant 0 : index
    %60 = vector.load %arg4[%c8, %c0_24] : memref<27x512xf32, #tpu.memory_space<vmem>>, vector<1x512xf32>
    %61 = vector.broadcast %60 : vector<1x512xf32> to vector<16x512xf32>
    %62 = arith.mulf %59, %61 : vector<16x512xf32>
    %63 = arith.truncf %62 : vector<16x512xf32> to vector<16x512xbf16>
    %c128 = arith.constant 128 : index
    %c0_25 = arith.constant 0 : index
    %64 = vector.load %arg8[%c128, %c0_25] : memref<432x512xbf16, #tpu.memory_space<vmem>>, vector<16x512xbf16>
    tpu.vector_store %arg8[%c128, %c0_25], %63 {strides = array<i32>} : memref<432x512xbf16, #tpu.memory_space<vmem>>, vector<16x512xbf16>,
    %c9_i32 = arith.constant 9 : i32
    %65 = tpu.dynamic_rotate %10 by %c9_i32 dim 1 : vector<16x512xf32>, i32 -> vector<16x512xf32>
    %c9 = arith.constant 9 : index
    %c0_26 = arith.constant 0 : index
    %66 = vector.load %arg4[%c9, %c0_26] : memref<27x512xf32, #tpu.memory_space<vmem>>, vector<1x512xf32>
    %67 = vector.broadcast %66 : vector<1x512xf32> to vector<16x512xf32>
    %68 = arith.mulf %65, %67 : vector<16x512xf32>
    %69 = arith.truncf %68 : vector<16x512xf32> to vector<16x512xbf16>
    %c144 = arith.constant 144 : index
    %c0_27 = arith.constant 0 : index
    %70 = vector.load %arg8[%c144, %c0_27] : memref<432x512xbf16, #tpu.memory_space<vmem>>, vector<16x512xbf16>
    tpu.vector_store %arg8[%c144, %c0_27], %69 {strides = array<i32>} : memref<432x512xbf16, #tpu.memory_space<vmem>>, vector<16x512xbf16>,
    %c8_i32 = arith.constant 8 : i32
    %71 = tpu.dynamic_rotate %10 by %c8_i32 dim 1 : vector<16x512xf32>, i32 -> vector<16x512xf32>
    %c10 = arith.constant 10 : index
    %c0_28 = arith.constant 0 : index
    %72 = vector.load %arg4[%c10, %c0_28] : memref<27x512xf32, #tpu.memory_space<vmem>>, vector<1x512xf32>
    %73 = vector.broadcast %72 : vector<1x512xf32> to vector<16x512xf32>
    %74 = arith.mulf %71, %73 : vector<16x512xf32>
    %75 = arith.truncf %74 : vector<16x512xf32> to vector<16x512xbf16>
    %c160 = arith.constant 160 : index
    %c0_29 = arith.constant 0 : index
    %76 = vector.load %arg8[%c160, %c0_29] : memref<432x512xbf16, #tpu.memory_space<vmem>>, vector<16x512xbf16>
    tpu.vector_store %arg8[%c160, %c0_29], %75 {strides = array<i32>} : memref<432x512xbf16, #tpu.memory_space<vmem>>, vector<16x512xbf16>,
    %c7_i32 = arith.constant 7 : i32
    %77 = tpu.dynamic_rotate %10 by %c7_i32 dim 1 : vector<16x512xf32>, i32 -> vector<16x512xf32>
    %c11 = arith.constant 11 : index
    %c0_30 = arith.constant 0 : index
    %78 = vector.load %arg4[%c11, %c0_30] : memref<27x512xf32, #tpu.memory_space<vmem>>, vector<1x512xf32>
    %79 = vector.broadcast %78 : vector<1x512xf32> to vector<16x512xf32>
    %80 = arith.mulf %77, %79 : vector<16x512xf32>
    %81 = arith.truncf %80 : vector<16x512xf32> to vector<16x512xbf16>
    %c176 = arith.constant 176 : index
    %c0_31 = arith.constant 0 : index
    %82 = vector.load %arg8[%c176, %c0_31] : memref<432x512xbf16, #tpu.memory_space<vmem>>, vector<16x512xbf16>
    tpu.vector_store %arg8[%c176, %c0_31], %81 {strides = array<i32>} : memref<432x512xbf16, #tpu.memory_space<vmem>>, vector<16x512xbf16>,
    %c1_i32 = arith.constant 1 : i32
    %83 = tpu.dynamic_rotate %10 by %c1_i32 dim 1 : vector<16x512xf32>, i32 -> vector<16x512xf32>
    %c12 = arith.constant 12 : index
    %c0_32 = arith.constant 0 : index
    %84 = vector.load %arg4[%c12, %c0_32] : memref<27x512xf32, #tpu.memory_space<vmem>>, vector<1x512xf32>
    %85 = vector.broadcast %84 : vector<1x512xf32> to vector<16x512xf32>
    %86 = arith.mulf %83, %85 : vector<16x512xf32>
    %87 = arith.truncf %86 : vector<16x512xf32> to vector<16x512xbf16>
    %c192 = arith.constant 192 : index
    %c0_33 = arith.constant 0 : index
    %88 = vector.load %arg8[%c192, %c0_33] : memref<432x512xbf16, #tpu.memory_space<vmem>>, vector<16x512xbf16>
    tpu.vector_store %arg8[%c192, %c0_33], %87 {strides = array<i32>} : memref<432x512xbf16, #tpu.memory_space<vmem>>, vector<16x512xbf16>,
    %c13 = arith.constant 13 : index
    %c0_34 = arith.constant 0 : index
    %89 = vector.load %arg4[%c13, %c0_34] : memref<27x512xf32, #tpu.memory_space<vmem>>, vector<1x512xf32>
    %90 = vector.broadcast %89 : vector<1x512xf32> to vector<16x512xf32>
    %91 = arith.mulf %10, %90 : vector<16x512xf32>
    %92 = arith.truncf %91 : vector<16x512xf32> to vector<16x512xbf16>
    %c208 = arith.constant 208 : index
    %c0_35 = arith.constant 0 : index
    %93 = vector.load %arg8[%c208, %c0_35] : memref<432x512xbf16, #tpu.memory_space<vmem>>, vector<16x512xbf16>
    tpu.vector_store %arg8[%c208, %c0_35], %92 {strides = array<i32>} : memref<432x512xbf16, #tpu.memory_space<vmem>>, vector<16x512xbf16>,
    %c511_i32 = arith.constant 511 : i32
    %94 = tpu.dynamic_rotate %10 by %c511_i32 dim 1 : vector<16x512xf32>, i32 -> vector<16x512xf32>
    %c14 = arith.constant 14 : index
    %c0_36 = arith.constant 0 : index
    %95 = vector.load %arg4[%c14, %c0_36] : memref<27x512xf32, #tpu.memory_space<vmem>>, vector<1x512xf32>
    %96 = vector.broadcast %95 : vector<1x512xf32> to vector<16x512xf32>
    %97 = arith.mulf %94, %96 : vector<16x512xf32>
    %98 = arith.truncf %97 : vector<16x512xf32> to vector<16x512xbf16>
    %c224 = arith.constant 224 : index
    %c0_37 = arith.constant 0 : index
    %99 = vector.load %arg8[%c224, %c0_37] : memref<432x512xbf16, #tpu.memory_space<vmem>>, vector<16x512xbf16>
    tpu.vector_store %arg8[%c224, %c0_37], %98 {strides = array<i32>} : memref<432x512xbf16, #tpu.memory_space<vmem>>, vector<16x512xbf16>,
    %c505_i32 = arith.constant 505 : i32
    %100 = tpu.dynamic_rotate %10 by %c505_i32 dim 1 : vector<16x512xf32>, i32 -> vector<16x512xf32>
    %c15 = arith.constant 15 : index
    %c0_38 = arith.constant 0 : index
    %101 = vector.load %arg4[%c15, %c0_38] : memref<27x512xf32, #tpu.memory_space<vmem>>, vector<1x512xf32>
    %102 = vector.broadcast %101 : vector<1x512xf32> to vector<16x512xf32>
    %103 = arith.mulf %100, %102 : vector<16x512xf32>
    %104 = arith.truncf %103 : vector<16x512xf32> to vector<16x512xbf16>
    %c240 = arith.constant 240 : index
    %c0_39 = arith.constant 0 : index
    %105 = vector.load %arg8[%c240, %c0_39] : memref<432x512xbf16, #tpu.memory_space<vmem>>, vector<16x512xbf16>
    tpu.vector_store %arg8[%c240, %c0_39], %104 {strides = array<i32>} : memref<432x512xbf16, #tpu.memory_space<vmem>>, vector<16x512xbf16>,
    %c504_i32 = arith.constant 504 : i32
    %106 = tpu.dynamic_rotate %10 by %c504_i32 dim 1 : vector<16x512xf32>, i32 -> vector<16x512xf32>
    %c16_40 = arith.constant 16 : index
    %c0_41 = arith.constant 0 : index
    %107 = vector.load %arg4[%c16_40, %c0_41] : memref<27x512xf32, #tpu.memory_space<vmem>>, vector<1x512xf32>
    %108 = vector.broadcast %107 : vector<1x512xf32> to vector<16x512xf32>
    %109 = arith.mulf %106, %108 : vector<16x512xf32>
    %110 = arith.truncf %109 : vector<16x512xf32> to vector<16x512xbf16>
    %c256 = arith.constant 256 : index
    %c0_42 = arith.constant 0 : index
    %111 = vector.load %arg8[%c256, %c0_42] : memref<432x512xbf16, #tpu.memory_space<vmem>>, vector<16x512xbf16>
    tpu.vector_store %arg8[%c256, %c0_42], %110 {strides = array<i32>} : memref<432x512xbf16, #tpu.memory_space<vmem>>, vector<16x512xbf16>,
    %c503_i32 = arith.constant 503 : i32
    %112 = tpu.dynamic_rotate %10 by %c503_i32 dim 1 : vector<16x512xf32>, i32 -> vector<16x512xf32>
    %c17 = arith.constant 17 : index
    %c0_43 = arith.constant 0 : index
    %113 = vector.load %arg4[%c17, %c0_43] : memref<27x512xf32, #tpu.memory_space<vmem>>, vector<1x512xf32>
    %114 = vector.broadcast %113 : vector<1x512xf32> to vector<16x512xf32>
    %115 = arith.mulf %112, %114 : vector<16x512xf32>
    %116 = arith.truncf %115 : vector<16x512xf32> to vector<16x512xbf16>
    %c272 = arith.constant 272 : index
    %c0_44 = arith.constant 0 : index
    %117 = vector.load %arg8[%c272, %c0_44] : memref<432x512xbf16, #tpu.memory_space<vmem>>, vector<16x512xbf16>
    tpu.vector_store %arg8[%c272, %c0_44], %116 {strides = array<i32>} : memref<432x512xbf16, #tpu.memory_space<vmem>>, vector<16x512xbf16>,
    %c457_i32 = arith.constant 457 : i32
    %118 = tpu.dynamic_rotate %10 by %c457_i32 dim 1 : vector<16x512xf32>, i32 -> vector<16x512xf32>
    %c18 = arith.constant 18 : index
    %c0_45 = arith.constant 0 : index
    %119 = vector.load %arg4[%c18, %c0_45] : memref<27x512xf32, #tpu.memory_space<vmem>>, vector<1x512xf32>
    %120 = vector.broadcast %119 : vector<1x512xf32> to vector<16x512xf32>
    %121 = arith.mulf %118, %120 : vector<16x512xf32>
    %122 = arith.truncf %121 : vector<16x512xf32> to vector<16x512xbf16>
    %c288 = arith.constant 288 : index
    %c0_46 = arith.constant 0 : index
    %123 = vector.load %arg8[%c288, %c0_46] : memref<432x512xbf16, #tpu.memory_space<vmem>>, vector<16x512xbf16>
    tpu.vector_store %arg8[%c288, %c0_46], %122 {strides = array<i32>} : memref<432x512xbf16, #tpu.memory_space<vmem>>, vector<16x512xbf16>,
    %c456_i32 = arith.constant 456 : i32
    %124 = tpu.dynamic_rotate %10 by %c456_i32 dim 1 : vector<16x512xf32>, i32 -> vector<16x512xf32>
    %c19 = arith.constant 19 : index
    %c0_47 = arith.constant 0 : index
    %125 = vector.load %arg4[%c19, %c0_47] : memref<27x512xf32, #tpu.memory_space<vmem>>, vector<1x512xf32>
    %126 = vector.broadcast %125 : vector<1x512xf32> to vector<16x512xf32>
    %127 = arith.mulf %124, %126 : vector<16x512xf32>
    %128 = arith.truncf %127 : vector<16x512xf32> to vector<16x512xbf16>
    %c304 = arith.constant 304 : index
    %c0_48 = arith.constant 0 : index
    %129 = vector.load %arg8[%c304, %c0_48] : memref<432x512xbf16, #tpu.memory_space<vmem>>, vector<16x512xbf16>
    tpu.vector_store %arg8[%c304, %c0_48], %128 {strides = array<i32>} : memref<432x512xbf16, #tpu.memory_space<vmem>>, vector<16x512xbf16>,
    %c455_i32 = arith.constant 455 : i32
    %130 = tpu.dynamic_rotate %10 by %c455_i32 dim 1 : vector<16x512xf32>, i32 -> vector<16x512xf32>
    %c20 = arith.constant 20 : index
    %c0_49 = arith.constant 0 : index
    %131 = vector.load %arg4[%c20, %c0_49] : memref<27x512xf32, #tpu.memory_space<vmem>>, vector<1x512xf32>
    %132 = vector.broadcast %131 : vector<1x512xf32> to vector<16x512xf32>
    %133 = arith.mulf %130, %132 : vector<16x512xf32>
    %134 = arith.truncf %133 : vector<16x512xf32> to vector<16x512xbf16>
    %c320 = arith.constant 320 : index
    %c0_50 = arith.constant 0 : index
    %135 = vector.load %arg8[%c320, %c0_50] : memref<432x512xbf16, #tpu.memory_space<vmem>>, vector<16x512xbf16>
    tpu.vector_store %arg8[%c320, %c0_50], %134 {strides = array<i32>} : memref<432x512xbf16, #tpu.memory_space<vmem>>, vector<16x512xbf16>,
    %c449_i32 = arith.constant 449 : i32
    %136 = tpu.dynamic_rotate %10 by %c449_i32 dim 1 : vector<16x512xf32>, i32 -> vector<16x512xf32>
    %c21 = arith.constant 21 : index
    %c0_51 = arith.constant 0 : index
    %137 = vector.load %arg4[%c21, %c0_51] : memref<27x512xf32, #tpu.memory_space<vmem>>, vector<1x512xf32>
    %138 = vector.broadcast %137 : vector<1x512xf32> to vector<16x512xf32>
    %139 = arith.mulf %136, %138 : vector<16x512xf32>
    %140 = arith.truncf %139 : vector<16x512xf32> to vector<16x512xbf16>
    %c336 = arith.constant 336 : index
    %c0_52 = arith.constant 0 : index
    %141 = vector.load %arg8[%c336, %c0_52] : memref<432x512xbf16, #tpu.memory_space<vmem>>, vector<16x512xbf16>
    tpu.vector_store %arg8[%c336, %c0_52], %140 {strides = array<i32>} : memref<432x512xbf16, #tpu.memory_space<vmem>>, vector<16x512xbf16>,
    %c448_i32 = arith.constant 448 : i32
    %142 = tpu.dynamic_rotate %10 by %c448_i32 dim 1 : vector<16x512xf32>, i32 -> vector<16x512xf32>
    %c22 = arith.constant 22 : index
    %c0_53 = arith.constant 0 : index
    %143 = vector.load %arg4[%c22, %c0_53] : memref<27x512xf32, #tpu.memory_space<vmem>>, vector<1x512xf32>
    %144 = vector.broadcast %143 : vector<1x512xf32> to vector<16x512xf32>
    %145 = arith.mulf %142, %144 : vector<16x512xf32>
    %146 = arith.truncf %145 : vector<16x512xf32> to vector<16x512xbf16>
    %c352 = arith.constant 352 : index
    %c0_54 = arith.constant 0 : index
    %147 = vector.load %arg8[%c352, %c0_54] : memref<432x512xbf16, #tpu.memory_space<vmem>>, vector<16x512xbf16>
    tpu.vector_store %arg8[%c352, %c0_54], %146 {strides = array<i32>} : memref<432x512xbf16, #tpu.memory_space<vmem>>, vector<16x512xbf16>,
    %c447_i32 = arith.constant 447 : i32
    %148 = tpu.dynamic_rotate %10 by %c447_i32 dim 1 : vector<16x512xf32>, i32 -> vector<16x512xf32>
    %c23 = arith.constant 23 : index
    %c0_55 = arith.constant 0 : index
    %149 = vector.load %arg4[%c23, %c0_55] : memref<27x512xf32, #tpu.memory_space<vmem>>, vector<1x512xf32>
    %150 = vector.broadcast %149 : vector<1x512xf32> to vector<16x512xf32>
    %151 = arith.mulf %148, %150 : vector<16x512xf32>
    %152 = arith.truncf %151 : vector<16x512xf32> to vector<16x512xbf16>
    %c368 = arith.constant 368 : index
    %c0_56 = arith.constant 0 : index
    %153 = vector.load %arg8[%c368, %c0_56] : memref<432x512xbf16, #tpu.memory_space<vmem>>, vector<16x512xbf16>
    tpu.vector_store %arg8[%c368, %c0_56], %152 {strides = array<i32>} : memref<432x512xbf16, #tpu.memory_space<vmem>>, vector<16x512xbf16>,
    %c441_i32 = arith.constant 441 : i32
    %154 = tpu.dynamic_rotate %10 by %c441_i32 dim 1 : vector<16x512xf32>, i32 -> vector<16x512xf32>
    %c24 = arith.constant 24 : index
    %c0_57 = arith.constant 0 : index
    %155 = vector.load %arg4[%c24, %c0_57] : memref<27x512xf32, #tpu.memory_space<vmem>>, vector<1x512xf32>
    %156 = vector.broadcast %155 : vector<1x512xf32> to vector<16x512xf32>
    %157 = arith.mulf %154, %156 : vector<16x512xf32>
    %158 = arith.truncf %157 : vector<16x512xf32> to vector<16x512xbf16>
    %c384 = arith.constant 384 : index
    %c0_58 = arith.constant 0 : index
    %159 = vector.load %arg8[%c384, %c0_58] : memref<432x512xbf16, #tpu.memory_space<vmem>>, vector<16x512xbf16>
    tpu.vector_store %arg8[%c384, %c0_58], %158 {strides = array<i32>} : memref<432x512xbf16, #tpu.memory_space<vmem>>, vector<16x512xbf16>,
    %c440_i32 = arith.constant 440 : i32
    %160 = tpu.dynamic_rotate %10 by %c440_i32 dim 1 : vector<16x512xf32>, i32 -> vector<16x512xf32>
    %c25 = arith.constant 25 : index
    %c0_59 = arith.constant 0 : index
    %161 = vector.load %arg4[%c25, %c0_59] : memref<27x512xf32, #tpu.memory_space<vmem>>, vector<1x512xf32>
    %162 = vector.broadcast %161 : vector<1x512xf32> to vector<16x512xf32>
    %163 = arith.mulf %160, %162 : vector<16x512xf32>
    %164 = arith.truncf %163 : vector<16x512xf32> to vector<16x512xbf16>
    %c400 = arith.constant 400 : index
    %c0_60 = arith.constant 0 : index
    %165 = vector.load %arg8[%c400, %c0_60] : memref<432x512xbf16, #tpu.memory_space<vmem>>, vector<16x512xbf16>
    tpu.vector_store %arg8[%c400, %c0_60], %164 {strides = array<i32>} : memref<432x512xbf16, #tpu.memory_space<vmem>>, vector<16x512xbf16>,
    %c439_i32 = arith.constant 439 : i32
    %166 = tpu.dynamic_rotate %10 by %c439_i32 dim 1 : vector<16x512xf32>, i32 -> vector<16x512xf32>
    %c26 = arith.constant 26 : index
    %c0_61 = arith.constant 0 : index
    %167 = vector.load %arg4[%c26, %c0_61] : memref<27x512xf32, #tpu.memory_space<vmem>>, vector<1x512xf32>
    %168 = vector.broadcast %167 : vector<1x512xf32> to vector<16x512xf32>
    %169 = arith.mulf %166, %168 : vector<16x512xf32>
    %170 = arith.truncf %169 : vector<16x512xf32> to vector<16x512xbf16>
    %c416 = arith.constant 416 : index
    %c0_62 = arith.constant 0 : index
    %171 = vector.load %arg8[%c416, %c0_62] : memref<432x512xbf16, #tpu.memory_space<vmem>>, vector<16x512xbf16>
    tpu.vector_store %arg8[%c416, %c0_62], %170 {strides = array<i32>} : memref<432x512xbf16, #tpu.memory_space<vmem>>, vector<16x512xbf16>,
    %c0_63 = arith.constant 0 : index
    %c0_64 = arith.constant 0 : index
    %172 = vector.load %arg5[%c0_63, %c0_64] : memref<4x432xbf16, #tpu.memory_space<vmem>>, vector<4x432xbf16>
    %c0_65 = arith.constant 0 : index
    %c0_66 = arith.constant 0 : index
    %173 = vector.load %arg8[%c0_65, %c0_66] : memref<432x512xbf16, #tpu.memory_space<vmem>>, vector<432x512xbf16>
    %cst_67 = arith.constant dense<0.000000e+00> : vector<4x512xf32>
    %174 = tpu.matmul %172, %173, %cst_67 {dimension_numbers = #tpu.dot_dimension_numbers<[1], [0], [0], [1], [0, 0, 1, 1], [], []>} : vector<4x432xbf16>, vector<432x512xbf16>, vector<4x512xf32> -> vector<4x512xf32>
    %175 = arith.truncf %174 : vector<4x512xf32> to vector<4x512xbf16>
    %c0_68 = arith.constant 0 : index
    %c0_69 = arith.constant 0 : index
    %c0_70 = arith.constant 0 : index
    %176 = vector.load %arg6[%c0_68, %c0_69, %c0_70] : memref<1x4x512xbf16, #tpu.memory_space<vmem>>, vector<1x4x512xbf16>
    %177 = vector.shape_cast %176 : vector<1x4x512xbf16> to vector<4x512xbf16>
    %178 = vector.shape_cast %175 : vector<4x512xbf16> to vector<1x4x512xbf16>
    tpu.vector_store %arg6[%c0_68, %c0_69, %c0_70], %178 {strides = array<i32>} : memref<1x4x512xbf16, #tpu.memory_space<vmem>>, vector<1x4x512xbf16>,
    %cst_71 = arith.constant dense<0.000000e+00> : vector<4xf32>
    %179 = vector.multi_reduction <add>, %174, %cst_71 [1] : vector<4x512xf32> to vector<4xf32>
    %180 = vector.shape_cast %179 : vector<4xf32> to vector<4x1xf32>
    %181 = arith.mulf %174, %174 : vector<4x512xf32>
    %cst_72 = arith.constant dense<0.000000e+00> : vector<4xf32>
    %182 = vector.multi_reduction <add>, %181, %cst_72 [1] : vector<4x512xf32> to vector<4xf32>
    %183 = vector.shape_cast %182 : vector<4xf32> to vector<4x1xf32>
    %184 = tpu.concatenate %180, %183 in 1 : vector<4x1xf32>, vector<4x1xf32> -> vector<4x2xf32>
    %c0_73 = arith.constant 0 : index
    %c0_74 = arith.constant 0 : index
    %c0_75 = arith.constant 0 : index
    %185 = vector.load %arg7[%c0_73, %c0_74, %c0_75] : memref<1x4x2xf32, #tpu.memory_space<vmem>>, vector<1x4x2xf32>
    %186 = vector.shape_cast %185 : vector<1x4x2xf32> to vector<4x2xf32>
    %187 = vector.shape_cast %184 : vector<4x2xf32> to vector<1x4x2xf32>
    tpu.vector_store %arg7[%c0_73, %c0_74, %c0_75], %187 {strides = array<i32>} : memref<1x4x2xf32, #tpu.memory_space<vmem>>, vector<1x4x2xf32>,
    return
  }
  func.func @transform_0(%arg0: i32) -> (i32, i32, i32) {
    %c0_i32 = arith.constant 0 : i32
    %c0_i32_0 = arith.constant 0 : i32
    %c0_i32_1 = arith.constant 0 : i32
    return %arg0, %c0_i32, %c0_i32_0 : i32, i32, i32
  }
  func.func @transform_1(%arg0: i32) -> (i32, i32) {
    %c0_i32 = arith.constant 0 : i32
    %c0_i32_0 = arith.constant 0 : i32
    %c0_i32_1 = arith.constant 0 : i32
    return %c0_i32, %c0_i32_0 : i32, i32
  }
  func.func @transform_2(%arg0: i32) -> (i32, i32) {
    %c0_i32 = arith.constant 0 : i32
    %c0_i32_0 = arith.constant 0 : i32
    %c0_i32_1 = arith.constant 0 : i32
    return %c0_i32, %c0_i32_0 : i32, i32
  }
  func.func @transform_3(%arg0: i32) -> (i32, i32) {
    %c0_i32 = arith.constant 0 : i32
    %c0_i32_0 = arith.constant 0 : i32
    %c0_i32_1 = arith.constant 0 : i32
    return %c0_i32, %c0_i32_0 : i32, i32
  }
  func.func @transform_4(%arg0: i32) -> (i32, i32) {
    %c0_i32 = arith.constant 0 : i32
    %c0_i32_0 = arith.constant 0 : i32
    %c0_i32_1 = arith.constant 0 : i32
    return %c0_i32, %c0_i32_0 : i32, i32
  }
  func.func @transform_5(%arg0: i32) -> (i32, i32, i32) {
    %c0_i32 = arith.constant 0 : i32
    %c0_i32_0 = arith.constant 0 : i32
    %c0_i32_1 = arith.constant 0 : i32
    return %arg0, %c0_i32, %c0_i32_0 : i32, i32, i32
  }
  func.func @transform_6(%arg0: i32) -> (i32, i32, i32) {
    %c0_i32 = arith.constant 0 : i32
    %c0_i32_0 = arith.constant 0 : i32
    %c0_i32_1 = arith.constant 0 : i32
    return %arg0, %c0_i32, %c0_i32_0 : i32, i32, i32
  }
}

module attributes {stable_mosaic.version = 11 : i64} {
  func.func @_bn_relu_kernel(%arg0: i32, %arg1: memref<1x4x512xbf16, #tpu.memory_space<vmem>>, %arg2: memref<4x1xf32, #tpu.memory_space<vmem>>, %arg3: memref<4x1xf32, #tpu.memory_space<vmem>>, %arg4: memref<1x4x512xf32, #tpu.memory_space<vmem>>) attributes {dimension_semantics = [#tpu.dimension_semantics<parallel>], iteration_bounds = array<i64: 2>, scalar_prefetch = 0 : i64, scratch_operands = 0 : i64, tpu.core_type = #tpu.core_type<tc>, window_params = [{transform_indices = @transform_0, window_bounds = array<i64: 1, 4, 512>}, {pipeline_mode = #tpu.pipeline_mode<synchronous>, transform_indices = @transform_1, window_bounds = array<i64: 4, 1>}, {pipeline_mode = #tpu.pipeline_mode<synchronous>, transform_indices = @transform_2, window_bounds = array<i64: 4, 1>}, {transform_indices = @transform_3, window_bounds = array<i64: 1, 4, 512>}]} {
    %c0 = arith.constant 0 : index
    %c0_0 = arith.constant 0 : index
    %c0_1 = arith.constant 0 : index
    %0 = vector.load %arg1[%c0, %c0_0, %c0_1] : memref<1x4x512xbf16, #tpu.memory_space<vmem>>, vector<1x4x512xbf16>
    %1 = vector.shape_cast %0 : vector<1x4x512xbf16> to vector<4x512xbf16>
    %2 = arith.extf %1 : vector<4x512xbf16> to vector<4x512xf32>
    %c0_2 = arith.constant 0 : index
    %c0_3 = arith.constant 0 : index
    %3 = vector.load %arg2[%c0_2, %c0_3] : memref<4x1xf32, #tpu.memory_space<vmem>>, vector<4x1xf32>
    %4 = vector.broadcast %3 : vector<4x1xf32> to vector<4x512xf32>
    %5 = arith.mulf %2, %4 : vector<4x512xf32>
    %c0_4 = arith.constant 0 : index
    %c0_5 = arith.constant 0 : index
    %6 = vector.load %arg3[%c0_4, %c0_5] : memref<4x1xf32, #tpu.memory_space<vmem>>, vector<4x1xf32>
    %7 = vector.broadcast %6 : vector<4x1xf32> to vector<4x512xf32>
    %8 = arith.addf %5, %7 : vector<4x512xf32>
    %cst = arith.constant 0.000000e+00 : f32
    %9 = vector.broadcast %cst : f32 to vector<4x512xf32>
    %10 = arith.maximumf %8, %9 : vector<4x512xf32>
    %c0_6 = arith.constant 0 : index
    %c0_7 = arith.constant 0 : index
    %c0_8 = arith.constant 0 : index
    %11 = vector.load %arg4[%c0_6, %c0_7, %c0_8] : memref<1x4x512xf32, #tpu.memory_space<vmem>>, vector<1x4x512xf32>
    %12 = vector.shape_cast %11 : vector<1x4x512xf32> to vector<4x512xf32>
    %13 = vector.shape_cast %10 : vector<4x512xf32> to vector<1x4x512xf32>
    tpu.vector_store %arg4[%c0_6, %c0_7, %c0_8], %13 {strides = array<i32>} : memref<1x4x512xf32, #tpu.memory_space<vmem>>, vector<1x4x512xf32>,
    return
  }
  func.func @transform_0(%arg0: i32) -> (i32, i32, i32) {
    %c0_i32 = arith.constant 0 : i32
    %c0_i32_0 = arith.constant 0 : i32
    %c0_i32_1 = arith.constant 0 : i32
    return %arg0, %c0_i32, %c0_i32_0 : i32, i32, i32
  }
  func.func @transform_1(%arg0: i32) -> (i32, i32) {
    %c0_i32 = arith.constant 0 : i32
    %c0_i32_0 = arith.constant 0 : i32
    %c0_i32_1 = arith.constant 0 : i32
    return %c0_i32, %c0_i32_0 : i32, i32
  }
  func.func @transform_2(%arg0: i32) -> (i32, i32) {
    %c0_i32 = arith.constant 0 : i32
    %c0_i32_0 = arith.constant 0 : i32
    %c0_i32_1 = arith.constant 0 : i32
    return %c0_i32, %c0_i32_0 : i32, i32
  }
  func.func @transform_3(%arg0: i32) -> (i32, i32, i32) {
    %c0_i32 = arith.constant 0 : i32
    %c0_i32_0 = arith.constant 0 : i32
    %c0_i32_1 = arith.constant 0 : i32
    return %arg0, %c0_i32, %c0_i32_0 : i32, i32, i32
  }
}

</mosaic_0001>

<llo_original>
// kernel: up_3d_forward.5
$region0: #{up_3d_forward.5}
  #allocation0 [shape = 'u32[]', space=smem, size = 0x4, offset = 0x4, fixed_abs, tag = 'smem constant byte address 0x4 - core index']
  #allocation1 [shape = 'u32[72,128]{1,0:T(1,128)}', space=vmem, size = 0x9000, scoped, tag = 'internal scratch']
  %s0 = inlined_call_operand.vmem [shape: bf16[2,4,512], index: 0, kind: input, shape index: {}]
  %s1 = inlined_call_operand.vmem [shape: f32[4,1], index: 1, kind: input, shape index: {}]
  %s2 = inlined_call_operand.vmem [shape: f32[4,1], index: 2, kind: input, shape index: {}]
  %s3 = inlined_call_operand.vmem [shape: f32[2,4,512], index: 3, kind: output, shape index: {}]
  %s4 = sld [smem:[#allocation0]]
  $region45: #{up_3d_forward.5} parent=0
    _
  %s6 = ssub.s32 1, %s4
  %s7 = scalar_select 0, %s6, %s4
  loop: start=0, step=1, limit=4
  $region2: #{up_3d_forward.5} parent=0 // loop_pre_header
    _
  $region3: #{up_3d_forward.5} parent=0 // loop_header
    %s9 = sphi 0, %s13
    %p10 = scmp.ge.s32.totalorder %s9, 4
    %s19 = sphi 0, %s21
    %s22 = sphi 0, %s19
    %s23 = sphi 0, %s22
    %s39 = sphi 0, %s23
    %s43 = sphi 0, %s43
    %s45 = sphi 0, %s43
    %s46 = sphi 0, %s45
    %s60 = sphi 0, %s46
    %s64 = sphi 0, %s64
    %s66 = sphi 0, %s64
    %s67 = sphi 0, %s66
    %s81 = sphi 0, %s67
    %s87 = sphi 0, %s89
    %s90 = sphi 0, %s87
    %s91 = sphi 0, %s90
    %s107 = sphi 0, %s91
  $region4: #{up_3d_forward.5} parent=0 // loop_header_branch
    %12 = sbr.rel (%p10) target = $region8
  $region5: #{up_3d_forward.5} parent=0 // loop_body
    %s14 = ssub.s32 %s9, 1
    %s15 = ssub.s32 %s9, 2
    %s16 = sadd.s32 %s9, 1
    %s17 = ssub.s32 %s9, %s16
    %p18 = scmp.eq.s32.totalorder %s17, 0
    %s20 = sadd.s32 %s19, 1
    %s21 = scalar_select %p18, %s19, %s20
    %p24 = pneg %p18
    %p25 = scmp.eq.s32.totalorder %s9, 1
    %p26 = por %p24, %p25
    %p27 = scmp.ne.s32.totalorder %s19, %s22
    %p28 = scmp.eq.s32.totalorder %s9, 0
    %p29 = por %p27, %p28
    %p30 = scmp.ne.s32.totalorder %s19, %s22
    %p31 = scmp.eq.s32.totalorder %s14, 1
    %p32 = por %p30, %p31
    %p33 = scmp.ne.s32.totalorder %s22, %s23
    %p34 = scmp.eq.s32.totalorder %s14, 0
    %p35 = por %p33, %p34
    %p36 = scmp.ne.s32.totalorder %s22, %s23
    %p37 = scmp.eq.s32.totalorder %s15, 1
    %p38 = por %p36, %p37
    %p40 = scmp.ne.s32.totalorder %s23, %s39
    %p41 = scmp.eq.s32.totalorder %s15, 0
    %p42 = por %p40, %p41
    %s44 = sadd.s32 %s43, 1
    %p47 = scmp.eq.s32.totalorder %s9, 1
    %p48 = scmp.ne.s32.totalorder %s43, %s45
    %p49 = scmp.eq.s32.totalorder %s9, 0
    %p50 = por %p48, %p49
    %p51 = scmp.ne.s32.totalorder %s43, %s45
    %p52 = scmp.eq.s32.totalorder %s14, 1
    %p53 = por %p51, %p52
    %p54 = scmp.ne.s32.totalorder %s45, %s46
    %p55 = scmp.eq.s32.totalorder %s14, 0
    %p56 = por %p54, %p55
    %p57 = scmp.ne.s32.totalorder %s45, %s46
    %p58 = scmp.eq.s32.totalorder %s15, 1
    %p59 = por %p57, %p58
    %p61 = scmp.ne.s32.totalorder %s46, %s60
    %p62 = scmp.eq.s32.totalorder %s15, 0
    %p63 = por %p61, %p62
    %s65 = sadd.s32 %s64, 1
    %p68 = scmp.eq.s32.totalorder %s9, 1
    %p69 = scmp.ne.s32.totalorder %s64, %s66
    %p70 = scmp.eq.s32.totalorder %s9, 0
    %p71 = por %p69, %p70
    %p72 = scmp.ne.s32.totalorder %s64, %s66
    %p73 = scmp.eq.s32.totalorder %s14, 1
    %p74 = por %p72, %p73
    %p75 = scmp.ne.s32.totalorder %s66, %s67
    %p76 = scmp.eq.s32.totalorder %s14, 0
    %p77 = por %p75, %p76
    %p78 = scmp.ne.s32.totalorder %s66, %s67
    %p79 = scmp.eq.s32.totalorder %s15, 1
    %p80 = por %p78, %p79
    %p82 = scmp.ne.s32.totalorder %s67, %s81
    %p83 = scmp.eq.s32.totalorder %s15, 0
    %p84 = por %p82, %p83
    %s85 = ssub.s32 %s9, %s16
    %p86 = scmp.eq.s32.totalorder %s85, 0
    %s88 = sadd.s32 %s87, 1
    %s89 = scalar_select %p86, %s87, %s88
    %p92 = pneg %p86
    %p93 = scmp.eq.s32.totalorder %s9, 1
    %p94 = por %p92, %p93
    %p95 = scmp.ne.s32.totalorder %s87, %s90
    %p96 = scmp.eq.s32.totalorder %s9, 0
    %p97 = por %p95, %p96
    %p98 = scmp.ne.s32.totalorder %s87, %s90
    %p99 = scmp.eq.s32.totalorder %s14, 1
    %p100 = por %p98, %p99
    %p101 = scmp.ne.s32.totalorder %s90, %s91
    %p102 = scmp.eq.s32.totalorder %s14, 0
    %p103 = por %p101, %p102
    %p104 = scmp.ne.s32.totalorder %s90, %s91
    %p105 = scmp.eq.s32.totalorder %s15, 1
    %p106 = por %p104, %p105
    %p108 = scmp.ne.s32.totalorder %s91, %s107
    %p109 = scmp.eq.s32.totalorder %s15, 0
    %p110 = por %p108, %p109
    %p111 = scmp.le.s32.totalorder 1, %s9
    %p112 = scmp.lt.s32.totalorder %s9, 3
    %p113 = pnand %p111, %p112
    %p114 = pneg %p113
    // Predicated region
    $region9: #{up_3d_forward.5} parent=5 // pred_check
      _
    $region10: #{up_3d_forward.5} parent=5 // pred_check_branch
      %116 = sbr.rel (%p113) target = $region12
    $region11: #{up_3d_forward.5} parent=5 // pred_region
      %s117 = ssub.s32 %s9, 1
      // Predicated region
      $region13: #{up_3d_forward.5} parent=11 // pred_check
        %p118 = pneg %p56
      $region14: #{up_3d_forward.5} parent=11 // pred_check_branch
        %120 = sbr.rel (%p118) target = $region16
      $region15: #{up_3d_forward.5} parent=11 // pred_region
        _
      $region16: #{up_3d_forward.5} parent=11 // pred_fallthru
        _
      // Predicated region
      $region17: #{up_3d_forward.5} parent=11 // pred_check
        %p121 = pneg %p77
      $region18: #{up_3d_forward.5} parent=11 // pred_check_branch
        %123 = sbr.rel (%p121) target = $region20
      $region19: #{up_3d_forward.5} parent=11 // pred_region
        _
      $region20: #{up_3d_forward.5} parent=11 // pred_fallthru
        _
    $region12: #{up_3d_forward.5} parent=5 // pred_fallthru
      _
    %p124 = scmp.lt.s32.totalorder %s9, 2
    // Predicated region
    $region21: #{up_3d_forward.5} parent=5 // pred_check
      %p125 = pneg %p124
    $region22: #{up_3d_forward.5} parent=5 // pred_check_branch
      %127 = sbr.rel (%p125) target = $region24
    $region23: #{up_3d_forward.5} parent=5 // pred_region
      // Predicated region
      $region25: #{up_3d_forward.5} parent=23 // pred_check
        %p128 = pneg %p29
      $region26: #{up_3d_forward.5} parent=23 // pred_check_branch
        %130 = sbr.rel (%p128) target = $region28
      $region27: #{up_3d_forward.5} parent=23 // pred_region
        %p131 = scmp.lt.s32.totalorder %s9, 1
        %s132 = scalar_select %p131, %s9, 1
        %s133 = smul.addr %s132, 4
        %s134 = smul.addr %s133, 2
        %s135 = scalar_lea.vmem %s0, %s134
      $region28: #{up_3d_forward.5} parent=23 // pred_fallthru
        _
    $region24: #{up_3d_forward.5} parent=5 // pred_fallthru
      _
    %p136 = scmp.le.s32.totalorder 1, %s9
    %p137 = scmp.lt.s32.totalorder %s9, 3
    %p138 = pnand %p136, %p137
    %p139 = pneg %p138
    // Predicated region
    $region29: #{up_3d_forward.5} parent=5 // pred_check
      _
    $region30: #{up_3d_forward.5} parent=5 // pred_check_branch
      %141 = sbr.rel (%p138) target = $region32
    $region31: #{up_3d_forward.5} parent=5 // pred_region
      %s142 = ssub.s32 %s9, 1
      %p143 = scmp.lt.s32.totalorder %s14, 1
      %s144 = scalar_select %p143, %s14, 1
      %s145 = smul.addr %s144, 4
      %s146 = smul.addr %s145, 2
      %s147 = scalar_lea.vmem %s0, %s146
      %p148 = pneg %p35
      %p149 = pneg %p32
      %p150 = pneg %p56
      %p151 = pneg %p53
      %p152 = pneg %p77
      %p153 = pneg %p74
      %p154 = pneg %p103
      %p155 = pneg %p100
      %p156 = scmp.lt.s32.totalorder %s14, 1
      %s157 = scalar_select %p156, %s14, 1
      %s158 = smul.addr %s157, 4
      %s159 = smul.addr %s158, 4
      %s160 = scalar_lea.vmem %s3, %s159
      %p161 = scmp.lt.s32.totalorder %s14, 1
      %s162 = scalar_select %p161, %s14, 1
      %s163 = smul.addr %s162, 4
      %s164 = smul.addr %s163, 2
      %s165 = scalar_lea.vmem %s0, %s164
      %p166 = scmp.lt.s32.totalorder %s14, 1
      %s167 = scalar_select %p166, %s14, 1
      %s168 = smul.addr %s167, 4
      %s169 = smul.addr %s168, 4
      %s170 = scalar_lea.vmem %s3, %s169
      %v171 = vld [vmem:[%s165] sm:$0xff]
      %v172 = vunpack.c.l.bf16 %v171
      %v173 = vunpack.c.h.bf16 %v171
      %v174 = vld [vmem:[%s1] sm:$0xf]
      %176 = vset.pattern.permute.xlu0 0
      %177 = vperm.xlu0 %176, %v174
      %v178 = vpop.permute.xlu0 %177
      %v180 = vunpack.c.l.s4 839922192
      %v181 = vunpack.c.0.s8 %v180
      %v182 = vperm.slane %v178, %v181
      %v184 = vmul.f32 %v172, %v182
      %v185 = vmul.f32 %v173, %v182
      %v186 = vld [vmem:[%s2] sm:$0xf]
      %188 = vset.pattern.permute.xlu0 0
      %189 = vperm.xlu0 %188, %v186
      %v190 = vpop.permute.xlu0 %189
      %v192 = vunpack.c.l.s4 839922192
      %v193 = vunpack.c.0.s8 %v192
      %v194 = vperm.slane %v190, %v193
      %v196 = vadd.f32 %v184, %v194
      %v197 = vadd.f32 %v185, %v194
      %v198 = vmax.f32 %v196, 0.0
      %v199 = vmax.f32 %v197, 0.0
      %200 = vst [vmem:[%s170] sm:$0xff] %v198
      %201 = vst [vmem:[%s170 + $0x8] sm:$0xff] %v199
      %p202 = scmp.lt.s32.totalorder %s14, 1
      %s203 = scalar_select %p202, %s14, 1
      %s204 = smul.addr %s203, 4
      %s205 = smul.addr %s204, 4
      %s206 = scalar_lea.vmem %s3, %s205
      // Predicated region
      $region33: #{up_3d_forward.5} parent=31 // pred_check
        %p207 = pneg %p100
      $region34: #{up_3d_forward.5} parent=31 // pred_check_branch
        %209 = sbr.rel (%p207) target = $region36
      $region35: #{up_3d_forward.5} parent=31 // pred_region
        _
      $region36: #{up_3d_forward.5} parent=31 // pred_fallthru
        _
    $region32: #{up_3d_forward.5} parent=5 // pred_fallthru
      _
    %p210 = scmp.le.s32.totalorder 2, %s9
    // Predicated region
    $region37: #{up_3d_forward.5} parent=5 // pred_check
      %p211 = pneg %p210
    $region38: #{up_3d_forward.5} parent=5 // pred_check_branch
      %213 = sbr.rel (%p211) target = $region40
    $region39: #{up_3d_forward.5} parent=5 // pred_region
      %s214 = ssub.s32 %s9, 2
      // Predicated region
      $region41: #{up_3d_forward.5} parent=39 // pred_check
        %p215 = pneg %p106
      $region42: #{up_3d_forward.5} parent=39 // pred_check_branch
        %217 = sbr.rel (%p215) target = $region44
      $region43: #{up_3d_forward.5} parent=39 // pred_region
        %p218 = scmp.lt.s32.totalorder %s15, 1
        %s219 = scalar_select %p218, %s15, 1
        %s220 = smul.addr %s219, 4
        %s221 = smul.addr %s220, 4
        %s222 = scalar_lea.vmem %s3, %s221
      $region44: #{up_3d_forward.5} parent=39 // pred_fallthru
        _
    $region40: #{up_3d_forward.5} parent=5 // pred_fallthru
      _
  $region6: #{up_3d_forward.5} parent=0 // loop_footer
    %s13 = sadd.s32 1, %s9
  $region7: #{up_3d_forward.5} parent=0 // loop_footer_branch
    %8 = sbr.rel target = $region3
  $region8: #{up_3d_forward.5} parent=0 // loop_exit
    _

// kernel: up_3d_forward.4
$region0: #{up_3d_forward.4}
  #allocation0 [shape = 'u32[]', space=smem, size = 0x4, offset = 0x4, fixed_abs, tag = 'smem constant byte address 0x4 - core index']
  #allocation1 [shape = 'u32[72,128]{1,0:T(1,128)}', space=vmem, size = 0x9000, scoped, tag = 'internal scratch']
  #allocation2 [shape = 'bf16[432,512]{1,0:T(8,128)(2,1)}', space=vmem, size = 0x6c000, scoped, tag = 'scratch operand']
  %s0 = inlined_call_operand.vmem [shape: bf16[2,16,512], index: 0, kind: input, shape index: {}]
  %s1 = inlined_call_operand.vmem [shape: f32[16,1], index: 1, kind: input, shape index: {}]
  %s2 = inlined_call_operand.vmem [shape: f32[16,1], index: 2, kind: input, shape index: {}]
  %s3 = inlined_call_operand.vmem [shape: f32[27,512], index: 3, kind: input, shape index: {}]
  %s4 = inlined_call_operand.vmem [shape: bf16[4,432], index: 4, kind: input, shape index: {}]
  %s5 = inlined_call_operand.vmem [shape: bf16[2,4,512], index: 5, kind: output, shape index: {0}]
  %s6 = inlined_call_operand.vmem [shape: f32[2,4,2], index: 6, kind: output, shape index: {1}]
  %7 = xla_tuple %s5, %s6
  %s8 = sld [smem:[#allocation0]]
  $region61: #{up_3d_forward.4} parent=0
    _
  %s10 = ssub.s32 1, %s8
  %s11 = scalar_select 0, %s10, %s8
  loop: start=0, step=1, limit=4
  $region2: #{up_3d_forward.4} parent=0 // loop_pre_header
    _
  $region3: #{up_3d_forward.4} parent=0 // loop_header
    %s13 = sphi 0, %s17
    %p14 = scmp.ge.s32.totalorder %s13, 4
    %s23 = sphi 0, %s25
    %s26 = sphi 0, %s23
    %s27 = sphi 0, %s26
    %s43 = sphi 0, %s27
    %s47 = sphi 0, %s47
    %s49 = sphi 0, %s47
    %s50 = sphi 0, %s49
    %s64 = sphi 0, %s50
    %s68 = sphi 0, %s68
    %s70 = sphi 0, %s68
    %s71 = sphi 0, %s70
    %s85 = sphi 0, %s71
    %s89 = sphi 0, %s89
    %s91 = sphi 0, %s89
    %s92 = sphi 0, %s91
    %s106 = sphi 0, %s92
    %s110 = sphi 0, %s110
    %s112 = sphi 0, %s110
    %s113 = sphi 0, %s112
    %s127 = sphi 0, %s113
    %s133 = sphi 0, %s135
    %s136 = sphi 0, %s133
    %s137 = sphi 0, %s136
    %s153 = sphi 0, %s137
    %s159 = sphi 0, %s161
    %s162 = sphi 0, %s159
    %s163 = sphi 0, %s162
    %s179 = sphi 0, %s163
  $region4: #{up_3d_forward.4} parent=0 // loop_header_branch
    %16 = sbr.rel (%p14) target = $region8
  $region5: #{up_3d_forward.4} parent=0 // loop_body
    %s18 = ssub.s32 %s13, 1
    %s19 = ssub.s32 %s13, 2
    %s20 = sadd.s32 %s13, 1
    %s21 = ssub.s32 %s13, %s20
    %p22 = scmp.eq.s32.totalorder %s21, 0
    %s24 = sadd.s32 %s23, 1
    %s25 = scalar_select %p22, %s23, %s24
    %p28 = pneg %p22
    %p29 = scmp.eq.s32.totalorder %s13, 1
    %p30 = por %p28, %p29
    %p31 = scmp.ne.s32.totalorder %s23, %s26
    %p32 = scmp.eq.s32.totalorder %s13, 0
    %p33 = por %p31, %p32
    %p34 = scmp.ne.s32.totalorder %s23, %s26
    %p35 = scmp.eq.s32.totalorder %s18, 1
    %p36 = por %p34, %p35
    %p37 = scmp.ne.s32.totalorder %s26, %s27
    %p38 = scmp.eq.s32.totalorder %s18, 0
    %p39 = por %p37, %p38
    %p40 = scmp.ne.s32.totalorder %s26, %s27
    %p41 = scmp.eq.s32.totalorder %s19, 1
    %p42 = por %p40, %p41
    %p44 = scmp.ne.s32.totalorder %s27, %s43
    %p45 = scmp.eq.s32.totalorder %s19, 0
    %p46 = por %p44, %p45
    %s48 = sadd.s32 %s47, 1
    %p51 = scmp.eq.s32.totalorder %s13, 1
    %p52 = scmp.ne.s32.totalorder %s47, %s49
    %p53 = scmp.eq.s32.totalorder %s13, 0
    %p54 = por %p52, %p53
    %p55 = scmp.ne.s32.totalorder %s47, %s49
    %p56 = scmp.eq.s32.totalorder %s18, 1
    %p57 = por %p55, %p56
    %p58 = scmp.ne.s32.totalorder %s49, %s50
    %p59 = scmp.eq.s32.totalorder %s18, 0
    %p60 = por %p58, %p59
    %p61 = scmp.ne.s32.totalorder %s49, %s50
    %p62 = scmp.eq.s32.totalorder %s19, 1
    %p63 = por %p61, %p62
    %p65 = scmp.ne.s32.totalorder %s50, %s64
    %p66 = scmp.eq.s32.totalorder %s19, 0
    %p67 = por %p65, %p66
    %s69 = sadd.s32 %s68, 1
    %p72 = scmp.eq.s32.totalorder %s13, 1
    %p73 = scmp.ne.s32.totalorder %s68, %s70
    %p74 = scmp.eq.s32.totalorder %s13, 0
    %p75 = por %p73, %p74
    %p76 = scmp.ne.s32.totalorder %s68, %s70
    %p77 = scmp.eq.s32.totalorder %s18, 1
    %p78 = por %p76, %p77
    %p79 = scmp.ne.s32.totalorder %s70, %s71
    %p80 = scmp.eq.s32.totalorder %s18, 0
    %p81 = por %p79, %p80
    %p82 = scmp.ne.s32.totalorder %s70, %s71
    %p83 = scmp.eq.s32.totalorder %s19, 1
    %p84 = por %p82, %p83
    %p86 = scmp.ne.s32.totalorder %s71, %s85
    %p87 = scmp.eq.s32.totalorder %s19, 0
    %p88 = por %p86, %p87
    %s90 = sadd.s32 %s89, 1
    %p93 = scmp.eq.s32.totalorder %s13, 1
    %p94 = scmp.ne.s32.totalorder %s89, %s91
    %p95 = scmp.eq.s32.totalorder %s13, 0
    %p96 = por %p94, %p95
    %p97 = scmp.ne.s32.totalorder %s89, %s91
    %p98 = scmp.eq.s32.totalorder %s18, 1
    %p99 = por %p97, %p98
    %p100 = scmp.ne.s32.totalorder %s91, %s92
    %p101 = scmp.eq.s32.totalorder %s18, 0
    %p102 = por %p100, %p101
    %p103 = scmp.ne.s32.totalorder %s91, %s92
    %p104 = scmp.eq.s32.totalorder %s19, 1
    %p105 = por %p103, %p104
    %p107 = scmp.ne.s32.totalorder %s92, %s106
    %p108 = scmp.eq.s32.totalorder %s19, 0
    %p109 = por %p107, %p108
    %s111 = sadd.s32 %s110, 1
    %p114 = scmp.eq.s32.totalorder %s13, 1
    %p115 = scmp.ne.s32.totalorder %s110, %s112
    %p116 = scmp.eq.s32.totalorder %s13, 0
    %p117 = por %p115, %p116
    %p118 = scmp.ne.s32.totalorder %s110, %s112
    %p119 = scmp.eq.s32.totalorder %s18, 1
    %p120 = por %p118, %p119
    %p121 = scmp.ne.s32.totalorder %s112, %s113
    %p122 = scmp.eq.s32.totalorder %s18, 0
    %p123 = por %p121, %p122
    %p124 = scmp.ne.s32.totalorder %s112, %s113
    %p125 = scmp.eq.s32.totalorder %s19, 1
    %p126 = por %p124, %p125
    %p128 = scmp.ne.s32.totalorder %s113, %s127
    %p129 = scmp.eq.s32.totalorder %s19, 0
    %p130 = por %p128, %p129
    %s131 = ssub.s32 %s13, %s20
    %p132 = scmp.eq.s32.totalorder %s131, 0
    %s134 = sadd.s32 %s133, 1
    %s135 = scalar_select %p132, %s133, %s134
    %p138 = pneg %p132
    %p139 = scmp.eq.s32.totalorder %s13, 1
    %p140 = por %p138, %p139
    %p141 = scmp.ne.s32.totalorder %s133, %s136
    %p142 = scmp.eq.s32.totalorder %s13, 0
    %p143 = por %p141, %p142
    %p144 = scmp.ne.s32.totalorder %s133, %s136
    %p145 = scmp.eq.s32.totalorder %s18, 1
    %p146 = por %p144, %p145
    %p147 = scmp.ne.s32.totalorder %s136, %s137
    %p148 = scmp.eq.s32.totalorder %s18, 0
    %p149 = por %p147, %p148
    %p150 = scmp.ne.s32.totalorder %s136, %s137
    %p151 = scmp.eq.s32.totalorder %s19, 1
    %p152 = por %p150, %p151
    %p154 = scmp.ne.s32.totalorder %s137, %s153
    %p155 = scmp.eq.s32.totalorder %s19, 0
    %p156 = por %p154, %p155
    %s157 = ssub.s32 %s13, %s20
    %p158 = scmp.eq.s32.totalorder %s157, 0
    %s160 = sadd.s32 %s159, 1
    %s161 = scalar_select %p158, %s159, %s160
    %p164 = pneg %p158
    %p165 = scmp.eq.s32.totalorder %s13, 1
    %p166 = por %p164, %p165
    %p167 = scmp.ne.s32.totalorder %s159, %s162
    %p168 = scmp.eq.s32.totalorder %s13, 0
    %p169 = por %p167, %p168
    %p170 = scmp.ne.s32.totalorder %s159, %s162
    %p171 = scmp.eq.s32.totalorder %s18, 1
    %p172 = por %p170, %p171
    %p173 = scmp.ne.s32.totalorder %s162, %s163
    %p174 = scmp.eq.s32.totalorder %s18, 0
    %p175 = por %p173, %p174
    %p176 = scmp.ne.s32.totalorder %s162, %s163
    %p177 = scmp.eq.s32.totalorder %s19, 1
    %p178 = por %p176, %p177
    %p180 = scmp.ne.s32.totalorder %s163, %s179
    %p181 = scmp.eq.s32.totalorder %s19, 0
    %p182 = por %p180, %p181
    %p183 = scmp.le.s32.totalorder 1, %s13
    %p184 = scmp.lt.s32.totalorder %s13, 3
    %p185 = pnand %p183, %p184
    %p186 = pneg %p185
    // Predicated region
    $region9: #{up_3d_forward.4} parent=5 // pred_check
      _
    $region10: #{up_3d_forward.4} parent=5 // pred_check_branch
      %188 = sbr.rel (%p185) target = $region12
    $region11: #{up_3d_forward.4} parent=5 // pred_region
      %s189 = ssub.s32 %s13, 1
      // Predicated region
      $region13: #{up_3d_forward.4} parent=11 // pred_check
        %p190 = pneg %p60
      $region14: #{up_3d_forward.4} parent=11 // pred_check_branch
        %192 = sbr.rel (%p190) target = $region16
      $region15: #{up_3d_forward.4} parent=11 // pred_region
        _
      $region16: #{up_3d_forward.4} parent=11 // pred_fallthru
        _
      // Predicated region
      $region17: #{up_3d_forward.4} parent=11 // pred_check
        %p193 = pneg %p81
      $region18: #{up_3d_forward.4} parent=11 // pred_check_branch
        %195 = sbr.rel (%p193) target = $region20
      $region19: #{up_3d_forward.4} parent=11 // pred_region
        _
      $region20: #{up_3d_forward.4} parent=11 // pred_fallthru
        _
      // Predicated region
      $region21: #{up_3d_forward.4} parent=11 // pred_check
        %p196 = pneg %p102
      $region22: #{up_3d_forward.4} parent=11 // pred_check_branch
        %198 = sbr.rel (%p196) target = $region24
      $region23: #{up_3d_forward.4} parent=11 // pred_region
        _
      $region24: #{up_3d_forward.4} parent=11 // pred_fallthru
        _
      // Predicated region
      $region25: #{up_3d_forward.4} parent=11 // pred_check
        %p199 = pneg %p123
      $region26: #{up_3d_forward.4} parent=11 // pred_check_branch
        %201 = sbr.rel (%p199) target = $region28
      $region27: #{up_3d_forward.4} parent=11 // pred_region
        _
      $region28: #{up_3d_forward.4} parent=11 // pred_fallthru
        _
    $region12: #{up_3d_forward.4} parent=5 // pred_fallthru
      _
    %p202 = scmp.lt.s32.totalorder %s13, 2
    // Predicated region
    $region29: #{up_3d_forward.4} parent=5 // pred_check
      %p203 = pneg %p202
    $region30: #{up_3d_forward.4} parent=5 // pred_check_branch
      %205 = sbr.rel (%p203) target = $region32
    $region31: #{up_3d_forward.4} parent=5 // pred_region
      // Predicated region
      $region33: #{up_3d_forward.4} parent=31 // pred_check
        %p206 = pneg %p33
      $region34: #{up_3d_forward.4} parent=31 // pred_check_branch
        %208 = sbr.rel (%p206) target = $region36
      $region35: #{up_3d_forward.4} parent=31 // pred_region
        %p209 = scmp.lt.s32.totalorder %s13, 1
        %s210 = scalar_select %p209, %s13, 1
        %s211 = smul.addr %s210, 8
        %s212 = smul.addr %s211, 4
        %s213 = scalar_lea.vmem %s0, %s212
      $region36: #{up_3d_forward.4} parent=31 // pred_fallthru
        _
    $region32: #{up_3d_forward.4} parent=5 // pred_fallthru
      _
    %p214 = scmp.le.s32.totalorder 1, %s13
    %p215 = scmp.lt.s32.totalorder %s13, 3
    %p216 = pnand %p214, %p215
    %p217 = pneg %p216
    // Predicated region
    $region37: #{up_3d_forward.4} parent=5 // pred_check
      _
    $region38: #{up_3d_forward.4} parent=5 // pred_check_branch
      %219 = sbr.rel (%p216) target = $region40
    $region39: #{up_3d_forward.4} parent=5 // pred_region
      %s220 = ssub.s32 %s13, 1
      %p221 = scmp.lt.s32.totalorder %s18, 1
      %s222 = scalar_select %p221, %s18, 1
      %s223 = smul.addr %s222, 8
      %s224 = smul.addr %s223, 4
      %s225 = scalar_lea.vmem %s0, %s224
      %p226 = pneg %p39
      %p227 = pneg %p36
      %p228 = pneg %p60
      %p229 = pneg %p57
      %p230 = pneg %p81
      %p231 = pneg %p78
      %p232 = pneg %p102
      %p233 = pneg %p99
      %p234 = pneg %p123
      %p235 = pneg %p120
      %p236 = pneg %p149
      %p237 = pneg %p146
      %p238 = scmp.lt.s32.totalorder %s18, 1
      %s239 = scalar_select %p238, %s18, 1
      %s240 = smul.addr %s239, 4
      %s241 = smul.addr %s240, 2
      %s242 = scalar_lea.vmem %s5, %s241
      %p243 = pneg %p175
      %p244 = pneg %p172
      %p245 = scmp.lt.s32.totalorder %s18, 1
      %s246 = scalar_select %p245, %s18, 1
      %s247 = smul.addr %s246, 4
      %s248 = scalar_lea.vmem %s6, %s247
      %p249 = scmp.lt.s32.totalorder %s18, 1
      %s250 = scalar_select %p249, %s18, 1
      %s251 = smul.addr %s250, 8
      %s252 = smul.addr %s251, 4
      %s253 = scalar_lea.vmem %s0, %s252
      %p254 = scmp.lt.s32.totalorder %s18, 1
      %s255 = scalar_select %p254, %s18, 1
      %s256 = smul.addr %s255, 4
      %s257 = smul.addr %s256, 2
      %s258 = scalar_lea.vmem %s5, %s257
      %p259 = scmp.lt.s32.totalorder %s18, 1
      %s260 = scalar_select %p259, %s18, 1
      %s261 = smul.addr %s260, 4
      %s262 = scalar_lea.vmem %s6, %s261
      %v264 = vld [vmem:[%s253] sm:$0xff]
      %v265 = vld [vmem:[%s253 + $0x8] sm:$0xff]
      %v266 = vld [vmem:[%s253 + $0x10] sm:$0xff]
      %v267 = vld [vmem:[%s253 + $0x18] sm:$0xff]
      %v268 = vunpack.c.l.bf16 %v264
      %v269 = vunpack.c.h.bf16 %v264
      %v270 = vunpack.c.l.bf16 %v265
      %v271 = vunpack.c.h.bf16 %v265
      %v272 = vunpack.c.l.bf16 %v266
      %v273 = vunpack.c.h.bf16 %v266
      %v274 = vunpack.c.l.bf16 %v267
      %v275 = vunpack.c.h.bf16 %v267
      %v276 = vld [vmem:[%s1] sm:$0xff]
      %v277 = vld [vmem:[%s1 + $0x8] sm:$0xff]
      %279 = vset.pattern.permute.xlu0 0
      %280 = vperm.xlu0 %279, %v276
      %v281 = vpop.permute.xlu0 %280
      %284 = vset.pattern.permute.xlu0 0
      %285 = vperm.xlu0 %284, %v277
      %v286 = vpop.permute.xlu0 %285
      %v288 = vmul.f32 %v268, %v281
      %v289 = vmul.f32 %v269, %v281
      %v290 = vmul.f32 %v270, %v281
      %v291 = vmul.f32 %v271, %v281
      %v292 = vmul.f32 %v272, %v286
      %v293 = vmul.f32 %v273, %v286
      %v294 = vmul.f32 %v274, %v286
      %v295 = vmul.f32 %v275, %v286
      %v296 = vld [vmem:[%s2] sm:$0xff]
      %v297 = vld [vmem:[%s2 + $0x8] sm:$0xff]
      %299 = vset.pattern.permute.xlu0 0
      %300 = vperm.xlu0 %299, %v296
      %v301 = vpop.permute.xlu0 %300
      %304 = vset.pattern.permute.xlu0 0
      %305 = vperm.xlu0 %304, %v297
      %v306 = vpop.permute.xlu0 %305
      %v308 = vadd.f32 %v288, %v301
      %v309 = vadd.f32 %v289, %v301
      %v310 = vadd.f32 %v290, %v301
      %v311 = vadd.f32 %v291, %v301
      %v312 = vadd.f32 %v292, %v306
      %v313 = vadd.f32 %v293, %v306
      %v314 = vadd.f32 %v294, %v306
      %v315 = vadd.f32 %v295, %v306
      %v316 = vmax.f32 %v308, 0.0
      %v317 = vmax.f32 %v309, 0.0
      %v318 = vmax.f32 %v310, 0.0
      %v319 = vmax.f32 %v311, 0.0
      %v320 = vmax.f32 %v312, 0.0
      %v321 = vmax.f32 %v313, 0.0
      %v322 = vmax.f32 %v314, 0.0
      %v323 = vmax.f32 %v315, 0.0
      %324 = vrot.lane.b32.xlu0 %v316, 73
      %v325 = vpop.permute.xlu0 %324
      %326 = vrot.lane.b32.xlu0 %v320, 73
      %v327 = vpop.permute.xlu0 %326
      %328 = vrot.lane.b32.xlu0 %v317, 73
      %v329 = vpop.permute.xlu0 %328
      %330 = vrot.lane.b32.xlu0 %v321, 73
      %v331 = vpop.permute.xlu0 %330
      %332 = vrot.lane.b32.xlu0 %v318, 73
      %v333 = vpop.permute.xlu0 %332
      %334 = vrot.lane.b32.xlu0 %v322, 73
      %v335 = vpop.permute.xlu0 %334
      %336 = vrot.lane.b32.xlu0 %v319, 73
      %v337 = vpop.permute.xlu0 %336
      %338 = vrot.lane.b32.xlu0 %v323, 73
      %v339 = vpop.permute.xlu0 %338
      %v340 = vlaneseq
      %v341 = vand.u32 %v340, 127
      %vm342 = vcmp.lt.s32.totalorder %v341, 73
      %v343 = vsel %vm342, %v333, %v337
      %v344 = vsel %vm342, %v335, %v339
      %v345 = vsel %vm342, %v329, %v333
      %v346 = vsel %vm342, %v331, %v335
      %v347 = vsel %vm342, %v325, %v329
      %v348 = vsel %vm342, %v327, %v331
      %v349 = vsel %vm342, %v337, %v325
      %v350 = vsel %vm342, %v339, %v327
      %v351 = vld [vmem:[%s3] ss:$8 sm:$0xf]
      %v353 = vperm.slane %v351, 0
      %v354 = vperm.slane %v351, 1
      %v355 = vperm.slane %v351, 2
      %v356 = vperm.slane %v351, 3
      %v361 = vmul.f32 %v349, %v353
      %v362 = vmul.f32 %v347, %v354
      %v363 = vmul.f32 %v345, %v355
      %v364 = vmul.f32 %v343, %v356
      %v365 = vmul.f32 %v350, %v353
      %v366 = vmul.f32 %v348, %v354
      %v367 = vmul.f32 %v346, %v355
      %v368 = vmul.f32 %v344, %v356
      %v369 = vpack.c.bf16 %v362, %v361
      %v370 = vpack.c.bf16 %v364, %v363
      %v371 = vpack.c.bf16 %v366, %v365
      %v372 = vpack.c.bf16 %v368, %v367
      %373 = vst [vmem:[#allocation2] sm:$0xff] %v369
      %374 = vst [vmem:[#allocation2 + $0x8] sm:$0xff] %v370
      %375 = vst [vmem:[#allocation2 + $0x10] sm:$0xff] %v371
      %376 = vst [vmem:[#allocation2 + $0x18] sm:$0xff] %v372
      %377 = vrot.lane.b32.xlu0 %v316, 72
      %v378 = vpop.permute.xlu0 %377
      %379 = vrot.lane.b32.xlu0 %v320, 72
      %v380 = vpop.permute.xlu0 %379
      %381 = vrot.lane.b32.xlu0 %v317, 72
      %v382 = vpop.permute.xlu0 %381
      %383 = vrot.lane.b32.xlu0 %v321, 72
      %v384 = vpop.permute.xlu0 %383
      %385 = vrot.lane.b32.xlu0 %v318, 72
      %v386 = vpop.permute.xlu0 %385
      %387 = vrot.lane.b32.xlu0 %v322, 72
      %v388 = vpop.permute.xlu0 %387
      %389 = vrot.lane.b32.xlu0 %v319, 72
      %v390 = vpop.permute.xlu0 %389
      %391 = vrot.lane.b32.xlu0 %v323, 72
      %v392 = vpop.permute.xlu0 %391
      %vm393 = vcmp.lt.s32.totalorder %v341, 72
      %v394 = vsel %vm393, %v386, %v390
      %v395 = vsel %vm393, %v388, %v392
      %v396 = vsel %vm393, %v382, %v386
      %v397 = vsel %vm393, %v384, %v388
      %v398 = vsel %vm393, %v378, %v382
      %v399 = vsel %vm393, %v380, %v384
      %v400 = vsel %vm393, %v390, %v378
      %v401 = vsel %vm393, %v392, %v380
      %s402 = scalar_lea.vmem %s3, 1
      %v403 = vld [vmem:[%s402] ss:$8 sm:$0xf]
      %v405 = vperm.slane %v403, 0
      %v406 = vperm.slane %v403, 1
      %v407 = vperm.slane %v403, 2
      %v408 = vperm.slane %v403, 3
      %v413 = vmul.f32 %v400, %v405
      %v414 = vmul.f32 %v398, %v406
      %v415 = vmul.f32 %v396, %v407
      %v416 = vmul.f32 %v394, %v408
      %v417 = vmul.f32 %v401, %v405
      %v418 = vmul.f32 %v399, %v406
      %v419 = vmul.f32 %v397, %v407
      %v420 = vmul.f32 %v395, %v408
      %v421 = vpack.c.bf16 %v414, %v413
      %v422 = vpack.c.bf16 %v416, %v415
      %v423 = vpack.c.bf16 %v418, %v417
      %v424 = vpack.c.bf16 %v420, %v419
      %425 = vst [vmem:[#allocation2 + $0x20] sm:$0xff] %v421
      %426 = vst [vmem:[#allocation2 + $0x28] sm:$0xff] %v422
      %427 = vst [vmem:[#allocation2 + $0x30] sm:$0xff] %v423
      %428 = vst [vmem:[#allocation2 + $0x38] sm:$0xff] %v424
      %429 = vrot.lane.b32.xlu0 %v316, 71
      %v430 = vpop.permute.xlu0 %429
      %431 = vrot.lane.b32.xlu0 %v320, 71
      %v432 = vpop.permute.xlu0 %431
      %433 = vrot.lane.b32.xlu0 %v317, 71
      %v434 = vpop.permute.xlu0 %433
      %435 = vrot.lane.b32.xlu0 %v321, 71
      %v436 = vpop.permute.xlu0 %435
      %437 = vrot.lane.b32.xlu0 %v318, 71
      %v438 = vpop.permute.xlu0 %437
      %439 = vrot.lane.b32.xlu0 %v322, 71
      %v440 = vpop.permute.xlu0 %439
      %441 = vrot.lane.b32.xlu0 %v319, 71
      %v442 = vpop.permute.xlu0 %441
      %443 = vrot.lane.b32.xlu0 %v323, 71
      %v444 = vpop.permute.xlu0 %443
      %vm445 = vcmp.lt.s32.totalorder %v341, 71
      %v446 = vsel %vm445, %v438, %v442
      %v447 = vsel %vm445, %v440, %v444
      %v448 = vsel %vm445, %v434, %v438
      %v449 = vsel %vm445, %v436, %v440
      %v450 = vsel %vm445, %v430, %v434
      %v451 = vsel %vm445, %v432, %v436
      %v452 = vsel %vm445, %v442, %v430
      %v453 = vsel %vm445, %v444, %v432
      %s454 = scalar_lea.vmem %s3, 2
      %v455 = vld [vmem:[%s454] ss:$8 sm:$0xf]
      %v457 = vperm.slane %v455, 0
      %v458 = vperm.slane %v455, 1
      %v459 = vperm.slane %v455, 2
      %v460 = vperm.slane %v455, 3
      %v465 = vmul.f32 %v452, %v457
      %v466 = vmul.f32 %v450, %v458
      %v467 = vmul.f32 %v448, %v459
      %v468 = vmul.f32 %v446, %v460
      %v469 = vmul.f32 %v453, %v457
      %v470 = vmul.f32 %v451, %v458
      %v471 = vmul.f32 %v449, %v459
      %v472 = vmul.f32 %v447, %v460
      %v473 = vpack.c.bf16 %v466, %v465
      %v474 = vpack.c.bf16 %v468, %v467
      %v475 = vpack.c.bf16 %v470, %v469
      %v476 = vpack.c.bf16 %v472, %v471
      %477 = vst [vmem:[#allocation2 + $0x40] sm:$0xff] %v473
      %478 = vst [vmem:[#allocation2 + $0x48] sm:$0xff] %v474
      %479 = vst [vmem:[#allocation2 + $0x50] sm:$0xff] %v475
      %480 = vst [vmem:[#allocation2 + $0x58] sm:$0xff] %v476
      %481 = vrot.lane.b32.xlu0 %v316, 65
      %v482 = vpop.permute.xlu0 %481
      %483 = vrot.lane.b32.xlu0 %v320, 65
      %v484 = vpop.permute.xlu0 %483
      %485 = vrot.lane.b32.xlu0 %v317, 65
      %v486 = vpop.permute.xlu0 %485
      %487 = vrot.lane.b32.xlu0 %v321, 65
      %v488 = vpop.permute.xlu0 %487
      %489 = vrot.lane.b32.xlu0 %v318, 65
      %v490 = vpop.permute.xlu0 %489
      %491 = vrot.lane.b32.xlu0 %v322, 65
      %v492 = vpop.permute.xlu0 %491
      %493 = vrot.lane.b32.xlu0 %v319, 65
      %v494 = vpop.permute.xlu0 %493
      %495 = vrot.lane.b32.xlu0 %v323, 65
      %v496 = vpop.permute.xlu0 %495
      %vm497 = vcmp.lt.s32.totalorder %v341, 65
      %v498 = vsel %vm497, %v490, %v494
      %v499 = vsel %vm497, %v492, %v496
      %v500 = vsel %vm497, %v486, %v490
      %v501 = vsel %vm497, %v488, %v492
      %v502 = vsel %vm497, %v482, %v486
      %v503 = vsel %vm497, %v484, %v488
      %v504 = vsel %vm497, %v494, %v482
      %v505 = vsel %vm497, %v496, %v484
      %s506 = scalar_lea.vmem %s3, 3
      %v507 = vld [vmem:[%s506] ss:$8 sm:$0xf]
      %v509 = vperm.slane %v507, 0
      %v510 = vperm.slane %v507, 1
      %v511 = vperm.slane %v507, 2
      %v512 = vperm.slane %v507, 3
      %v517 = vmul.f32 %v504, %v509
      %v518 = vmul.f32 %v502, %v510
      %v519 = vmul.f32 %v500, %v511
      %v520 = vmul.f32 %v498, %v512
      %v521 = vmul.f32 %v505, %v509
      %v522 = vmul.f32 %v503, %v510
      %v523 = vmul.f32 %v501, %v511
      %v524 = vmul.f32 %v499, %v512
      %v525 = vpack.c.bf16 %v518, %v517
      %v526 = vpack.c.bf16 %v520, %v519
      %v527 = vpack.c.bf16 %v522, %v521
      %v528 = vpack.c.bf16 %v524, %v523
      %529 = vst [vmem:[#allocation2 + $0x60] sm:$0xff] %v525
      %530 = vst [vmem:[#allocation2 + $0x68] sm:$0xff] %v526
      %531 = vst [vmem:[#allocation2 + $0x70] sm:$0xff] %v527
      %532 = vst [vmem:[#allocation2 + $0x78] sm:$0xff] %v528
      %533 = vrot.lane.b32.xlu0 %v316, 64
      %v534 = vpop.permute.xlu0 %533
      %535 = vrot.lane.b32.xlu0 %v320, 64
      %v536 = vpop.permute.xlu0 %535
      %537 = vrot.lane.b32.xlu0 %v317, 64
      %v538 = vpop.permute.xlu0 %537
      %539 = vrot.lane.b32.xlu0 %v321, 64
      %v540 = vpop.permute.xlu0 %539
      %541 = vrot.lane.b32.xlu0 %v318, 64
      %v542 = vpop.permute.xlu0 %541
      %543 = vrot.lane.b32.xlu0 %v322, 64
      %v544 = vpop.permute.xlu0 %543
      %545 = vrot.lane.b32.xlu0 %v319, 64
      %v546 = vpop.permute.xlu0 %545
      %547 = vrot.lane.b32.xlu0 %v323, 64
      %v548 = vpop.permute.xlu0 %547
      %vm549 = vcmp.lt.s32.totalorder %v341, 64
      %v550 = vsel %vm549, %v542, %v546
      %v551 = vsel %vm549, %v544, %v548
      %v552 = vsel %vm549, %v538, %v542
      %v553 = vsel %vm549, %v540, %v544
      %v554 = vsel %vm549, %v534, %v538
      %v555 = vsel %vm549, %v536, %v540
      %v556 = vsel %vm549, %v546, %v534
      %v557 = vsel %vm549, %v548, %v536
      %s558 = scalar_lea.vmem %s3, 4
      %v559 = vld [vmem:[%s558] ss:$8 sm:$0xf]
      %v561 = vperm.slane %v559, 0
      %v562 = vperm.slane %v559, 1
      %v563 = vperm.slane %v559, 2
      %v564 = vperm.slane %v559, 3
      %v569 = vmul.f32 %v556, %v561
      %v570 = vmul.f32 %v554, %v562
      %v571 = vmul.f32 %v552, %v563
      %v572 = vmul.f32 %v550, %v564
      %v573 = vmul.f32 %v557, %v561
      %v574 = vmul.f32 %v555, %v562
      %v575 = vmul.f32 %v553, %v563
      %v576 = vmul.f32 %v551, %v564
      %v577 = vpack.c.bf16 %v570, %v569
      %v578 = vpack.c.bf16 %v572, %v571
      %v579 = vpack.c.bf16 %v574, %v573
      %v580 = vpack.c.bf16 %v576, %v575
      %581 = vst [vmem:[#allocation2 + $0x80] sm:$0xff] %v577
      %582 = vst [vmem:[#allocation2 + $0x88] sm:$0xff] %v578
      %583 = vst [vmem:[#allocation2 + $0x90] sm:$0xff] %v579
      %584 = vst [vmem:[#allocation2 + $0x98] sm:$0xff] %v580
      %585 = vrot.lane.b32.xlu0 %v316, 63
      %v586 = vpop.permute.xlu0 %585
      %587 = vrot.lane.b32.xlu0 %v320, 63
      %v588 = vpop.permute.xlu0 %587
      %589 = vrot.lane.b32.xlu0 %v317, 63
      %v590 = vpop.permute.xlu0 %589
      %591 = vrot.lane.b32.xlu0 %v321, 63
      %v592 = vpop.permute.xlu0 %591
      %593 = vrot.lane.b32.xlu0 %v318, 63
      %v594 = vpop.permute.xlu0 %593
      %595 = vrot.lane.b32.xlu0 %v322, 63
      %v596 = vpop.permute.xlu0 %595
      %597 = vrot.lane.b32.xlu0 %v319, 63
      %v598 = vpop.permute.xlu0 %597
      %599 = vrot.lane.b32.xlu0 %v323, 63
      %v600 = vpop.permute.xlu0 %599
      %vm601 = vcmp.lt.s32.totalorder %v341, 63
      %v602 = vsel %vm601, %v594, %v598
      %v603 = vsel %vm601, %v596, %v600
      %v604 = vsel %vm601, %v590, %v594
      %v605 = vsel %vm601, %v592, %v596
      %v606 = vsel %vm601, %v586, %v590
      %v607 = vsel %vm601, %v588, %v592
      %v608 = vsel %vm601, %v598, %v586
      %v609 = vsel %vm601, %v600, %v588
      %s610 = scalar_lea.vmem %s3, 5
      %v611 = vld [vmem:[%s610] ss:$8 sm:$0xf]
      %v613 = vperm.slane %v611, 0
      %v614 = vperm.slane %v611, 1
      %v615 = vperm.slane %v611, 2
      %v616 = vperm.slane %v611, 3
      %v621 = vmul.f32 %v608, %v613
      %v622 = vmul.f32 %v606, %v614
      %v623 = vmul.f32 %v604, %v615
      %v624 = vmul.f32 %v602, %v616
      %v625 = vmul.f32 %v609, %v613
      %v626 = vmul.f32 %v607, %v614
      %v627 = vmul.f32 %v605, %v615
      %v628 = vmul.f32 %v603, %v616
      %v629 = vpack.c.bf16 %v622, %v621
      %v630 = vpack.c.bf16 %v624, %v623
      %v631 = vpack.c.bf16 %v626, %v625
      %v632 = vpack.c.bf16 %v628, %v627
      %633 = vst [vmem:[#allocation2 + $0xa0] sm:$0xff] %v629
      %634 = vst [vmem:[#allocation2 + $0xa8] sm:$0xff] %v630
      %635 = vst [vmem:[#allocation2 + $0xb0] sm:$0xff] %v631
      %636 = vst [vmem:[#allocation2 + $0xb8] sm:$0xff] %v632
      %637 = vrot.lane.b32.xlu0 %v316, 57
      %v638 = vpop.permute.xlu0 %637
      %639 = vrot.lane.b32.xlu0 %v320, 57
      %v640 = vpop.permute.xlu0 %639
      %641 = vrot.lane.b32.xlu0 %v317, 57
      %v642 = vpop.permute.xlu0 %641
      %643 = vrot.lane.b32.xlu0 %v321, 57
      %v644 = vpop.permute.xlu0 %643
      %645 = vrot.lane.b32.xlu0 %v318, 57
      %v646 = vpop.permute.xlu0 %645
      %647 = vrot.lane.b32.xlu0 %v322, 57
      %v648 = vpop.permute.xlu0 %647
      %649 = vrot.lane.b32.xlu0 %v319, 57
      %v650 = vpop.permute.xlu0 %649
      %651 = vrot.lane.b32.xlu0 %v323, 57
      %v652 = vpop.permute.xlu0 %651
      %vm653 = vcmp.lt.s32.totalorder %v341, 57
      %v654 = vsel %vm653, %v646, %v650
      %v655 = vsel %vm653, %v648, %v652
      %v656 = vsel %vm653, %v642, %v646
      %v657 = vsel %vm653, %v644, %v648
      %v658 = vsel %vm653, %v638, %v642
      %v659 = vsel %vm653, %v640, %v644
      %v660 = vsel %vm653, %v650, %v638
      %v661 = vsel %vm653, %v652, %v640
      %s662 = scalar_lea.vmem %s3, 6
      %v663 = vld [vmem:[%s662] ss:$8 sm:$0xf]
      %v665 = vperm.slane %v663, 0
      %v666 = vperm.slane %v663, 1
      %v667 = vperm.slane %v663, 2
      %v668 = vperm.slane %v663, 3
      %v673 = vmul.f32 %v660, %v665
      %v674 = vmul.f32 %v658, %v666
      %v675 = vmul.f32 %v656, %v667
      %v676 = vmul.f32 %v654, %v668
      %v677 = vmul.f32 %v661, %v665
      %v678 = vmul.f32 %v659, %v666
      %v679 = vmul.f32 %v657, %v667
      %v680 = vmul.f32 %v655, %v668
      %v681 = vpack.c.bf16 %v674, %v673
      %v682 = vpack.c.bf16 %v676, %v675
      %v683 = vpack.c.bf16 %v678, %v677
      %v684 = vpack.c.bf16 %v680, %v679
      %685 = vst [vmem:[#allocation2 + $0xc0] sm:$0xff] %v681
      %686 = vst [vmem:[#allocation2 + $0xc8] sm:$0xff] %v682
      %687 = vst [vmem:[#allocation2 + $0xd0] sm:$0xff] %v683
      %688 = vst [vmem:[#allocation2 + $0xd8] sm:$0xff] %v684
      %689 = vrot.lane.b32.xlu0 %v316, 56
      %v690 = vpop.permute.xlu0 %689
      %691 = vrot.lane.b32.xlu0 %v320, 56
      %v692 = vpop.permute.xlu0 %691
      %693 = vrot.lane.b32.xlu0 %v317, 56
      %v694 = vpop.permute.xlu0 %693
      %695 = vrot.lane.b32.xlu0 %v321, 56
      %v696 = vpop.permute.xlu0 %695
      %697 = vrot.lane.b32.xlu0 %v318, 56
      %v698 = vpop.permute.xlu0 %697
      %699 = vrot.lane.b32.xlu0 %v322, 56
      %v700 = vpop.permute.xlu0 %699
      %701 = vrot.lane.b32.xlu0 %v319, 56
      %v702 = vpop.permute.xlu0 %701
      %703 = vrot.lane.b32.xlu0 %v323, 56
      %v704 = vpop.permute.xlu0 %703
      %vm705 = vcmp.lt.s32.totalorder %v341, 56
      %v706 = vsel %vm705, %v698, %v702
      %v707 = vsel %vm705, %v700, %v704
      %v708 = vsel %vm705, %v694, %v698
      %v709 = vsel %vm705, %v696, %v700
      %v710 = vsel %vm705, %v690, %v694
      %v711 = vsel %vm705, %v692, %v696
      %v712 = vsel %vm705, %v702, %v690
      %v713 = vsel %vm705, %v704, %v692
      %s714 = scalar_lea.vmem %s3, 7
      %v715 = vld [vmem:[%s714] ss:$8 sm:$0xf]
      %v717 = vperm.slane %v715, 0
      %v718 = vperm.slane %v715, 1
      %v719 = vperm.slane %v715, 2
      %v720 = vperm.slane %v715, 3
      %v725 = vmul.f32 %v712, %v717
      %v726 = vmul.f32 %v710, %v718
      %v727 = vmul.f32 %v708, %v719
      %v728 = vmul.f32 %v706, %v720
      %v729 = vmul.f32 %v713, %v717
      %v730 = vmul.f32 %v711, %v718
      %v731 = vmul.f32 %v709, %v719
      %v732 = vmul.f32 %v707, %v720
      %v733 = vpack.c.bf16 %v726, %v725
      %v734 = vpack.c.bf16 %v728, %v727
      %v735 = vpack.c.bf16 %v730, %v729
      %v736 = vpack.c.bf16 %v732, %v731
      %737 = vst [vmem:[#allocation2 + $0xe0] sm:$0xff] %v733
      %738 = vst [vmem:[#allocation2 + $0xe8] sm:$0xff] %v734
      %739 = vst [vmem:[#allocation2 + $0xf0] sm:$0xff] %v735
      %740 = vst [vmem:[#allocation2 + $0xf8] sm:$0xff] %v736
      %741 = vrot.lane.b32.xlu0 %v316, 55
      %v742 = vpop.permute.xlu0 %741
      %743 = vrot.lane.b32.xlu0 %v320, 55
      %v744 = vpop.permute.xlu0 %743
      %745 = vrot.lane.b32.xlu0 %v317, 55
      %v746 = vpop.permute.xlu0 %745
      %747 = vrot.lane.b32.xlu0 %v321, 55
      %v748 = vpop.permute.xlu0 %747
      %749 = vrot.lane.b32.xlu0 %v318, 55
      %v750 = vpop.permute.xlu0 %749
      %751 = vrot.lane.b32.xlu0 %v322, 55
      %v752 = vpop.permute.xlu0 %751
      %753 = vrot.lane.b32.xlu0 %v319, 55
      %v754 = vpop.permute.xlu0 %753
      %755 = vrot.lane.b32.xlu0 %v323, 55
      %v756 = vpop.permute.xlu0 %755
      %vm757 = vcmp.lt.s32.totalorder %v341, 55
      %v758 = vsel %vm757, %v750, %v754
      %v759 = vsel %vm757, %v752, %v756
      %v760 = vsel %vm757, %v746, %v750
      %v761 = vsel %vm757, %v748, %v752
      %v762 = vsel %vm757, %v742, %v746
      %v763 = vsel %vm757, %v744, %v748
      %v764 = vsel %vm757, %v754, %v742
      %v765 = vsel %vm757, %v756, %v744
      %s766 = scalar_lea.vmem %s3, 32
      %v767 = vld [vmem:[%s766] ss:$8 sm:$0xf]
      %v769 = vperm.slane %v767, 0
      %v770 = vperm.slane %v767, 1
      %v771 = vperm.slane %v767, 2
      %v772 = vperm.slane %v767, 3
      %v777 = vmul.f32 %v764, %v769
      %v778 = vmul.f32 %v762, %v770
      %v779 = vmul.f32 %v760, %v771
      %v780 = vmul.f32 %v758, %v772
      %v781 = vmul.f32 %v765, %v769
      %v782 = vmul.f32 %v763, %v770
      %v783 = vmul.f32 %v761, %v771
      %v784 = vmul.f32 %v759, %v772
      %v785 = vpack.c.bf16 %v778, %v777
      %v786 = vpack.c.bf16 %v780, %v779
      %v787 = vpack.c.bf16 %v782, %v781
      %v788 = vpack.c.bf16 %v784, %v783
      %789 = vst [vmem:[#allocation2 + $0x100] sm:$0xff] %v785
      %790 = vst [vmem:[#allocation2 + $0x108] sm:$0xff] %v786
      %791 = vst [vmem:[#allocation2 + $0x110] sm:$0xff] %v787
      %792 = vst [vmem:[#allocation2 + $0x118] sm:$0xff] %v788
      %793 = vrot.lane.b32.xlu0 %v316, 9
      %v794 = vpop.permute.xlu0 %793
      %795 = vrot.lane.b32.xlu0 %v320, 9
      %v796 = vpop.permute.xlu0 %795
      %797 = vrot.lane.b32.xlu0 %v317, 9
      %v798 = vpop.permute.xlu0 %797
      %799 = vrot.lane.b32.xlu0 %v321, 9
      %v800 = vpop.permute.xlu0 %799
      %801 = vrot.lane.b32.xlu0 %v318, 9
      %v802 = vpop.permute.xlu0 %801
      %803 = vrot.lane.b32.xlu0 %v322, 9
      %v804 = vpop.permute.xlu0 %803
      %805 = vrot.lane.b32.xlu0 %v319, 9
      %v806 = vpop.permute.xlu0 %805
      %807 = vrot.lane.b32.xlu0 %v323, 9
      %v808 = vpop.permute.xlu0 %807
      %vm809 = vcmp.lt.s32.totalorder %v341, 9
      %v810 = vsel %vm809, %v802, %v806
      %v811 = vsel %vm809, %v804, %v808
      %v812 = vsel %vm809, %v798, %v802
      %v813 = vsel %vm809, %v800, %v804
      %v814 = vsel %vm809, %v794, %v798
      %v815 = vsel %vm809, %v796, %v800
      %v816 = vsel %vm809, %v806, %v794
      %v817 = vsel %vm809, %v808, %v796
      %s818 = scalar_lea.vmem %s3, 33
      %v819 = vld [vmem:[%s818] ss:$8 sm:$0xf]
      %v821 = vperm.slane %v819, 0
      %v822 = vperm.slane %v819, 1
      %v823 = vperm.slane %v819, 2
      %v824 = vperm.slane %v819, 3
      %v829 = vmul.f32 %v816, %v821
      %v830 = vmul.f32 %v814, %v822
      %v831 = vmul.f32 %v812, %v823
      %v832 = vmul.f32 %v810, %v824
      %v833 = vmul.f32 %v817, %v821
      %v834 = vmul.f32 %v815, %v822
      %v835 = vmul.f32 %v813, %v823
      %v836 = vmul.f32 %v811, %v824
      %v837 = vpack.c.bf16 %v830, %v829
      %v838 = vpack.c.bf16 %v832, %v831
      %v839 = vpack.c.bf16 %v834, %v833
      %v840 = vpack.c.bf16 %v836, %v835
      %841 = vst [vmem:[#allocation2 + $0x120] sm:$0xff] %v837
      %842 = vst [vmem:[#allocation2 + $0x128] sm:$0xff] %v838
      %843 = vst [vmem:[#allocation2 + $0x130] sm:$0xff] %v839
      %844 = vst [vmem:[#allocation2 + $0x138] sm:$0xff] %v840
      %845 = vrot.lane.b32.xlu0 %v316, 8
      %v846 = vpop.permute.xlu0 %845
      %847 = vrot.lane.b32.xlu0 %v320, 8
      %v848 = vpop.permute.xlu0 %847
      %849 = vrot.lane.b32.xlu0 %v317, 8
      %v850 = vpop.permute.xlu0 %849
      %851 = vrot.lane.b32.xlu0 %v321, 8
      %v852 = vpop.permute.xlu0 %851
      %853 = vrot.lane.b32.xlu0 %v318, 8
      %v854 = vpop.permute.xlu0 %853
      %855 = vrot.lane.b32.xlu0 %v322, 8
      %v856 = vpop.permute.xlu0 %855
      %857 = vrot.lane.b32.xlu0 %v319, 8
      %v858 = vpop.permute.xlu0 %857
      %859 = vrot.lane.b32.xlu0 %v323, 8
      %v860 = vpop.permute.xlu0 %859
      %vm861 = vcmp.lt.s32.totalorder %v341, 8
      %v862 = vsel %vm861, %v854, %v858
      %v863 = vsel %vm861, %v856, %v860
      %v864 = vsel %vm861, %v850, %v854
      %v865 = vsel %vm861, %v852, %v856
      %v866 = vsel %vm861, %v846, %v850
      %v867 = vsel %vm861, %v848, %v852
      %v868 = vsel %vm861, %v858, %v846
      %v869 = vsel %vm861, %v860, %v848
      %s870 = scalar_lea.vmem %s3, 34
      %v871 = vld [vmem:[%s870] ss:$8 sm:$0xf]
      %v873 = vperm.slane %v871, 0
      %v874 = vperm.slane %v871, 1
      %v875 = vperm.slane %v871, 2
      %v876 = vperm.slane %v871, 3
      %v881 = vmul.f32 %v868, %v873
      %v882 = vmul.f32 %v866, %v874
      %v883 = vmul.f32 %v864, %v875
      %v884 = vmul.f32 %v862, %v876
      %v885 = vmul.f32 %v869, %v873
      %v886 = vmul.f32 %v867, %v874
      %v887 = vmul.f32 %v865, %v875
      %v888 = vmul.f32 %v863, %v876
      %v889 = vpack.c.bf16 %v882, %v881
      %v890 = vpack.c.bf16 %v884, %v883
      %v891 = vpack.c.bf16 %v886, %v885
      %v892 = vpack.c.bf16 %v888, %v887
      %893 = vst [vmem:[#allocation2 + $0x140] sm:$0xff] %v889
      %894 = vst [vmem:[#allocation2 + $0x148] sm:$0xff] %v890
      %895 = vst [vmem:[#allocation2 + $0x150] sm:$0xff] %v891
      %896 = vst [vmem:[#allocation2 + $0x158] sm:$0xff] %v892
      %897 = vrot.lane.b32.xlu0 %v316, 7
      %v898 = vpop.permute.xlu0 %897
      %899 = vrot.lane.b32.xlu0 %v320, 7
      %v900 = vpop.permute.xlu0 %899
      %901 = vrot.lane.b32.xlu0 %v317, 7
      %v902 = vpop.permute.xlu0 %901
      %903 = vrot.lane.b32.xlu0 %v321, 7
      %v904 = vpop.permute.xlu0 %903
      %905 = vrot.lane.b32.xlu0 %v318, 7
      %v906 = vpop.permute.xlu0 %905
      %907 = vrot.lane.b32.xlu0 %v322, 7
      %v908 = vpop.permute.xlu0 %907
      %909 = vrot.lane.b32.xlu0 %v319, 7
      %v910 = vpop.permute.xlu0 %909
      %911 = vrot.lane.b32.xlu0 %v323, 7
      %v912 = vpop.permute.xlu0 %911
      %vm913 = vcmp.lt.s32.totalorder %v341, 7
      %v914 = vsel %vm913, %v906, %v910
      %v915 = vsel %vm913, %v908, %v912
      %v916 = vsel %vm913, %v902, %v906
      %v917 = vsel %vm913, %v904, %v908
      %v918 = vsel %vm913, %v898, %v902
      %v919 = vsel %vm913, %v900, %v904
      %v920 = vsel %vm913, %v910, %v898
      %v921 = vsel %vm913, %v912, %v900
      %s922 = scalar_lea.vmem %s3, 35
      %v923 = vld [vmem:[%s922] ss:$8 sm:$0xf]
      %v925 = vperm.slane %v923, 0
      %v926 = vperm.slane %v923, 1
      %v927 = vperm.slane %v923, 2
      %v928 = vperm.slane %v923, 3
      %v933 = vmul.f32 %v920, %v925
      %v934 = vmul.f32 %v918, %v926
      %v935 = vmul.f32 %v916, %v927
      %v936 = vmul.f32 %v914, %v928
      %v937 = vmul.f32 %v921, %v925
      %v938 = vmul.f32 %v919, %v926
      %v939 = vmul.f32 %v917, %v927
      %v940 = vmul.f32 %v915, %v928
      %v941 = vpack.c.bf16 %v934, %v933
      %v942 = vpack.c.bf16 %v936, %v935
      %v943 = vpack.c.bf16 %v938, %v937
      %v944 = vpack.c.bf16 %v940, %v939
      %945 = vst [vmem:[#allocation2 + $0x160] sm:$0xff] %v941
      %946 = vst [vmem:[#allocation2 + $0x168] sm:$0xff] %v942
      %947 = vst [vmem:[#allocation2 + $0x170] sm:$0xff] %v943
      %948 = vst [vmem:[#allocation2 + $0x178] sm:$0xff] %v944
      %949 = vrot.lane.b32.xlu0 %v316, 1
      %v950 = vpop.permute.xlu0 %949
      %951 = vrot.lane.b32.xlu0 %v320, 1
      %v952 = vpop.permute.xlu0 %951
      %953 = vrot.lane.b32.xlu0 %v317, 1
      %v954 = vpop.permute.xlu0 %953
      %955 = vrot.lane.b32.xlu0 %v321, 1
      %v956 = vpop.permute.xlu0 %955
      %957 = vrot.lane.b32.xlu0 %v318, 1
      %v958 = vpop.permute.xlu0 %957
      %959 = vrot.lane.b32.xlu0 %v322, 1
      %v960 = vpop.permute.xlu0 %959
      %961 = vrot.lane.b32.xlu0 %v319, 1
      %v962 = vpop.permute.xlu0 %961
      %963 = vrot.lane.b32.xlu0 %v323, 1
      %v964 = vpop.permute.xlu0 %963
      %vm965 = vcmp.lt.s32.totalorder %v341, 1
      %v966 = vsel %vm965, %v958, %v962
      %v967 = vsel %vm965, %v960, %v964
      %v968 = vsel %vm965, %v954, %v958
      %v969 = vsel %vm965, %v956, %v960
      %v970 = vsel %vm965, %v950, %v954
      %v971 = vsel %vm965, %v952, %v956
      %v972 = vsel %vm965, %v962, %v950
      %v973 = vsel %vm965, %v964, %v952
      %s974 = scalar_lea.vmem %s3, 36
      %v975 = vld [vmem:[%s974] ss:$8 sm:$0xf]
      %v977 = vperm.slane %v975, 0
      %v978 = vperm.slane %v975, 1
      %v979 = vperm.slane %v975, 2
      %v980 = vperm.slane %v975, 3
      %v985 = vmul.f32 %v972, %v977
      %v986 = vmul.f32 %v970, %v978
      %v987 = vmul.f32 %v968, %v979
      %v988 = vmul.f32 %v966, %v980
      %v989 = vmul.f32 %v973, %v977
      %v990 = vmul.f32 %v971, %v978
      %v991 = vmul.f32 %v969, %v979
      %v992 = vmul.f32 %v967, %v980
      %v993 = vpack.c.bf16 %v986, %v985
      %v994 = vpack.c.bf16 %v988, %v987
      %v995 = vpack.c.bf16 %v990, %v989
      %v996 = vpack.c.bf16 %v992, %v991
      %997 = vst [vmem:[#allocation2 + $0x180] sm:$0xff] %v993
      %998 = vst [vmem:[#allocation2 + $0x188] sm:$0xff] %v994
      %999 = vst [vmem:[#allocation2 + $0x190] sm:$0xff] %v995
      %1000 = vst [vmem:[#allocation2 + $0x198] sm:$0xff] %v996
      %s1001 = scalar_lea.vmem %s3, 37
      %v1002 = vld [vmem:[%s1001] ss:$8 sm:$0xf]
      %v1004 = vperm.slane %v1002, 0
      %v1005 = vperm.slane %v1002, 1
      %v1006 = vperm.slane %v1002, 2
      %v1007 = vperm.slane %v1002, 3
      %v1012 = vmul.f32 %v316, %v1004
      %v1013 = vmul.f32 %v317, %v1005
      %v1014 = vmul.f32 %v318, %v1006
      %v1015 = vmul.f32 %v319, %v1007
      %v1016 = vmul.f32 %v320, %v1004
      %v1017 = vmul.f32 %v321, %v1005
      %v1018 = vmul.f32 %v322, %v1006
      %v1019 = vmul.f32 %v323, %v1007
      %v1020 = vpack.c.bf16 %v1013, %v1012
      %v1021 = vpack.c.bf16 %v1015, %v1014
      %v1022 = vpack.c.bf16 %v1017, %v1016
      %v1023 = vpack.c.bf16 %v1019, %v1018
      %1024 = vst [vmem:[#allocation2 + $0x1a0] sm:$0xff] %v1020
      %1025 = vst [vmem:[#allocation2 + $0x1a8] sm:$0xff] %v1021
      %1026 = vst [vmem:[#allocation2 + $0x1b0] sm:$0xff] %v1022
      %1027 = vst [vmem:[#allocation2 + $0x1b8] sm:$0xff] %v1023
      %1028 = vrot.lane.b32.xlu0 %v316, 127
      %v1029 = vpop.permute.xlu0 %1028
      %1030 = vrot.lane.b32.xlu0 %v320, 127
      %v1031 = vpop.permute.xlu0 %1030
      %1032 = vrot.lane.b32.xlu0 %v317, 127
      %v1033 = vpop.permute.xlu0 %1032
      %1034 = vrot.lane.b32.xlu0 %v321, 127
      %v1035 = vpop.permute.xlu0 %1034
      %1036 = vrot.lane.b32.xlu0 %v318, 127
      %v1037 = vpop.permute.xlu0 %1036
      %1038 = vrot.lane.b32.xlu0 %v322, 127
      %v1039 = vpop.permute.xlu0 %1038
      %1040 = vrot.lane.b32.xlu0 %v319, 127
      %v1041 = vpop.permute.xlu0 %1040
      %1042 = vrot.lane.b32.xlu0 %v323, 127
      %v1043 = vpop.permute.xlu0 %1042
      %vm1044 = vcmp.lt.s32.totalorder %v341, 127
      %v1045 = vsel %vm1044, %v1037, %v1041
      %v1046 = vsel %vm1044, %v1039, %v1043
      %v1047 = vsel %vm1044, %v1033, %v1037
      %v1048 = vsel %vm1044, %v1035, %v1039
      %v1049 = vsel %vm1044, %v1029, %v1033
      %v1050 = vsel %vm1044, %v1031, %v1035
      %v1051 = vsel %vm1044, %v1041, %v1029
      %v1052 = vsel %vm1044, %v1043, %v1031
      %s1053 = scalar_lea.vmem %s3, 38
      %v1054 = vld [vmem:[%s1053] ss:$8 sm:$0xf]
      %v1056 = vperm.slane %v1054, 0
      %v1057 = vperm.slane %v1054, 1
      %v1058 = vperm.slane %v1054, 2
      %v1059 = vperm.slane %v1054, 3
      %v1064 = vmul.f32 %v1049, %v1056
      %v1065 = vmul.f32 %v1047, %v1057
      %v1066 = vmul.f32 %v1045, %v1058
      %v1067 = vmul.f32 %v1051, %v1059
      %v1068 = vmul.f32 %v1050, %v1056
      %v1069 = vmul.f32 %v1048, %v1057
      %v1070 = vmul.f32 %v1046, %v1058
      %v1071 = vmul.f32 %v1052, %v1059
      %v1072 = vpack.c.bf16 %v1065, %v1064
      %v1073 = vpack.c.bf16 %v1067, %v1066
      %v1074 = vpack.c.bf16 %v1069, %v1068
      %v1075 = vpack.c.bf16 %v1071, %v1070
      %1076 = vst [vmem:[#allocation2 + $0x1c0] sm:$0xff] %v1072
      %1077 = vst [vmem:[#allocation2 + $0x1c8] sm:$0xff] %v1073
      %1078 = vst [vmem:[#allocation2 + $0x1d0] sm:$0xff] %v1074
      %1079 = vst [vmem:[#allocation2 + $0x1d8] sm:$0xff] %v1075
      %1080 = vrot.lane.b32.xlu0 %v316, 121
      %v1081 = vpop.permute.xlu0 %1080
      %1082 = vrot.lane.b32.xlu0 %v320, 121
      %v1083 = vpop.permute.xlu0 %1082
      %1084 = vrot.lane.b32.xlu0 %v317, 121
      %v1085 = vpop.permute.xlu0 %1084
      %1086 = vrot.lane.b32.xlu0 %v321, 121
      %v1087 = vpop.permute.xlu0 %1086
      %1088 = vrot.lane.b32.xlu0 %v318, 121
      %v1089 = vpop.permute.xlu0 %1088
      %1090 = vrot.lane.b32.xlu0 %v322, 121
      %v1091 = vpop.permute.xlu0 %1090
      %1092 = vrot.lane.b32.xlu0 %v319, 121
      %v1093 = vpop.permute.xlu0 %1092
      %1094 = vrot.lane.b32.xlu0 %v323, 121
      %v1095 = vpop.permute.xlu0 %1094
      %vm1096 = vcmp.lt.s32.totalorder %v341, 121
      %v1097 = vsel %vm1096, %v1089, %v1093
      %v1098 = vsel %vm1096, %v1091, %v1095
      %v1099 = vsel %vm1096, %v1085, %v1089
      %v1100 = vsel %vm1096, %v1087, %v1091
      %v1101 = vsel %vm1096, %v1081, %v1085
      %v1102 = vsel %vm1096, %v1083, %v1087
      %v1103 = vsel %vm1096, %v1093, %v1081
      %v1104 = vsel %vm1096, %v1095, %v1083
      %s1105 = scalar_lea.vmem %s3, 39
      %v1106 = vld [vmem:[%s1105] ss:$8 sm:$0xf]
      %v1108 = vperm.slane %v1106, 0
      %v1109 = vperm.slane %v1106, 1
      %v1110 = vperm.slane %v1106, 2
      %v1111 = vperm.slane %v1106, 3
      %v1116 = vmul.f32 %v1101, %v1108
      %v1117 = vmul.f32 %v1099, %v1109
      %v1118 = vmul.f32 %v1097, %v1110
      %v1119 = vmul.f32 %v1103, %v1111
      %v1120 = vmul.f32 %v1102, %v1108
      %v1121 = vmul.f32 %v1100, %v1109
      %v1122 = vmul.f32 %v1098, %v1110
      %v1123 = vmul.f32 %v1104, %v1111
      %v1124 = vpack.c.bf16 %v1117, %v1116
      %v1125 = vpack.c.bf16 %v1119, %v1118
      %v1126 = vpack.c.bf16 %v1121, %v1120
      %v1127 = vpack.c.bf16 %v1123, %v1122
      %1128 = vst [vmem:[#allocation2 + $0x1e0] sm:$0xff] %v1124
      %1129 = vst [vmem:[#allocation2 + $0x1e8] sm:$0xff] %v1125
      %1130 = vst [vmem:[#allocation2 + $0x1f0] sm:$0xff] %v1126
      %1131 = vst [vmem:[#allocation2 + $0x1f8] sm:$0xff] %v1127
      %1132 = vrot.lane.b32.xlu0 %v316, 120
      %v1133 = vpop.permute.xlu0 %1132
      %1134 = vrot.lane.b32.xlu0 %v320, 120
      %v1135 = vpop.permute.xlu0 %1134
      %1136 = vrot.lane.b32.xlu0 %v317, 120
      %v1137 = vpop.permute.xlu0 %1136
      %1138 = vrot.lane.b32.xlu0 %v321, 120
      %v1139 = vpop.permute.xlu0 %1138
      %1140 = vrot.lane.b32.xlu0 %v318, 120
      %v1141 = vpop.permute.xlu0 %1140
      %1142 = vrot.lane.b32.xlu0 %v322, 120
      %v1143 = vpop.permute.xlu0 %1142
      %1144 = vrot.lane.b32.xlu0 %v319, 120
      %v1145 = vpop.permute.xlu0 %1144
      %1146 = vrot.lane.b32.xlu0 %v323, 120
      %v1147 = vpop.permute.xlu0 %1146
      %vm1148 = vcmp.lt.s32.totalorder %v341, 120
      %v1149 = vsel %vm1148, %v1141, %v1145
      %v1150 = vsel %vm1148, %v1143, %v1147
      %v1151 = vsel %vm1148, %v1137, %v1141
      %v1152 = vsel %vm1148, %v1139, %v1143
      %v1153 = vsel %vm1148, %v1133, %v1137
      %v1154 = vsel %vm1148, %v1135, %v1139
      %v1155 = vsel %vm1148, %v1145, %v1133
      %v1156 = vsel %vm1148, %v1147, %v1135
      %s1157 = scalar_lea.vmem %s3, 64
      %v1158 = vld [vmem:[%s1157] ss:$8 sm:$0xf]
      %v1160 = vperm.slane %v1158, 0
      %v1161 = vperm.slane %v1158, 1
      %v1162 = vperm.slane %v1158, 2
      %v1163 = vperm.slane %v1158, 3
      %v1168 = vmul.f32 %v1153, %v1160
      %v1169 = vmul.f32 %v1151, %v1161
      %v1170 = vmul.f32 %v1149, %v1162
      %v1171 = vmul.f32 %v1155, %v1163
      %v1172 = vmul.f32 %v1154, %v1160
      %v1173 = vmul.f32 %v1152, %v1161
      %v1174 = vmul.f32 %v1150, %v1162
      %v1175 = vmul.f32 %v1156, %v1163
      %v1176 = vpack.c.bf16 %v1169, %v1168
      %v1177 = vpack.c.bf16 %v1171, %v1170
      %v1178 = vpack.c.bf16 %v1173, %v1172
      %v1179 = vpack.c.bf16 %v1175, %v1174
      %1180 = vst [vmem:[#allocation2 + $0x200] sm:$0xff] %v1176
      %1181 = vst [vmem:[#allocation2 + $0x208] sm:$0xff] %v1177
      %1182 = vst [vmem:[#allocation2 + $0x210] sm:$0xff] %v1178
      %1183 = vst [vmem:[#allocation2 + $0x218] sm:$0xff] %v1179
      %1184 = vrot.lane.b32.xlu0 %v316, 119
      %v1185 = vpop.permute.xlu0 %1184
      %1186 = vrot.lane.b32.xlu0 %v320, 119
      %v1187 = vpop.permute.xlu0 %1186
      %1188 = vrot.lane.b32.xlu0 %v317, 119
      %v1189 = vpop.permute.xlu0 %1188
      %1190 = vrot.lane.b32.xlu0 %v321, 119
      %v1191 = vpop.permute.xlu0 %1190
      %1192 = vrot.lane.b32.xlu0 %v318, 119
      %v1193 = vpop.permute.xlu0 %1192
      %1194 = vrot.lane.b32.xlu0 %v322, 119
      %v1195 = vpop.permute.xlu0 %1194
      %1196 = vrot.lane.b32.xlu0 %v319, 119
      %v1197 = vpop.permute.xlu0 %1196
      %1198 = vrot.lane.b32.xlu0 %v323, 119
      %v1199 = vpop.permute.xlu0 %1198
      %vm1200 = vcmp.lt.s32.totalorder %v341, 119
      %v1201 = vsel %vm1200, %v1193, %v1197
      %v1202 = vsel %vm1200, %v1195, %v1199
      %v1203 = vsel %vm1200, %v1189, %v1193
      %v1204 = vsel %vm1200, %v1191, %v1195
      %v1205 = vsel %vm1200, %v1185, %v1189
      %v1206 = vsel %vm1200, %v1187, %v1191
      %v1207 = vsel %vm1200, %v1197, %v1185
      %v1208 = vsel %vm1200, %v1199, %v1187
      %s1209 = scalar_lea.vmem %s3, 65
      %v1210 = vld [vmem:[%s1209] ss:$8 sm:$0xf]
      %v1212 = vperm.slane %v1210, 0
      %v1213 = vperm.slane %v1210, 1
      %v1214 = vperm.slane %v1210, 2
      %v1215 = vperm.slane %v1210, 3
      %v1220 = vmul.f32 %v1205, %v1212
      %v1221 = vmul.f32 %v1203, %v1213
      %v1222 = vmul.f32 %v1201, %v1214
      %v1223 = vmul.f32 %v1207, %v1215
      %v1224 = vmul.f32 %v1206, %v1212
      %v1225 = vmul.f32 %v1204, %v1213
      %v1226 = vmul.f32 %v1202, %v1214
      %v1227 = vmul.f32 %v1208, %v1215
      %v1228 = vpack.c.bf16 %v1221, %v1220
      %v1229 = vpack.c.bf16 %v1223, %v1222
      %v1230 = vpack.c.bf16 %v1225, %v1224
      %v1231 = vpack.c.bf16 %v1227, %v1226
      %1232 = vst [vmem:[#allocation2 + $0x220] sm:$0xff] %v1228
      %1233 = vst [vmem:[#allocation2 + $0x228] sm:$0xff] %v1229
      %1234 = vst [vmem:[#allocation2 + $0x230] sm:$0xff] %v1230
      %1235 = vst [vmem:[#allocation2 + $0x238] sm:$0xff] %v1231
      %s1236 = scalar_lea.vmem %s3, 66
      %v1237 = vld [vmem:[%s1236] ss:$8 sm:$0xf]
      %v1239 = vperm.slane %v1237, 0
      %v1240 = vperm.slane %v1237, 1
      %v1241 = vperm.slane %v1237, 2
      %v1242 = vperm.slane %v1237, 3
      %v1247 = vmul.f32 %v347, %v1239
      %v1248 = vmul.f32 %v345, %v1240
      %v1249 = vmul.f32 %v343, %v1241
      %v1250 = vmul.f32 %v349, %v1242
      %v1251 = vmul.f32 %v348, %v1239
      %v1252 = vmul.f32 %v346, %v1240
      %v1253 = vmul.f32 %v344, %v1241
      %v1254 = vmul.f32 %v350, %v1242
      %v1255 = vpack.c.bf16 %v1248, %v1247
      %v1256 = vpack.c.bf16 %v1250, %v1249
      %v1257 = vpack.c.bf16 %v1252, %v1251
      %v1258 = vpack.c.bf16 %v1254, %v1253
      %1259 = vst [vmem:[#allocation2 + $0x240] sm:$0xff] %v1255
      %1260 = vst [vmem:[#allocation2 + $0x248] sm:$0xff] %v1256
      %1261 = vst [vmem:[#allocation2 + $0x250] sm:$0xff] %v1257
      %1262 = vst [vmem:[#allocation2 + $0x258] sm:$0xff] %v1258
      %s1263 = scalar_lea.vmem %s3, 67
      %v1264 = vld [vmem:[%s1263] ss:$8 sm:$0xf]
      %v1266 = vperm.slane %v1264, 0
      %v1267 = vperm.slane %v1264, 1
      %v1268 = vperm.slane %v1264, 2
      %v1269 = vperm.slane %v1264, 3
      %v1274 = vmul.f32 %v398, %v1266
      %v1275 = vmul.f32 %v396, %v1267
      %v1276 = vmul.f32 %v394, %v1268
      %v1277 = vmul.f32 %v400, %v1269
      %v1278 = vmul.f32 %v399, %v1266
      %v1279 = vmul.f32 %v397, %v1267
      %v1280 = vmul.f32 %v395, %v1268
      %v1281 = vmul.f32 %v401, %v1269
      %v1282 = vpack.c.bf16 %v1275, %v1274
      %v1283 = vpack.c.bf16 %v1277, %v1276
      %v1284 = vpack.c.bf16 %v1279, %v1278
      %v1285 = vpack.c.bf16 %v1281, %v1280
      %1286 = vst [vmem:[#allocation2 + $0x260] sm:$0xff] %v1282
      %1287 = vst [vmem:[#allocation2 + $0x268] sm:$0xff] %v1283
      %1288 = vst [vmem:[#allocation2 + $0x270] sm:$0xff] %v1284
      %1289 = vst [vmem:[#allocation2 + $0x278] sm:$0xff] %v1285
      %s1290 = scalar_lea.vmem %s3, 68
      %v1291 = vld [vmem:[%s1290] ss:$8 sm:$0xf]
      %v1293 = vperm.slane %v1291, 0
      %v1294 = vperm.slane %v1291, 1
      %v1295 = vperm.slane %v1291, 2
      %v1296 = vperm.slane %v1291, 3
      %v1301 = vmul.f32 %v450, %v1293
      %v1302 = vmul.f32 %v448, %v1294
      %v1303 = vmul.f32 %v446, %v1295
      %v1304 = vmul.f32 %v452, %v1296
      %v1305 = vmul.f32 %v451, %v1293
      %v1306 = vmul.f32 %v449, %v1294
      %v1307 = vmul.f32 %v447, %v1295
      %v1308 = vmul.f32 %v453, %v1296
      %v1309 = vpack.c.bf16 %v1302, %v1301
      %v1310 = vpack.c.bf16 %v1304, %v1303
      %v1311 = vpack.c.bf16 %v1306, %v1305
      %v1312 = vpack.c.bf16 %v1308, %v1307
      %1313 = vst [vmem:[#allocation2 + $0x280] sm:$0xff] %v1309
      %1314 = vst [vmem:[#allocation2 + $0x288] sm:$0xff] %v1310
      %1315 = vst [vmem:[#allocation2 + $0x290] sm:$0xff] %v1311
      %1316 = vst [vmem:[#allocation2 + $0x298] sm:$0xff] %v1312
      %s1317 = scalar_lea.vmem %s3, 69
      %v1318 = vld [vmem:[%s1317] ss:$8 sm:$0xf]
      %v1320 = vperm.slane %v1318, 0
      %v1321 = vperm.slane %v1318, 1
      %v1322 = vperm.slane %v1318, 2
      %v1323 = vperm.slane %v1318, 3
      %v1328 = vmul.f32 %v502, %v1320
      %v1329 = vmul.f32 %v500, %v1321
      %v1330 = vmul.f32 %v498, %v1322
      %v1331 = vmul.f32 %v504, %v1323
      %v1332 = vmul.f32 %v503, %v1320
      %v1333 = vmul.f32 %v501, %v1321
      %v1334 = vmul.f32 %v499, %v1322
      %v1335 = vmul.f32 %v505, %v1323
      %v1336 = vpack.c.bf16 %v1329, %v1328
      %v1337 = vpack.c.bf16 %v1331, %v1330
      %v1338 = vpack.c.bf16 %v1333, %v1332
      %v1339 = vpack.c.bf16 %v1335, %v1334
      %1340 = vst [vmem:[#allocation2 + $0x2a0] sm:$0xff] %v1336
      %1341 = vst [vmem:[#allocation2 + $0x2a8] sm:$0xff] %v1337
      %1342 = vst [vmem:[#allocation2 + $0x2b0] sm:$0xff] %v1338
      %1343 = vst [vmem:[#allocation2 + $0x2b8] sm:$0xff] %v1339
      %s1344 = scalar_lea.vmem %s3, 70
      %v1345 = vld [vmem:[%s1344] ss:$8 sm:$0xf]
      %v1347 = vperm.slane %v1345, 0
      %v1348 = vperm.slane %v1345, 1
      %v1349 = vperm.slane %v1345, 2
      %v1350 = vperm.slane %v1345, 3
      %v1355 = vmul.f32 %v554, %v1347
      %v1356 = vmul.f32 %v552, %v1348
      %v1357 = vmul.f32 %v550, %v1349
      %v1358 = vmul.f32 %v556, %v1350
      %v1359 = vmul.f32 %v555, %v1347
      %v1360 = vmul.f32 %v553, %v1348
      %v1361 = vmul.f32 %v551, %v1349
      %v1362 = vmul.f32 %v557, %v1350
      %v1363 = vpack.c.bf16 %v1356, %v1355
      %v1364 = vpack.c.bf16 %v1358, %v1357
      %v1365 = vpack.c.bf16 %v1360, %v1359
      %v1366 = vpack.c.bf16 %v1362, %v1361
      %1367 = vst [vmem:[#allocation2 + $0x2c0] sm:$0xff] %v1363
      %1368 = vst [vmem:[#allocation2 + $0x2c8] sm:$0xff] %v1364
      %1369 = vst [vmem:[#allocation2 + $0x2d0] sm:$0xff] %v1365
      %1370 = vst [vmem:[#allocation2 + $0x2d8] sm:$0xff] %v1366
      %s1371 = scalar_lea.vmem %s3, 71
      %v1372 = vld [vmem:[%s1371] ss:$8 sm:$0xf]
      %v1374 = vperm.slane %v1372, 0
      %v1375 = vperm.slane %v1372, 1
      %v1376 = vperm.slane %v1372, 2
      %v1377 = vperm.slane %v1372, 3
      %v1382 = vmul.f32 %v606, %v1374
      %v1383 = vmul.f32 %v604, %v1375
      %v1384 = vmul.f32 %v602, %v1376
      %v1385 = vmul.f32 %v608, %v1377
      %v1386 = vmul.f32 %v607, %v1374
      %v1387 = vmul.f32 %v605, %v1375
      %v1388 = vmul.f32 %v603, %v1376
      %v1389 = vmul.f32 %v609, %v1377
      %v1390 = vpack.c.bf16 %v1383, %v1382
      %v1391 = vpack.c.bf16 %v1385, %v1384
      %v1392 = vpack.c.bf16 %v1387, %v1386
      %v1393 = vpack.c.bf16 %v1389, %v1388
      %1394 = vst [vmem:[#allocation2 + $0x2e0] sm:$0xff] %v1390
      %1395 = vst [vmem:[#allocation2 + $0x2e8] sm:$0xff] %v1391
      %1396 = vst [vmem:[#allocation2 + $0x2f0] sm:$0xff] %v1392
      %1397 = vst [vmem:[#allocation2 + $0x2f8] sm:$0xff] %v1393
      %s1398 = scalar_lea.vmem %s3, 96
      %v1399 = vld [vmem:[%s1398] ss:$8 sm:$0xf]
      %v1401 = vperm.slane %v1399, 0
      %v1402 = vperm.slane %v1399, 1
      %v1403 = vperm.slane %v1399, 2
      %v1404 = vperm.slane %v1399, 3
      %v1409 = vmul.f32 %v658, %v1401
      %v1410 = vmul.f32 %v656, %v1402
      %v1411 = vmul.f32 %v654, %v1403
      %v1412 = vmul.f32 %v660, %v1404
      %v1413 = vmul.f32 %v659, %v1401
      %v1414 = vmul.f32 %v657, %v1402
      %v1415 = vmul.f32 %v655, %v1403
      %v1416 = vmul.f32 %v661, %v1404
      %v1417 = vpack.c.bf16 %v1410, %v1409
      %v1418 = vpack.c.bf16 %v1412, %v1411
      %v1419 = vpack.c.bf16 %v1414, %v1413
      %v1420 = vpack.c.bf16 %v1416, %v1415
      %1421 = vst [vmem:[#allocation2 + $0x300] sm:$0xff] %v1417
      %1422 = vst [vmem:[#allocation2 + $0x308] sm:$0xff] %v1418
      %1423 = vst [vmem:[#allocation2 + $0x310] sm:$0xff] %v1419
      %1424 = vst [vmem:[#allocation2 + $0x318] sm:$0xff] %v1420
      %s1425 = scalar_lea.vmem %s3, 97
      %v1426 = vld [vmem:[%s1425] ss:$8 sm:$0xf]
      %v1428 = vperm.slane %v1426, 0
      %v1429 = vperm.slane %v1426, 1
      %v1430 = vperm.slane %v1426, 2
      %v1431 = vperm.slane %v1426, 3
      %v1436 = vmul.f32 %v710, %v1428
      %v1437 = vmul.f32 %v708, %v1429
      %v1438 = vmul.f32 %v706, %v1430
      %v1439 = vmul.f32 %v712, %v1431
      %v1440 = vmul.f32 %v711, %v1428
      %v1441 = vmul.f32 %v709, %v1429
      %v1442 = vmul.f32 %v707, %v1430
      %v1443 = vmul.f32 %v713, %v1431
      %v1444 = vpack.c.bf16 %v1437, %v1436
      %v1445 = vpack.c.bf16 %v1439, %v1438
      %v1446 = vpack.c.bf16 %v1441, %v1440
      %v1447 = vpack.c.bf16 %v1443, %v1442
      %1448 = vst [vmem:[#allocation2 + $0x320] sm:$0xff] %v1444
      %1449 = vst [vmem:[#allocation2 + $0x328] sm:$0xff] %v1445
      %1450 = vst [vmem:[#allocation2 + $0x330] sm:$0xff] %v1446
      %1451 = vst [vmem:[#allocation2 + $0x338] sm:$0xff] %v1447
      %s1452 = scalar_lea.vmem %s3, 98
      %v1453 = vld [vmem:[%s1452] ss:$8 sm:$0xf]
      %v1455 = vperm.slane %v1453, 0
      %v1456 = vperm.slane %v1453, 1
      %v1457 = vperm.slane %v1453, 2
      %v1458 = vperm.slane %v1453, 3
      %v1463 = vmul.f32 %v762, %v1455
      %v1464 = vmul.f32 %v760, %v1456
      %v1465 = vmul.f32 %v758, %v1457
      %v1466 = vmul.f32 %v764, %v1458
      %v1467 = vmul.f32 %v763, %v1455
      %v1468 = vmul.f32 %v761, %v1456
      %v1469 = vmul.f32 %v759, %v1457
      %v1470 = vmul.f32 %v765, %v1458
      %v1471 = vpack.c.bf16 %v1464, %v1463
      %v1472 = vpack.c.bf16 %v1466, %v1465
      %v1473 = vpack.c.bf16 %v1468, %v1467
      %v1474 = vpack.c.bf16 %v1470, %v1469
      %1475 = vst [vmem:[#allocation2 + $0x340] sm:$0xff] %v1471
      %1476 = vst [vmem:[#allocation2 + $0x348] sm:$0xff] %v1472
      %1477 = vst [vmem:[#allocation2 + $0x350] sm:$0xff] %v1473
      %1478 = vst [vmem:[#allocation2 + $0x358] sm:$0xff] %v1474
      %v1479 = vld [vmem:[%s4] sm:$0xff]
      %v1480 = vld [vmem:[#allocation2] sm:$0xff]
      %v1481 = vld [vmem:[#allocation2 + $0x8] sm:$0xff]
      %v1482 = vld [vmem:[#allocation2 + $0x10] sm:$0xff]
      %v1483 = vld [vmem:[#allocation2 + $0x18] sm:$0xff]
      %v1484 = vld [vmem:[#allocation2 + $0x20] sm:$0xff]
      %v1485 = vld [vmem:[#allocation2 + $0x28] sm:$0xff]
      %v1486 = vld [vmem:[#allocation2 + $0x30] sm:$0xff]
      %v1487 = vld [vmem:[#allocation2 + $0x38] sm:$0xff]
      %v1488 = vld [vmem:[#allocation2 + $0x40] sm:$0xff]
      %v1489 = vld [vmem:[#allocation2 + $0x48] sm:$0xff]
      %v1490 = vld [vmem:[#allocation2 + $0x50] sm:$0xff]
      %v1491 = vld [vmem:[#allocation2 + $0x58] sm:$0xff]
      %v1492 = vld [vmem:[#allocation2 + $0x60] sm:$0xff]
      %v1493 = vld [vmem:[#allocation2 + $0x68] sm:$0xff]
      %v1494 = vld [vmem:[#allocation2 + $0x70] sm:$0xff]
      %v1495 = vld [vmem:[#allocation2 + $0x78] sm:$0xff]
      %v1496 = vld [vmem:[#allocation2 + $0x80] sm:$0xff]
      %v1497 = vld [vmem:[#allocation2 + $0x88] sm:$0xff]
      %v1498 = vld [vmem:[#allocation2 + $0x90] sm:$0xff]
      %v1499 = vld [vmem:[#allocation2 + $0x98] sm:$0xff]
      %v1500 = vld [vmem:[#allocation2 + $0xa0] sm:$0xff]
      %v1501 = vld [vmem:[#allocation2 + $0xa8] sm:$0xff]
      %v1502 = vld [vmem:[#allocation2 + $0xb0] sm:$0xff]
      %v1503 = vld [vmem:[#allocation2 + $0xb8] sm:$0xff]
      %v1504 = vld [vmem:[#allocation2 + $0xc0] sm:$0xff]
      %v1505 = vld [vmem:[#allocation2 + $0xc8] sm:$0xff]
      %v1506 = vld [vmem:[#allocation2 + $0xd0] sm:$0xff]
      %v1507 = vld [vmem:[#allocation2 + $0xd8] sm:$0xff]
      %v1508 = vld [vmem:[#allocation2 + $0xe0] sm:$0xff]
      %v1509 = vld [vmem:[#allocation2 + $0xe8] sm:$0xff]
      %v1510 = vld [vmem:[#allocation2 + $0xf0] sm:$0xff]
      %v1511 = vld [vmem:[#allocation2 + $0xf8] sm:$0xff]
      %v1512 = vld [vmem:[#allocation2 + $0x100] sm:$0xff]
      %v1513 = vld [vmem:[#allocation2 + $0x108] sm:$0xff]
      %v1514 = vld [vmem:[#allocation2 + $0x110] sm:$0xff]
      %v1515 = vld [vmem:[#allocation2 + $0x118] sm:$0xff]
      %v1516 = vld [vmem:[#allocation2 + $0x120] sm:$0xff]
      %v1517 = vld [vmem:[#allocation2 + $0x128] sm:$0xff]
      %v1518 = vld [vmem:[#allocation2 + $0x130] sm:$0xff]
      %v1519 = vld [vmem:[#allocation2 + $0x138] sm:$0xff]
      %v1520 = vld [vmem:[#allocation2 + $0x140] sm:$0xff]
      %v1521 = vld [vmem:[#allocation2 + $0x148] sm:$0xff]
      %v1522 = vld [vmem:[#allocation2 + $0x150] sm:$0xff]
      %v1523 = vld [vmem:[#allocation2 + $0x158] sm:$0xff]
      %v1524 = vld [vmem:[#allocation2 + $0x160] sm:$0xff]
      %v1525 = vld [vmem:[#allocation2 + $0x168] sm:$0xff]
      %v1526 = vld [vmem:[#allocation2 + $0x170] sm:$0xff]
      %v1527 = vld [vmem:[#allocation2 + $0x178] sm:$0xff]
      %v1528 = vld [vmem:[#allocation2 + $0x180] sm:$0xff]
      %v1529 = vld [vmem:[#allocation2 + $0x188] sm:$0xff]
      %v1530 = vld [vmem:[#allocation2 + $0x190] sm:$0xff]
      %v1531 = vld [vmem:[#allocation2 + $0x198] sm:$0xff]
      %v1532 = vld [vmem:[#allocation2 + $0x1a0] sm:$0xff]
      %v1533 = vld [vmem:[#allocation2 + $0x1a8] sm:$0xff]
      %v1534 = vld [vmem:[#allocation2 + $0x1b0] sm:$0xff]
      %v1535 = vld [vmem:[#allocation2 + $0x1b8] sm:$0xff]
      %v1536 = vld [vmem:[#allocation2 + $0x1c0] sm:$0xff]
      %v1537 = vld [vmem:[#allocation2 + $0x1c8] sm:$0xff]
      %v1538 = vld [vmem:[#allocation2 + $0x1d0] sm:$0xff]
      %v1539 = vld [vmem:[#allocation2 + $0x1d8] sm:$0xff]
      %v1540 = vld [vmem:[#allocation2 + $0x1e0] sm:$0xff]
      %v1541 = vld [vmem:[#allocation2 + $0x1e8] sm:$0xff]
      %v1542 = vld [vmem:[#allocation2 + $0x1f0] sm:$0xff]
      %v1543 = vld [vmem:[#allocation2 + $0x1f8] sm:$0xff]
      %v1544 = vld [vmem:[#allocation2 + $0x200] sm:$0xff]
      %v1545 = vld [vmem:[#allocation2 + $0x208] sm:$0xff]
      %v1546 = vld [vmem:[#allocation2 + $0x210] sm:$0xff]
      %v1547 = vld [vmem:[#allocation2 + $0x218] sm:$0xff]
      %v1548 = vld [vmem:[#allocation2 + $0x220] sm:$0xff]
      %v1549 = vld [vmem:[#allocation2 + $0x228] sm:$0xff]
      %v1550 = vld [vmem:[#allocation2 + $0x230] sm:$0xff]
      %v1551 = vld [vmem:[#allocation2 + $0x238] sm:$0xff]
      %v1552 = vld [vmem:[#allocation2 + $0x240] sm:$0xff]
      %v1553 = vld [vmem:[#allocation2 + $0x248] sm:$0xff]
      %v1554 = vld [vmem:[#allocation2 + $0x250] sm:$0xff]
      %v1555 = vld [vmem:[#allocation2 + $0x258] sm:$0xff]
      %v1556 = vld [vmem:[#allocation2 + $0x260] sm:$0xff]
      %v1557 = vld [vmem:[#allocation2 + $0x268] sm:$0xff]
      %v1558 = vld [vmem:[#allocation2 + $0x270] sm:$0xff]
      %v1559 = vld [vmem:[#allocation2 + $0x278] sm:$0xff]
      %v1560 = vld [vmem:[#allocation2 + $0x280] sm:$0xff]
      %v1561 = vld [vmem:[#allocation2 + $0x288] sm:$0xff]
      %v1562 = vld [vmem:[#allocation2 + $0x290] sm:$0xff]
      %v1563 = vld [vmem:[#allocation2 + $0x298] sm:$0xff]
      %v1564 = vld [vmem:[#allocation2 + $0x2a0] sm:$0xff]
      %v1565 = vld [vmem:[#allocation2 + $0x2a8] sm:$0xff]
      %v1566 = vld [vmem:[#allocation2 + $0x2b0] sm:$0xff]
      %v1567 = vld [vmem:[#allocation2 + $0x2b8] sm:$0xff]
      %v1568 = vld [vmem:[#allocation2 + $0x2c0] sm:$0xff]
      %v1569 = vld [vmem:[#allocation2 + $0x2c8] sm:$0xff]
      %v1570 = vld [vmem:[#allocation2 + $0x2d0] sm:$0xff]
      %v1571 = vld [vmem:[#allocation2 + $0x2d8] sm:$0xff]
      %v1572 = vld [vmem:[#allocation2 + $0x2e0] sm:$0xff]
      %v1573 = vld [vmem:[#allocation2 + $0x2e8] sm:$0xff]
      %v1574 = vld [vmem:[#allocation2 + $0x2f0] sm:$0xff]
      %v1575 = vld [vmem:[#allocation2 + $0x2f8] sm:$0xff]
      %v1576 = vld [vmem:[#allocation2 + $0x300] sm:$0xff]
      %v1577 = vld [vmem:[#allocation2 + $0x308] sm:$0xff]
      %v1578 = vld [vmem:[#allocation2 + $0x310] sm:$0xff]
      %v1579 = vld [vmem:[#allocation2 + $0x318] sm:$0xff]
      %v1580 = vld [vmem:[#allocation2 + $0x320] sm:$0xff]
      %v1581 = vld [vmem:[#allocation2 + $0x328] sm:$0xff]
      %v1582 = vld [vmem:[#allocation2 + $0x330] sm:$0xff]
      %v1583 = vld [vmem:[#allocation2 + $0x338] sm:$0xff]
      %v1584 = vld [vmem:[#allocation2 + $0x340] sm:$0xff]
      %v1585 = vld [vmem:[#allocation2 + $0x348] sm:$0xff]
      %v1586 = vld [vmem:[#allocation2 + $0x350] sm:$0xff]
      %v1587 = vld [vmem:[#allocation2 + $0x358] sm:$0xff]
      %1589 = vst [vmem:[#allocation1] ss:$4 sm:$0xff] %v1479
      %v1590 = vld.sshfl [vmem:[#allocation1] sm:$0xff pattern:$0x73625140]
      %v1591 = vld.sshfl [vmem:[#allocation1 + $0x8] sm:$0xff pattern:$0x73625140]
      %v1592 = vld.sshfl [vmem:[#allocation1 + $0x10] sm:$0xff pattern:$0x73625140]
      %v1593 = vld.sshfl [vmem:[#allocation1 + $0x18] sm:$0xff pattern:$0x73625140]
      %v1705 = vunpack.c.l.b16 %v1480
      %v1706 = vunpack.c.h.b16 %v1480
      %v1707 = vunpack.c.l.b16 %v1481
      %v1708 = vunpack.c.h.b16 %v1481
      %v1709 = vunpack.c.l.b16 %v1482
      %v1710 = vunpack.c.h.b16 %v1482
      %v1711 = vunpack.c.l.b16 %v1483
      %v1712 = vunpack.c.h.b16 %v1483
      %v1713 = vunpack.c.l.b16 %v1484
      %v1714 = vunpack.c.h.b16 %v1484
      %v1715 = vunpack.c.l.b16 %v1485
      %v1716 = vunpack.c.h.b16 %v1485
      %v1717 = vunpack.c.l.b16 %v1486
      %v1718 = vunpack.c.h.b16 %v1486
      %v1719 = vunpack.c.l.b16 %v1487
      %v1720 = vunpack.c.h.b16 %v1487
      %v1721 = vunpack.c.l.b16 %v1488
      %v1722 = vunpack.c.h.b16 %v1488
      %v1723 = vunpack.c.l.b16 %v1489
      %v1724 = vunpack.c.h.b16 %v1489
      %v1725 = vunpack.c.l.b16 %v1490
      %v1726 = vunpack.c.h.b16 %v1490
      %v1727 = vunpack.c.l.b16 %v1491
      %v1728 = vunpack.c.h.b16 %v1491
      %v1729 = vunpack.c.l.b16 %v1492
      %v1730 = vunpack.c.h.b16 %v1492
      %v1731 = vunpack.c.l.b16 %v1493
      %v1732 = vunpack.c.h.b16 %v1493
      %v1733 = vunpack.c.l.b16 %v1494
      %v1734 = vunpack.c.h.b16 %v1494
      %v1735 = vunpack.c.l.b16 %v1495
      %v1736 = vunpack.c.h.b16 %v1495
      %v1737 = vunpack.c.l.b16 %v1496
      %v1738 = vunpack.c.h.b16 %v1496
      %v1739 = vunpack.c.l.b16 %v1497
      %v1740 = vunpack.c.h.b16 %v1497
      %v1741 = vunpack.c.l.b16 %v1498
      %v1742 = vunpack.c.h.b16 %v1498
      %v1743 = vunpack.c.l.b16 %v1499
      %v1744 = vunpack.c.h.b16 %v1499
      %v1745 = vunpack.c.l.b16 %v1500
      %v1746 = vunpack.c.h.b16 %v1500
      %v1747 = vunpack.c.l.b16 %v1501
      %v1748 = vunpack.c.h.b16 %v1501
      %v1749 = vunpack.c.l.b16 %v1502
      %v1750 = vunpack.c.h.b16 %v1502
      %v1751 = vunpack.c.l.b16 %v1503
      %v1752 = vunpack.c.h.b16 %v1503
      %v1753 = vunpack.c.l.b16 %v1504
      %v1754 = vunpack.c.h.b16 %v1504
      %v1755 = vunpack.c.l.b16 %v1505
      %v1756 = vunpack.c.h.b16 %v1505
      %v1757 = vunpack.c.l.b16 %v1506
      %v1758 = vunpack.c.h.b16 %v1506
      %v1759 = vunpack.c.l.b16 %v1507
      %v1760 = vunpack.c.h.b16 %v1507
      %v1761 = vunpack.c.l.b16 %v1508
      %v1762 = vunpack.c.h.b16 %v1508
      %v1763 = vunpack.c.l.b16 %v1509
      %v1764 = vunpack.c.h.b16 %v1509
      %v1765 = vunpack.c.l.b16 %v1510
      %v1766 = vunpack.c.h.b16 %v1510
      %v1767 = vunpack.c.l.b16 %v1511
      %v1768 = vunpack.c.h.b16 %v1511
      %v1769 = vunpack.c.l.b16 %v1512
      %v1770 = vunpack.c.h.b16 %v1512
      %v1771 = vunpack.c.l.b16 %v1513
      %v1772 = vunpack.c.h.b16 %v1513
      %v1773 = vunpack.c.l.b16 %v1514
      %v1774 = vunpack.c.h.b16 %v1514
      %v1775 = vunpack.c.l.b16 %v1515
      %v1776 = vunpack.c.h.b16 %v1515
      %v1777 = vunpack.c.l.b16 %v1516
      %v1778 = vunpack.c.h.b16 %v1516
      %v1779 = vunpack.c.l.b16 %v1517
      %v1780 = vunpack.c.h.b16 %v1517
      %v1781 = vunpack.c.l.b16 %v1518
      %v1782 = vunpack.c.h.b16 %v1518
      %v1783 = vunpack.c.l.b16 %v1519
      %v1784 = vunpack.c.h.b16 %v1519
      %v1785 = vunpack.c.l.b16 %v1520
      %v1786 = vunpack.c.h.b16 %v1520
      %v1787 = vunpack.c.l.b16 %v1521
      %v1788 = vunpack.c.h.b16 %v1521
      %v1789 = vunpack.c.l.b16 %v1522
      %v1790 = vunpack.c.h.b16 %v1522
      %v1791 = vunpack.c.l.b16 %v1523
      %v1792 = vunpack.c.h.b16 %v1523
      %v1793 = vunpack.c.l.b16 %v1524
      %v1794 = vunpack.c.h.b16 %v1524
      %v1795 = vunpack.c.l.b16 %v1525
      %v1796 = vunpack.c.h.b16 %v1525
      %v1797 = vunpack.c.l.b16 %v1526
      %v1798 = vunpack.c.h.b16 %v1526
      %v1799 = vunpack.c.l.b16 %v1527
      %v1800 = vunpack.c.h.b16 %v1527
      %v1801 = vunpack.c.l.b16 %v1528
      %v1802 = vunpack.c.h.b16 %v1528
      %v1803 = vunpack.c.l.b16 %v1529
      %v1804 = vunpack.c.h.b16 %v1529
      %v1805 = vunpack.c.l.b16 %v1530
      %v1806 = vunpack.c.h.b16 %v1530
      %v1807 = vunpack.c.l.b16 %v1531
      %v1808 = vunpack.c.h.b16 %v1531
      %v1809 = vunpack.c.l.b16 %v1532
      %v1810 = vunpack.c.h.b16 %v1532
      %v1811 = vunpack.c.l.b16 %v1533
      %v1812 = vunpack.c.h.b16 %v1533
      %v1813 = vunpack.c.l.b16 %v1534
      %v1814 = vunpack.c.h.b16 %v1534
      %v1815 = vunpack.c.l.b16 %v1535
      %v1816 = vunpack.c.h.b16 %v1535
      %v1817 = vunpack.c.l.b16 %v1536
      %v1818 = vunpack.c.h.b16 %v1536
      %v1819 = vunpack.c.l.b16 %v1537
      %v1820 = vunpack.c.h.b16 %v1537
      %v1821 = vunpack.c.l.b16 %v1538
      %v1822 = vunpack.c.h.b16 %v1538
      %v1823 = vunpack.c.l.b16 %v1539
      %v1824 = vunpack.c.h.b16 %v1539
      %v1825 = vunpack.c.l.b16 %v1540
      %v1826 = vunpack.c.h.b16 %v1540
      %v1827 = vunpack.c.l.b16 %v1541
      %v1828 = vunpack.c.h.b16 %v1541
      %v1829 = vunpack.c.l.b16 %v1542
      %v1830 = vunpack.c.h.b16 %v1542
      %v1831 = vunpack.c.l.b16 %v1543
      %v1832 = vunpack.c.h.b16 %v1543
      %v1833 = vunpack.c.l.b16 %v1544
      %v1834 = vunpack.c.h.b16 %v1544
      %v1835 = vunpack.c.l.b16 %v1545
      %v1836 = vunpack.c.h.b16 %v1545
      %v1837 = vunpack.c.l.b16 %v1546
      %v1838 = vunpack.c.h.b16 %v1546
      %v1839 = vunpack.c.l.b16 %v1547
      %v1840 = vunpack.c.h.b16 %v1547
      %v1841 = vunpack.c.l.b16 %v1548
      %v1842 = vunpack.c.h.b16 %v1548
      %v1843 = vunpack.c.l.b16 %v1549
      %v1844 = vunpack.c.h.b16 %v1549
      %v1845 = vunpack.c.l.b16 %v1550
      %v1846 = vunpack.c.h.b16 %v1550
      %v1847 = vunpack.c.l.b16 %v1551
      %v1848 = vunpack.c.h.b16 %v1551
      %v1849 = vunpack.c.l.b16 %v1552
      %v1850 = vunpack.c.h.b16 %v1552
      %v1851 = vunpack.c.l.b16 %v1553
      %v1852 = vunpack.c.h.b16 %v1553
      %v1853 = vunpack.c.l.b16 %v1554
      %v1854 = vunpack.c.h.b16 %v1554
      %v1855 = vunpack.c.l.b16 %v1555
      %v1856 = vunpack.c.h.b16 %v1555
      %v1857 = vunpack.c.l.b16 %v1556
      %v1858 = vunpack.c.h.b16 %v1556
      %v1859 = vunpack.c.l.b16 %v1557
      %v1860 = vunpack.c.h.b16 %v1557
      %v1861 = vunpack.c.l.b16 %v1558
      %v1862 = vunpack.c.h.b16 %v1558
      %v1863 = vunpack.c.l.b16 %v1559
      %v1864 = vunpack.c.h.b16 %v1559
      %v1865 = vunpack.c.l.b16 %v1560
      %v1866 = vunpack.c.h.b16 %v1560
      %v1867 = vunpack.c.l.b16 %v1561
      %v1868 = vunpack.c.h.b16 %v1561
      %v1869 = vunpack.c.l.b16 %v1562
      %v1870 = vunpack.c.h.b16 %v1562
      %v1871 = vunpack.c.l.b16 %v1563
      %v1872 = vunpack.c.h.b16 %v1563
      %v1873 = vunpack.c.l.b16 %v1564
      %v1874 = vunpack.c.h.b16 %v1564
      %v1875 = vunpack.c.l.b16 %v1565
      %v1876 = vunpack.c.h.b16 %v1565
      %v1877 = vunpack.c.l.b16 %v1566
      %v1878 = vunpack.c.h.b16 %v1566
      %v1879 = vunpack.c.l.b16 %v1567
      %v1880 = vunpack.c.h.b16 %v1567
      %v1881 = vunpack.c.l.b16 %v1568
      %v1882 = vunpack.c.h.b16 %v1568
      %v1883 = vunpack.c.l.b16 %v1569
      %v1884 = vunpack.c.h.b16 %v1569
      %v1885 = vunpack.c.l.b16 %v1570
      %v1886 = vunpack.c.h.b16 %v1570
      %v1887 = vunpack.c.l.b16 %v1571
      %v1888 = vunpack.c.h.b16 %v1571
      %v1889 = vunpack.c.l.b16 %v1572
      %v1890 = vunpack.c.h.b16 %v1572
      %v1891 = vunpack.c.l.b16 %v1573
      %v1892 = vunpack.c.h.b16 %v1573
      %v1893 = vunpack.c.l.b16 %v1574
      %v1894 = vunpack.c.h.b16 %v1574
      %v1895 = vunpack.c.l.b16 %v1575
      %v1896 = vunpack.c.h.b16 %v1575
      %v1897 = vunpack.c.l.b16 %v1576
      %v1898 = vunpack.c.h.b16 %v1576
      %v1899 = vunpack.c.l.b16 %v1577
      %v1900 = vunpack.c.h.b16 %v1577
      %v1901 = vunpack.c.l.b16 %v1578
      %v1902 = vunpack.c.h.b16 %v1578
      %v1903 = vunpack.c.l.b16 %v1579
      %v1904 = vunpack.c.h.b16 %v1579
      %v1905 = vunpack.c.l.b16 %v1580
      %v1906 = vunpack.c.h.b16 %v1580
      %v1907 = vunpack.c.l.b16 %v1581
      %v1908 = vunpack.c.h.b16 %v1581
      %v1909 = vunpack.c.l.b16 %v1582
      %v1910 = vunpack.c.h.b16 %v1582
      %v1911 = vunpack.c.l.b16 %v1583
      %v1912 = vunpack.c.h.b16 %v1583
      %v1913 = vunpack.c.l.b16 %v1584
      %v1914 = vunpack.c.h.b16 %v1584
      %v1915 = vunpack.c.l.b16 %v1585
      %v1916 = vunpack.c.h.b16 %v1585
      %v1917 = vunpack.c.l.b16 %v1586
      %v1918 = vunpack.c.h.b16 %v1586
      %v1919 = vunpack.c.l.b16 %v1587
      %v1920 = vunpack.c.h.b16 %v1587
      %v1921 = vpack.c.b16 %v1709, %v1705
      %v1922 = vpack.c.b16 %v1710, %v1706
      %v1923 = vpack.c.b16 %v1711, %v1707
      %v1924 = vpack.c.b16 %v1712, %v1708
      %v1925 = vpack.c.b16 %v1717, %v1713
      %v1926 = vpack.c.b16 %v1718, %v1714
      %v1927 = vpack.c.b16 %v1719, %v1715
      %v1928 = vpack.c.b16 %v1720, %v1716
      %v1929 = vpack.c.b16 %v1725, %v1721
      %v1930 = vpack.c.b16 %v1726, %v1722
      %v1931 = vpack.c.b16 %v1727, %v1723
      %v1932 = vpack.c.b16 %v1728, %v1724
      %v1933 = vpack.c.b16 %v1733, %v1729
      %v1934 = vpack.c.b16 %v1734, %v1730
      %v1935 = vpack.c.b16 %v1735, %v1731
      %v1936 = vpack.c.b16 %v1736, %v1732
      %v1937 = vpack.c.b16 %v1741, %v1737
      %v1938 = vpack.c.b16 %v1742, %v1738
      %v1939 = vpack.c.b16 %v1743, %v1739
      %v1940 = vpack.c.b16 %v1744, %v1740
      %v1941 = vpack.c.b16 %v1749, %v1745
      %v1942 = vpack.c.b16 %v1750, %v1746
      %v1943 = vpack.c.b16 %v1751, %v1747
      %v1944 = vpack.c.b16 %v1752, %v1748
      %v1945 = vpack.c.b16 %v1757, %v1753
      %v1946 = vpack.c.b16 %v1758, %v1754
      %v1947 = vpack.c.b16 %v1759, %v1755
      %v1948 = vpack.c.b16 %v1760, %v1756
      %v1949 = vpack.c.b16 %v1765, %v1761
      %v1950 = vpack.c.b16 %v1766, %v1762
      %v1951 = vpack.c.b16 %v1767, %v1763
      %v1952 = vpack.c.b16 %v1768, %v1764
      %v1953 = vpack.c.b16 %v1773, %v1769
      %v1954 = vpack.c.b16 %v1774, %v1770
      %v1955 = vpack.c.b16 %v1775, %v1771
      %v1956 = vpack.c.b16 %v1776, %v1772
      %v1957 = vpack.c.b16 %v1781, %v1777
      %v1958 = vpack.c.b16 %v1782, %v1778
      %v1959 = vpack.c.b16 %v1783, %v1779
      %v1960 = vpack.c.b16 %v1784, %v1780
      %v1961 = vpack.c.b16 %v1789, %v1785
      %v1962 = vpack.c.b16 %v1790, %v1786
      %v1963 = vpack.c.b16 %v1791, %v1787
      %v1964 = vpack.c.b16 %v1792, %v1788
      %v1965 = vpack.c.b16 %v1797, %v1793
      %v1966 = vpack.c.b16 %v1798, %v1794
      %v1967 = vpack.c.b16 %v1799, %v1795
      %v1968 = vpack.c.b16 %v1800, %v1796
      %v1969 = vpack.c.b16 %v1805, %v1801
      %v1970 = vpack.c.b16 %v1806, %v1802
      %v1971 = vpack.c.b16 %v1807, %v1803
      %v1972 = vpack.c.b16 %v1808, %v1804
      %v1973 = vpack.c.b16 %v1813, %v1809
      %v1974 = vpack.c.b16 %v1814, %v1810
      %v1975 = vpack.c.b16 %v1815, %v1811
      %v1976 = vpack.c.b16 %v1816, %v1812
      %v1977 = vpack.c.b16 %v1821, %v1817
      %v1978 = vpack.c.b16 %v1822, %v1818
      %v1979 = vpack.c.b16 %v1823, %v1819
      %v1980 = vpack.c.b16 %v1824, %v1820
      %v1981 = vpack.c.b16 %v1829, %v1825
      %v1982 = vpack.c.b16 %v1830, %v1826
      %v1983 = vpack.c.b16 %v1831, %v1827
      %v1984 = vpack.c.b16 %v1832, %v1828
      %v1985 = vpack.c.b16 %v1837, %v1833
      %v1986 = vpack.c.b16 %v1838, %v1834
      %v1987 = vpack.c.b16 %v1839, %v1835
      %v1988 = vpack.c.b16 %v1840, %v1836
      %v1989 = vpack.c.b16 %v1845, %v1841
      %v1990 = vpack.c.b16 %v1846, %v1842
      %v1991 = vpack.c.b16 %v1847, %v1843
      %v1992 = vpack.c.b16 %v1848, %v1844
      %v1993 = vpack.c.b16 %v1853, %v1849
      %v1994 = vpack.c.b16 %v1854, %v1850
      %v1995 = vpack.c.b16 %v1855, %v1851
      %v1996 = vpack.c.b16 %v1856, %v1852
      %v1997 = vpack.c.b16 %v1861, %v1857
      %v1998 = vpack.c.b16 %v1862, %v1858
      %v1999 = vpack.c.b16 %v1863, %v1859
      %v2000 = vpack.c.b16 %v1864, %v1860
      %v2001 = vpack.c.b16 %v1869, %v1865
      %v2002 = vpack.c.b16 %v1870, %v1866
      %v2003 = vpack.c.b16 %v1871, %v1867
      %v2004 = vpack.c.b16 %v1872, %v1868
      %v2005 = vpack.c.b16 %v1877, %v1873
      %v2006 = vpack.c.b16 %v1878, %v1874
      %v2007 = vpack.c.b16 %v1879, %v1875
      %v2008 = vpack.c.b16 %v1880, %v1876
      %v2009 = vpack.c.b16 %v1885, %v1881
      %v2010 = vpack.c.b16 %v1886, %v1882
      %v2011 = vpack.c.b16 %v1887, %v1883
      %v2012 = vpack.c.b16 %v1888, %v1884
      %v2013 = vpack.c.b16 %v1893, %v1889
      %v2014 = vpack.c.b16 %v1894, %v1890
      %v2015 = vpack.c.b16 %v1895, %v1891
      %v2016 = vpack.c.b16 %v1896, %v1892
      %v2017 = vpack.c.b16 %v1901, %v1897
      %v2018 = vpack.c.b16 %v1902, %v1898
      %v2019 = vpack.c.b16 %v1903, %v1899
      %v2020 = vpack.c.b16 %v1904, %v1900
      %v2021 = vpack.c.b16 %v1909, %v1905
      %v2022 = vpack.c.b16 %v1910, %v1906
      %v2023 = vpack.c.b16 %v1911, %v1907
      %v2024 = vpack.c.b16 %v1912, %v1908
      %v2025 = vpack.c.b16 %v1917, %v1913
      %v2026 = vpack.c.b16 %v1918, %v1914
      %v2027 = vpack.c.b16 %v1919, %v1915
      %v2028 = vpack.c.b16 %v1920, %v1916
      %vm2137 = vcmask 392192
      %v2138 = vsel %vm2137, %v1593, 0
      %2140 = vmatpush.bf16.msra.mxu0 %v1949
      %2141 = vmatpush.bf16.msra.mxu0 %v1945
      %2142 = vmatpush.bf16.msra.mxu0 %v1941
      %2143 = vmatpush.bf16.msra.mxu0 %v1937
      %2144 = vmatpush.bf16.msra.mxu0 %v1933
      %2145 = vmatpush.bf16.msra.mxu0 %v1929
      %2146 = vmatpush.bf16.msra.mxu0 %v1925
      %2147 = vmatpush.bf16.msra.mxu0 %v1921
      %2148 = vmatmul.bf16.gmra.mxu0 %v1590
      %v2149 = vpop.f32.mrf.mxu0
      %v2150 = vadd.f32 0.0, %v2149
      %v2151 = vpop.f32.mrf.mxu0
      %2152 = vdwg.mxu0
      %2153 = vmatpush.bf16.msra.mxu0 %v1981
      %2154 = vmatpush.bf16.msra.mxu0 %v1977
      %2155 = vmatpush.bf16.msra.mxu0 %v1973
      %2156 = vmatpush.bf16.msra.mxu0 %v1969
      %2157 = vmatpush.bf16.msra.mxu0 %v1965
      %2158 = vmatpush.bf16.msra.mxu0 %v1961
      %2159 = vmatpush.bf16.msra.mxu0 %v1957
      %2160 = vmatpush.bf16.msra.mxu0 %v1953
      %2161 = vmatmul.bf16.gmra.mxu0 %v1591
      %v2162 = vpop.f32.mrf.mxu0
      %v2163 = vadd.f32 %v2150, %v2162
      %v2164 = vpop.f32.mrf.mxu0
      %2165 = vdwg.mxu0
      %2166 = vmatpush.bf16.msra.mxu0 %v2013
      %2167 = vmatpush.bf16.msra.mxu0 %v2009
      %2168 = vmatpush.bf16.msra.mxu0 %v2005
      %2169 = vmatpush.bf16.msra.mxu0 %v2001
      %2170 = vmatpush.bf16.msra.mxu0 %v1997
      %2171 = vmatpush.bf16.msra.mxu0 %v1993
      %2172 = vmatpush.bf16.msra.mxu0 %v1989
      %2173 = vmatpush.bf16.msra.mxu0 %v1985
      %2174 = vmatmul.bf16.gmra.mxu0 %v1592
      %v2175 = vpop.f32.mrf.mxu0
      %v2176 = vadd.f32 %v2163, %v2175
      %v2177 = vpop.f32.mrf.mxu0
      %2178 = vdwg.mxu0
      %2179 = vmatpush.bf16.msra.mxu0 0
      %2180 = vmatpush.bf16.msra.mxu0 0
      %2181 = vmatpush.bf16.msra.mxu0 0
      %2182 = vmatpush.bf16.msra.mxu0 0
      %2183 = vmatpush.bf16.msra.mxu0 0
      %2184 = vmatpush.bf16.msra.mxu0 %v2025
      %2185 = vmatpush.bf16.msra.mxu0 %v2021
      %2186 = vmatpush.bf16.msra.mxu0 %v2017
      %2187 = vmatmul.bf16.gmra.mxu0 %v2138
      %v2188 = vpop.f32.mrf.mxu0
      %v2189 = vadd.f32 %v2176, %v2188
      %v2190 = vpop.f32.mrf.mxu0
      %2191 = vdwg.mxu0
      %2192 = vmatpush.bf16.msra.mxu0 %v1950
      %2193 = vmatpush.bf16.msra.mxu0 %v1946
      %2194 = vmatpush.bf16.msra.mxu0 %v1942
      %2195 = vmatpush.bf16.msra.mxu0 %v1938
      %2196 = vmatpush.bf16.msra.mxu0 %v1934
      %2197 = vmatpush.bf16.msra.mxu0 %v1930
      %2198 = vmatpush.bf16.msra.mxu0 %v1926
      %2199 = vmatpush.bf16.msra.mxu0 %v1922
      %2200 = vmatmul.bf16.gmra.mxu0 %v1590
      %v2201 = vpop.f32.mrf.mxu0
      %v2202 = vadd.f32 0.0, %v2201
      %v2203 = vpop.f32.mrf.mxu0
      %2204 = vdwg.mxu0
      %2205 = vmatpush.bf16.msra.mxu0 %v1982
      %2206 = vmatpush.bf16.msra.mxu0 %v1978
      %2207 = vmatpush.bf16.msra.mxu0 %v1974
      %2208 = vmatpush.bf16.msra.mxu0 %v1970
      %2209 = vmatpush.bf16.msra.mxu0 %v1966
      %2210 = vmatpush.bf16.msra.mxu0 %v1962
      %2211 = vmatpush.bf16.msra.mxu0 %v1958
      %2212 = vmatpush.bf16.msra.mxu0 %v1954
      %2213 = vmatmul.bf16.gmra.mxu0 %v1591
      %v2214 = vpop.f32.mrf.mxu0
      %v2215 = vadd.f32 %v2202, %v2214
      %v2216 = vpop.f32.mrf.mxu0
      %2217 = vdwg.mxu0
      %2218 = vmatpush.bf16.msra.mxu0 %v2014
      %2219 = vmatpush.bf16.msra.mxu0 %v2010
      %2220 = vmatpush.bf16.msra.mxu0 %v2006
      %2221 = vmatpush.bf16.msra.mxu0 %v2002
      %2222 = vmatpush.bf16.msra.mxu0 %v1998
      %2223 = vmatpush.bf16.msra.mxu0 %v1994
      %2224 = vmatpush.bf16.msra.mxu0 %v1990
      %2225 = vmatpush.bf16.msra.mxu0 %v1986
      %2226 = vmatmul.bf16.gmra.mxu0 %v1592
      %v2227 = vpop.f32.mrf.mxu0
      %v2228 = vadd.f32 %v2215, %v2227
      %v2229 = vpop.f32.mrf.mxu0
      %2230 = vdwg.mxu0
      %2231 = vmatpush.bf16.msra.mxu0 0
      %2232 = vmatpush.bf16.msra.mxu0 0
      %2233 = vmatpush.bf16.msra.mxu0 0
      %2234 = vmatpush.bf16.msra.mxu0 0
      %2235 = vmatpush.bf16.msra.mxu0 0
      %2236 = vmatpush.bf16.msra.mxu0 %v2026
      %2237 = vmatpush.bf16.msra.mxu0 %v2022
      %2238 = vmatpush.bf16.msra.mxu0 %v2018
      %2239 = vmatmul.bf16.gmra.mxu0 %v2138
      %v2240 = vpop.f32.mrf.mxu0
      %v2241 = vadd.f32 %v2228, %v2240
      %v2242 = vpop.f32.mrf.mxu0
      %2243 = vdwg.mxu0
      %2244 = vmatpush.bf16.msra.mxu0 %v1951
      %2245 = vmatpush.bf16.msra.mxu0 %v1947
      %2246 = vmatpush.bf16.msra.mxu0 %v1943
      %2247 = vmatpush.bf16.msra.mxu0 %v1939
      %2248 = vmatpush.bf16.msra.mxu0 %v1935
      %2249 = vmatpush.bf16.msra.mxu0 %v1931
      %2250 = vmatpush.bf16.msra.mxu0 %v1927
      %2251 = vmatpush.bf16.msra.mxu0 %v1923
      %2252 = vmatmul.bf16.gmra.mxu0 %v1590
      %v2253 = vpop.f32.mrf.mxu0
      %v2254 = vadd.f32 0.0, %v2253
      %v2255 = vpop.f32.mrf.mxu0
      %2256 = vdwg.mxu0
      %2257 = vmatpush.bf16.msra.mxu0 %v1983
      %2258 = vmatpush.bf16.msra.mxu0 %v1979
      %2259 = vmatpush.bf16.msra.mxu0 %v1975
      %2260 = vmatpush.bf16.msra.mxu0 %v1971
      %2261 = vmatpush.bf16.msra.mxu0 %v1967
      %2262 = vmatpush.bf16.msra.mxu0 %v1963
      %2263 = vmatpush.bf16.msra.mxu0 %v1959
      %2264 = vmatpush.bf16.msra.mxu0 %v1955
      %2265 = vmatmul.bf16.gmra.mxu0 %v1591
      %v2266 = vpop.f32.mrf.mxu0
      %v2267 = vadd.f32 %v2254, %v2266
      %v2268 = vpop.f32.mrf.mxu0
      %2269 = vdwg.mxu0
      %2270 = vmatpush.bf16.msra.mxu0 %v2015
      %2271 = vmatpush.bf16.msra.mxu0 %v2011
      %2272 = vmatpush.bf16.msra.mxu0 %v2007
      %2273 = vmatpush.bf16.msra.mxu0 %v2003
      %2274 = vmatpush.bf16.msra.mxu0 %v1999
      %2275 = vmatpush.bf16.msra.mxu0 %v1995
      %2276 = vmatpush.bf16.msra.mxu0 %v1991
      %2277 = vmatpush.bf16.msra.mxu0 %v1987
      %2278 = vmatmul.bf16.gmra.mxu0 %v1592
      %v2279 = vpop.f32.mrf.mxu0
      %v2280 = vadd.f32 %v2267, %v2279
      %v2281 = vpop.f32.mrf.mxu0
      %2282 = vdwg.mxu0
      %2283 = vmatpush.bf16.msra.mxu0 0
      %2284 = vmatpush.bf16.msra.mxu0 0
      %2285 = vmatpush.bf16.msra.mxu0 0
      %2286 = vmatpush.bf16.msra.mxu0 0
      %2287 = vmatpush.bf16.msra.mxu0 0
      %2288 = vmatpush.bf16.msra.mxu0 %v2027
      %2289 = vmatpush.bf16.msra.mxu0 %v2023
      %2290 = vmatpush.bf16.msra.mxu0 %v2019
      %2291 = vmatmul.bf16.gmra.mxu0 %v2138
      %v2292 = vpop.f32.mrf.mxu0
      %v2293 = vadd.f32 %v2280, %v2292
      %v2294 = vpop.f32.mrf.mxu0
      %2295 = vdwg.mxu0
      %2296 = vmatpush.bf16.msra.mxu0 %v1952
      %2297 = vmatpush.bf16.msra.mxu0 %v1948
      %2298 = vmatpush.bf16.msra.mxu0 %v1944
      %2299 = vmatpush.bf16.msra.mxu0 %v1940
      %2300 = vmatpush.bf16.msra.mxu0 %v1936
      %2301 = vmatpush.bf16.msra.mxu0 %v1932
      %2302 = vmatpush.bf16.msra.mxu0 %v1928
      %2303 = vmatpush.bf16.msra.mxu0 %v1924
      %2304 = vmatmul.bf16.gmra.mxu0 %v1590
      %v2305 = vpop.f32.mrf.mxu0
      %v2306 = vadd.f32 0.0, %v2305
      %v2307 = vpop.f32.mrf.mxu0
      %2308 = vdwg.mxu0
      %2309 = vmatpush.bf16.msra.mxu0 %v1984
      %2310 = vmatpush.bf16.msra.mxu0 %v1980
      %2311 = vmatpush.bf16.msra.mxu0 %v1976
      %2312 = vmatpush.bf16.msra.mxu0 %v1972
      %2313 = vmatpush.bf16.msra.mxu0 %v1968
      %2314 = vmatpush.bf16.msra.mxu0 %v1964
      %2315 = vmatpush.bf16.msra.mxu0 %v1960
      %2316 = vmatpush.bf16.msra.mxu0 %v1956
      %2317 = vmatmul.bf16.gmra.mxu0 %v1591
      %v2318 = vpop.f32.mrf.mxu0
      %v2319 = vadd.f32 %v2306, %v2318
      %v2320 = vpop.f32.mrf.mxu0
      %2321 = vdwg.mxu0
      %2322 = vmatpush.bf16.msra.mxu0 %v2016
      %2323 = vmatpush.bf16.msra.mxu0 %v2012
      %2324 = vmatpush.bf16.msra.mxu0 %v2008
      %2325 = vmatpush.bf16.msra.mxu0 %v2004
      %2326 = vmatpush.bf16.msra.mxu0 %v2000
      %2327 = vmatpush.bf16.msra.mxu0 %v1996
      %2328 = vmatpush.bf16.msra.mxu0 %v1992
      %2329 = vmatpush.bf16.msra.mxu0 %v1988
      %2330 = vmatmul.bf16.gmra.mxu0 %v1592
      %v2331 = vpop.f32.mrf.mxu0
      %v2332 = vadd.f32 %v2319, %v2331
      %v2333 = vpop.f32.mrf.mxu0
      %2334 = vdwg.mxu0
      %2335 = vmatpush.bf16.msra.mxu0 0
      %2336 = vmatpush.bf16.msra.mxu0 0
      %2337 = vmatpush.bf16.msra.mxu0 0
      %2338 = vmatpush.bf16.msra.mxu0 0
      %2339 = vmatpush.bf16.msra.mxu0 0
      %2340 = vmatpush.bf16.msra.mxu0 %v2028
      %2341 = vmatpush.bf16.msra.mxu0 %v2024
      %2342 = vmatpush.bf16.msra.mxu0 %v2020
      %2343 = vmatmul.bf16.gmra.mxu0 %v2138
      %v2344 = vpop.f32.mrf.mxu0
      %v2345 = vadd.f32 %v2332, %v2344
      %v2346 = vpop.f32.mrf.mxu0
      %2347 = vdwg.mxu0
      %v2348 = vpack.c.bf16 %v2241, %v2189
      %v2349 = vpack.c.bf16 %v2345, %v2293
      %v2352 = vrot.slane %v2348, 2
      %v2353 = vrot.slane %v2349, 4
      %v2354 = vrot.slane %v2349, 6
      %vm2355 = vcmask 1041408
      %v2358 = vsel %vm2355, %v2348, %v2352
      %vm2359 = vcmask 1045508
      %v2362 = vsel %vm2359, %v2353, %v2354
      %vm2363 = vcmask 1043456
      %v2364 = vsel %vm2363, %v2358, %v2362
      %2366 = vst [vmem:[%s258] sm:$0xff] %v2364
      %v2367 = vsel %vm2363, %v2189, 0.0
      %v2368 = vsel %vm2363, %v2241, 0.0
      %v2369 = vadd.f32 %v2367, %v2368
      %v2370 = vsel %vm2363, %v2293, 0.0
      %v2371 = vadd.f32 %v2369, %v2370
      %v2372 = vsel %vm2363, %v2345, 0.0
      %v2373 = vadd.f32 %v2371, %v2372
      %2374 = vadd.xlane.f32.xlu0 %v2373
      %v2375 = vpop.xlane.xlu0 %2374
      %v2376 = vmul.f32 %v2189, %v2189
      %v2377 = vmul.f32 %v2241, %v2241
      %v2378 = vmul.f32 %v2293, %v2293
      %v2379 = vmul.f32 %v2345, %v2345
      %v2380 = vsel %vm2363, %v2376, 0.0
      %v2381 = vsel %vm2363, %v2377, 0.0
      %v2382 = vadd.f32 %v2380, %v2381
      %v2383 = vsel %vm2363, %v2378, 0.0
      %v2384 = vadd.f32 %v2382, %v2383
      %v2385 = vsel %vm2363, %v2379, 0.0
      %v2386 = vadd.f32 %v2384, %v2385
      %2387 = vadd.xlane.f32.xlu0 %v2386
      %v2388 = vpop.xlane.xlu0 %2387
      %vm2389 = vcmask 7168
      %v2390 = vsel %vm2389, %v2375, %v2388
      %vm2391 = vcmask 11264
      %2392 = vst.msk [vmem:[%s262] sm:$0xf] %vm2391, %v2390
      %p2393 = scmp.lt.s32.totalorder %s18, 1
      %s2394 = scalar_select %p2393, %s18, 1
      %s2395 = smul.addr %s2394, 4
      %s2396 = smul.addr %s2395, 2
      %s2397 = scalar_lea.vmem %s5, %s2396
      %p2398 = scmp.lt.s32.totalorder %s18, 1
      %s2399 = scalar_select %p2398, %s18, 1
      %s2400 = smul.addr %s2399, 4
      %s2401 = scalar_lea.vmem %s6, %s2400
      // Predicated region
      $region41: #{up_3d_forward.4} parent=39 // pred_check
        %p2402 = pneg %p146
      $region42: #{up_3d_forward.4} parent=39 // pred_check_branch
        %2404 = sbr.rel (%p2402) target = $region44
      $region43: #{up_3d_forward.4} parent=39 // pred_region
        _
      $region44: #{up_3d_forward.4} parent=39 // pred_fallthru
        _
      // Predicated region
      $region45: #{up_3d_forward.4} parent=39 // pred_check
        %p2405 = pneg %p172
      $region46: #{up_3d_forward.4} parent=39 // pred_check_branch
        %2407 = sbr.rel (%p2405) target = $region48
      $region47: #{up_3d_forward.4} parent=39 // pred_region
        _
      $region48: #{up_3d_forward.4} parent=39 // pred_fallthru
        _
    $region40: #{up_3d_forward.4} parent=5 // pred_fallthru
      _
    %p2408 = scmp.le.s32.totalorder 2, %s13
    // Predicated region
    $region49: #{up_3d_forward.4} parent=5 // pred_check
      %p2409 = pneg %p2408
    $region50: #{up_3d_forward.4} parent=5 // pred_check_branch
      %2411 = sbr.rel (%p2409) target = $region52
    $region51: #{up_3d_forward.4} parent=5 // pred_region
      %s2412 = ssub.s32 %s13, 2
      // Predicated region
      $region53: #{up_3d_forward.4} parent=51 // pred_check
        %p2413 = pneg %p152
      $region54: #{up_3d_forward.4} parent=51 // pred_check_branch
        %2415 = sbr.rel (%p2413) target = $region56
      $region55: #{up_3d_forward.4} parent=51 // pred_region
        %p2416 = scmp.lt.s32.totalorder %s19, 1
        %s2417 = scalar_select %p2416, %s19, 1
        %s2418 = smul.addr %s2417, 4
        %s2419 = smul.addr %s2418, 2
        %s2420 = scalar_lea.vmem %s5, %s2419
      $region56: #{up_3d_forward.4} parent=51 // pred_fallthru
        _
      // Predicated region
      $region57: #{up_3d_forward.4} parent=51 // pred_check
        %p2421 = pneg %p178
      $region58: #{up_3d_forward.4} parent=51 // pred_check_branch
        %2423 = sbr.rel (%p2421) target = $region60
      $region59: #{up_3d_forward.4} parent=51 // pred_region
        %p2424 = scmp.lt.s32.totalorder %s19, 1
        %s2425 = scalar_select %p2424, %s19, 1
        %s2426 = smul.addr %s2425, 4
        %s2427 = scalar_lea.vmem %s6, %s2426
      $region60: #{up_3d_forward.4} parent=51 // pred_fallthru
        _
    $region52: #{up_3d_forward.4} parent=5 // pred_fallthru
      _
  $region6: #{up_3d_forward.4} parent=0 // loop_footer
    %s17 = sadd.s32 1, %s13
  $region7: #{up_3d_forward.4} parent=0 // loop_footer_branch
    %12 = sbr.rel target = $region3
  $region8: #{up_3d_forward.4} parent=0 // loop_exit
    _

// kernel: up_3d_forward.3
$region0: #{up_3d_forward.3}
  #allocation0 [shape = 'u32[]', space=smem, size = 0x4, offset = 0x4, fixed_abs, tag = 'smem constant byte address 0x4 - core index']
  #allocation1 [shape = 'u32[72,128]{1,0:T(1,128)}', space=vmem, size = 0x9000, scoped, tag = 'internal scratch']
  #allocation2 [shape = 'bf16[432,512]{1,0:T(8,128)(2,1)}', space=vmem, size = 0x6c000, scoped, tag = 'scratch operand']
  %s0 = inlined_call_operand.vmem [shape: f32[2,64,16], index: 0, kind: input, shape index: {}]
  %s1 = inlined_call_operand.vmem [shape: f32[16,64], index: 1, kind: input, shape index: {}]
  %s2 = inlined_call_operand.vmem [shape: f32[27,512], index: 2, kind: input, shape index: {}]
  %s3 = inlined_call_operand.vmem [shape: bf16[16,432], index: 3, kind: input, shape index: {}]
  %s4 = inlined_call_operand.vmem [shape: bf16[2,16,512], index: 4, kind: output, shape index: {0}]
  %s5 = inlined_call_operand.vmem [shape: f32[2,16,2], index: 5, kind: output, shape index: {1}]
  %6 = xla_tuple %s4, %s5
  %s7 = sld [smem:[#allocation0]]
  $region57: #{up_3d_forward.3} parent=0
    _
  %s9 = ssub.s32 1, %s7
  %s10 = scalar_select 0, %s9, %s7
  loop: start=0, step=1, limit=4
  $region2: #{up_3d_forward.3} parent=0 // loop_pre_header
    _
  $region3: #{up_3d_forward.3} parent=0 // loop_header
    %s12 = sphi 0, %s16
    %p13 = scmp.ge.s32.totalorder %s12, 4
    %s22 = sphi 0, %s24
    %s25 = sphi 0, %s22
    %s26 = sphi 0, %s25
    %s42 = sphi 0, %s26
    %s46 = sphi 0, %s46
    %s48 = sphi 0, %s46
    %s49 = sphi 0, %s48
    %s63 = sphi 0, %s49
    %s67 = sphi 0, %s67
    %s69 = sphi 0, %s67
    %s70 = sphi 0, %s69
    %s84 = sphi 0, %s70
    %s88 = sphi 0, %s88
    %s90 = sphi 0, %s88
    %s91 = sphi 0, %s90
    %s105 = sphi 0, %s91
    %s111 = sphi 0, %s113
    %s114 = sphi 0, %s111
    %s115 = sphi 0, %s114
    %s131 = sphi 0, %s115
    %s137 = sphi 0, %s139
    %s140 = sphi 0, %s137
    %s141 = sphi 0, %s140
    %s157 = sphi 0, %s141
  $region4: #{up_3d_forward.3} parent=0 // loop_header_branch
    %15 = sbr.rel (%p13) target = $region8
  $region5: #{up_3d_forward.3} parent=0 // loop_body
    %s17 = ssub.s32 %s12, 1
    %s18 = ssub.s32 %s12, 2
    %s19 = sadd.s32 %s12, 1
    %s20 = ssub.s32 %s12, %s19
    %p21 = scmp.eq.s32.totalorder %s20, 0
    %s23 = sadd.s32 %s22, 1
    %s24 = scalar_select %p21, %s22, %s23
    %p27 = pneg %p21
    %p28 = scmp.eq.s32.totalorder %s12, 1
    %p29 = por %p27, %p28
    %p30 = scmp.ne.s32.totalorder %s22, %s25
    %p31 = scmp.eq.s32.totalorder %s12, 0
    %p32 = por %p30, %p31
    %p33 = scmp.ne.s32.totalorder %s22, %s25
    %p34 = scmp.eq.s32.totalorder %s17, 1
    %p35 = por %p33, %p34
    %p36 = scmp.ne.s32.totalorder %s25, %s26
    %p37 = scmp.eq.s32.totalorder %s17, 0
    %p38 = por %p36, %p37
    %p39 = scmp.ne.s32.totalorder %s25, %s26
    %p40 = scmp.eq.s32.totalorder %s18, 1
    %p41 = por %p39, %p40
    %p43 = scmp.ne.s32.totalorder %s26, %s42
    %p44 = scmp.eq.s32.totalorder %s18, 0
    %p45 = por %p43, %p44
    %s47 = sadd.s32 %s46, 1
    %p50 = scmp.eq.s32.totalorder %s12, 1
    %p51 = scmp.ne.s32.totalorder %s46, %s48
    %p52 = scmp.eq.s32.totalorder %s12, 0
    %p53 = por %p51, %p52
    %p54 = scmp.ne.s32.totalorder %s46, %s48
    %p55 = scmp.eq.s32.totalorder %s17, 1
    %p56 = por %p54, %p55
    %p57 = scmp.ne.s32.totalorder %s48, %s49
    %p58 = scmp.eq.s32.totalorder %s17, 0
    %p59 = por %p57, %p58
    %p60 = scmp.ne.s32.totalorder %s48, %s49
    %p61 = scmp.eq.s32.totalorder %s18, 1
    %p62 = por %p60, %p61
    %p64 = scmp.ne.s32.totalorder %s49, %s63
    %p65 = scmp.eq.s32.totalorder %s18, 0
    %p66 = por %p64, %p65
    %s68 = sadd.s32 %s67, 1
    %p71 = scmp.eq.s32.totalorder %s12, 1
    %p72 = scmp.ne.s32.totalorder %s67, %s69
    %p73 = scmp.eq.s32.totalorder %s12, 0
    %p74 = por %p72, %p73
    %p75 = scmp.ne.s32.totalorder %s67, %s69
    %p76 = scmp.eq.s32.totalorder %s17, 1
    %p77 = por %p75, %p76
    %p78 = scmp.ne.s32.totalorder %s69, %s70
    %p79 = scmp.eq.s32.totalorder %s17, 0
    %p80 = por %p78, %p79
    %p81 = scmp.ne.s32.totalorder %s69, %s70
    %p82 = scmp.eq.s32.totalorder %s18, 1
    %p83 = por %p81, %p82
    %p85 = scmp.ne.s32.totalorder %s70, %s84
    %p86 = scmp.eq.s32.totalorder %s18, 0
    %p87 = por %p85, %p86
    %s89 = sadd.s32 %s88, 1
    %p92 = scmp.eq.s32.totalorder %s12, 1
    %p93 = scmp.ne.s32.totalorder %s88, %s90
    %p94 = scmp.eq.s32.totalorder %s12, 0
    %p95 = por %p93, %p94
    %p96 = scmp.ne.s32.totalorder %s88, %s90
    %p97 = scmp.eq.s32.totalorder %s17, 1
    %p98 = por %p96, %p97
    %p99 = scmp.ne.s32.totalorder %s90, %s91
    %p100 = scmp.eq.s32.totalorder %s17, 0
    %p101 = por %p99, %p100
    %p102 = scmp.ne.s32.totalorder %s90, %s91
    %p103 = scmp.eq.s32.totalorder %s18, 1
    %p104 = por %p102, %p103
    %p106 = scmp.ne.s32.totalorder %s91, %s105
    %p107 = scmp.eq.s32.totalorder %s18, 0
    %p108 = por %p106, %p107
    %s109 = ssub.s32 %s12, %s19
    %p110 = scmp.eq.s32.totalorder %s109, 0
    %s112 = sadd.s32 %s111, 1
    %s113 = scalar_select %p110, %s111, %s112
    %p116 = pneg %p110
    %p117 = scmp.eq.s32.totalorder %s12, 1
    %p118 = por %p116, %p117
    %p119 = scmp.ne.s32.totalorder %s111, %s114
    %p120 = scmp.eq.s32.totalorder %s12, 0
    %p121 = por %p119, %p120
    %p122 = scmp.ne.s32.totalorder %s111, %s114
    %p123 = scmp.eq.s32.totalorder %s17, 1
    %p124 = por %p122, %p123
    %p125 = scmp.ne.s32.totalorder %s114, %s115
    %p126 = scmp.eq.s32.totalorder %s17, 0
    %p127 = por %p125, %p126
    %p128 = scmp.ne.s32.totalorder %s114, %s115
    %p129 = scmp.eq.s32.totalorder %s18, 1
    %p130 = por %p128, %p129
    %p132 = scmp.ne.s32.totalorder %s115, %s131
    %p133 = scmp.eq.s32.totalorder %s18, 0
    %p134 = por %p132, %p133
    %s135 = ssub.s32 %s12, %s19
    %p136 = scmp.eq.s32.totalorder %s135, 0
    %s138 = sadd.s32 %s137, 1
    %s139 = scalar_select %p136, %s137, %s138
    %p142 = pneg %p136
    %p143 = scmp.eq.s32.totalorder %s12, 1
    %p144 = por %p142, %p143
    %p145 = scmp.ne.s32.totalorder %s137, %s140
    %p146 = scmp.eq.s32.totalorder %s12, 0
    %p147 = por %p145, %p146
    %p148 = scmp.ne.s32.totalorder %s137, %s140
    %p149 = scmp.eq.s32.totalorder %s17, 1
    %p150 = por %p148, %p149
    %p151 = scmp.ne.s32.totalorder %s140, %s141
    %p152 = scmp.eq.s32.totalorder %s17, 0
    %p153 = por %p151, %p152
    %p154 = scmp.ne.s32.totalorder %s140, %s141
    %p155 = scmp.eq.s32.totalorder %s18, 1
    %p156 = por %p154, %p155
    %p158 = scmp.ne.s32.totalorder %s141, %s157
    %p159 = scmp.eq.s32.totalorder %s18, 0
    %p160 = por %p158, %p159
    %p161 = scmp.le.s32.totalorder 1, %s12
    %p162 = scmp.lt.s32.totalorder %s12, 3
    %p163 = pnand %p161, %p162
    %p164 = pneg %p163
    // Predicated region
    $region9: #{up_3d_forward.3} parent=5 // pred_check
      _
    $region10: #{up_3d_forward.3} parent=5 // pred_check_branch
      %166 = sbr.rel (%p163) target = $region12
    $region11: #{up_3d_forward.3} parent=5 // pred_region
      %s167 = ssub.s32 %s12, 1
      // Predicated region
      $region13: #{up_3d_forward.3} parent=11 // pred_check
        %p168 = pneg %p59
      $region14: #{up_3d_forward.3} parent=11 // pred_check_branch
        %170 = sbr.rel (%p168) target = $region16
      $region15: #{up_3d_forward.3} parent=11 // pred_region
        _
      $region16: #{up_3d_forward.3} parent=11 // pred_fallthru
        _
      // Predicated region
      $region17: #{up_3d_forward.3} parent=11 // pred_check
        %p171 = pneg %p80
      $region18: #{up_3d_forward.3} parent=11 // pred_check_branch
        %173 = sbr.rel (%p171) target = $region20
      $region19: #{up_3d_forward.3} parent=11 // pred_region
        _
      $region20: #{up_3d_forward.3} parent=11 // pred_fallthru
        _
      // Predicated region
      $region21: #{up_3d_forward.3} parent=11 // pred_check
        %p174 = pneg %p101
      $region22: #{up_3d_forward.3} parent=11 // pred_check_branch
        %176 = sbr.rel (%p174) target = $region24
      $region23: #{up_3d_forward.3} parent=11 // pred_region
        _
      $region24: #{up_3d_forward.3} parent=11 // pred_fallthru
        _
    $region12: #{up_3d_forward.3} parent=5 // pred_fallthru
      _
    %p177 = scmp.lt.s32.totalorder %s12, 2
    // Predicated region
    $region25: #{up_3d_forward.3} parent=5 // pred_check
      %p178 = pneg %p177
    $region26: #{up_3d_forward.3} parent=5 // pred_check_branch
      %180 = sbr.rel (%p178) target = $region28
    $region27: #{up_3d_forward.3} parent=5 // pred_region
      // Predicated region
      $region29: #{up_3d_forward.3} parent=27 // pred_check
        %p181 = pneg %p32
      $region30: #{up_3d_forward.3} parent=27 // pred_check_branch
        %183 = sbr.rel (%p181) target = $region32
      $region31: #{up_3d_forward.3} parent=27 // pred_region
        %p184 = scmp.lt.s32.totalorder %s12, 1
        %s185 = scalar_select %p184, %s12, 1
        %s186 = smul.addr %s185, 8
        %s187 = smul.addr %s186, 8
        %s188 = scalar_lea.vmem %s0, %s187
      $region32: #{up_3d_forward.3} parent=27 // pred_fallthru
        _
    $region28: #{up_3d_forward.3} parent=5 // pred_fallthru
      _
    %p189 = scmp.le.s32.totalorder 1, %s12
    %p190 = scmp.lt.s32.totalorder %s12, 3
    %p191 = pnand %p189, %p190
    %p192 = pneg %p191
    // Predicated region
    $region33: #{up_3d_forward.3} parent=5 // pred_check
      _
    $region34: #{up_3d_forward.3} parent=5 // pred_check_branch
      %194 = sbr.rel (%p191) target = $region36
    $region35: #{up_3d_forward.3} parent=5 // pred_region
      %s195 = ssub.s32 %s12, 1
      %p196 = scmp.lt.s32.totalorder %s17, 1
      %s197 = scalar_select %p196, %s17, 1
      %s198 = smul.addr %s197, 8
      %s199 = smul.addr %s198, 8
      %s200 = scalar_lea.vmem %s0, %s199
      %p201 = pneg %p38
      %p202 = pneg %p35
      %p203 = pneg %p59
      %p204 = pneg %p56
      %p205 = pneg %p80
      %p206 = pneg %p77
      %p207 = pneg %p101
      %p208 = pneg %p98
      %p209 = pneg %p127
      %p210 = pneg %p124
      %p211 = scmp.lt.s32.totalorder %s17, 1
      %s212 = scalar_select %p211, %s17, 1
      %s213 = smul.addr %s212, 8
      %s214 = smul.addr %s213, 4
      %s215 = scalar_lea.vmem %s4, %s214
      %p216 = pneg %p153
      %p217 = pneg %p150
      %p218 = scmp.lt.s32.totalorder %s17, 1
      %s219 = scalar_select %p218, %s17, 1
      %s220 = smul.addr %s219, 2
      %s221 = smul.addr %s220, 8
      %s222 = scalar_lea.vmem %s5, %s221
      %p223 = scmp.lt.s32.totalorder %s17, 1
      %s224 = scalar_select %p223, %s17, 1
      %s225 = smul.addr %s224, 8
      %s226 = smul.addr %s225, 8
      %s227 = scalar_lea.vmem %s0, %s226
      %p228 = scmp.lt.s32.totalorder %s17, 1
      %s229 = scalar_select %p228, %s17, 1
      %s230 = smul.addr %s229, 8
      %s231 = smul.addr %s230, 4
      %s232 = scalar_lea.vmem %s4, %s231
      %p233 = scmp.lt.s32.totalorder %s17, 1
      %s234 = scalar_select %p233, %s17, 1
      %s235 = smul.addr %s234, 2
      %s236 = smul.addr %s235, 8
      %s237 = scalar_lea.vmem %s5, %s236
      %v239 = vld [vmem:[%s227] sm:$0xff]
      %v240 = vld [vmem:[%s227 + $0x8] sm:$0xff]
      %v241 = vld [vmem:[%s227 + $0x10] sm:$0xff]
      %v242 = vld [vmem:[%s227 + $0x18] sm:$0xff]
      %v243 = vld [vmem:[%s227 + $0x20] sm:$0xff]
      %v244 = vld [vmem:[%s227 + $0x28] sm:$0xff]
      %v245 = vld [vmem:[%s227 + $0x30] sm:$0xff]
      %v246 = vld [vmem:[%s227 + $0x38] sm:$0xff]
      %v247 = vld [vmem:[%s1] sm:$0xff]
      %v248 = vld [vmem:[%s1 + $0x8] sm:$0xff]
      %vm249 = vcmask 130048
      %v251 = vsel %vm249, %v239, 0
      %v254 = vsel %vm249, %v240, 0
      %v257 = vsel %vm249, %v241, 0
      %v260 = vsel %vm249, %v242, 0
      %v263 = vsel %vm249, %v243, 0
      %v266 = vsel %vm249, %v244, 0
      %v269 = vsel %vm249, %v245, 0
      %v272 = vsel %vm249, %v246, 0
      %274 = vmatpush.msra.mxu0 0.0
      %275 = vmatpush.msra.mxu0 0.0
      %276 = vmatpush.msra.mxu0 0.0
      %277 = vmatpush.msra.mxu0 0.0
      %278 = vmatpush.msra.mxu0 0.0
      %279 = vmatpush.msra.mxu0 0.0
      %280 = vmatpush.msra.mxu0 0.0
      %281 = vmatpush.msra.mxu0 0.0
      %282 = vmatpush.msra.mxu0 0.0
      %283 = vmatpush.msra.mxu0 0.0
      %284 = vmatpush.msra.mxu0 0.0
      %285 = vmatpush.msra.mxu0 0.0
      %286 = vmatpush.msra.mxu0 0.0
      %287 = vmatpush.msra.mxu0 0.0
      %288 = vmatpush.msra.mxu0 %v248
      %289 = vmatpush.msra.mxu0 %v247
      %290 = vmatmul.f32.gmra.mxu0 %v251
      %v291 = vpop.f32.mrf.mxu0
      %v292 = vadd.f32 0.0, %v291
      %293 = vmatmul.f32.gmra.mxu0 %v254
      %v294 = vpop.f32.mrf.mxu0
      %v295 = vadd.f32 0.0, %v294
      %296 = vmatmul.f32.gmra.mxu0 %v257
      %v297 = vpop.f32.mrf.mxu0
      %v298 = vadd.f32 0.0, %v297
      %299 = vmatmul.f32.gmra.mxu0 %v260
      %v300 = vpop.f32.mrf.mxu0
      %v301 = vadd.f32 0.0, %v300
      %302 = vmatmul.f32.gmra.mxu0 %v263
      %v303 = vpop.f32.mrf.mxu0
      %v304 = vadd.f32 0.0, %v303
      %305 = vmatmul.f32.gmra.mxu0 %v266
      %v306 = vpop.f32.mrf.mxu0
      %v307 = vadd.f32 0.0, %v306
      %308 = vmatmul.f32.gmra.mxu0 %v269
      %v309 = vpop.f32.mrf.mxu0
      %v310 = vadd.f32 0.0, %v309
      %311 = vmatmul.f32.gmra.mxu0 %v272
      %v312 = vpop.f32.mrf.mxu0
      %v313 = vadd.f32 0.0, %v312
      %314 = vdwg.mxu0
      %v315 = vmul.f32 %v292, 0.5714286
      %v316 = vmul.f32 %v295, 0.5714286
      %v317 = vmul.f32 %v298, 0.42857143
      %v318 = vmul.f32 %v301, 0.42857143
      %v319 = vadd.f32 %v315, %v317
      %v320 = vadd.f32 %v316, %v318
      %v321 = vmul.f32 %v292, 0.14285715
      %v322 = vmul.f32 %v295, 0.14285715
      %v323 = vmul.f32 %v298, 0.85714287
      %v324 = vmul.f32 %v301, 0.85714287
      %v325 = vadd.f32 %v321, %v323
      %v326 = vadd.f32 %v322, %v324
      %v327 = vmul.f32 %v298, 0.71428573
      %v328 = vmul.f32 %v301, 0.71428573
      %v329 = vmul.f32 %v304, 0.2857143
      %v330 = vmul.f32 %v307, 0.2857143
      %v331 = vadd.f32 %v327, %v329
      %v332 = vadd.f32 %v328, %v330
      %v333 = vmul.f32 %v298, 0.2857143
      %v334 = vmul.f32 %v301, 0.2857143
      %v335 = vmul.f32 %v304, 0.71428573
      %v336 = vmul.f32 %v307, 0.71428573
      %v337 = vadd.f32 %v333, %v335
      %v338 = vadd.f32 %v334, %v336
      %v339 = vmul.f32 %v304, 0.85714287
      %v340 = vmul.f32 %v307, 0.85714287
      %v341 = vmul.f32 %v310, 0.14285715
      %v342 = vmul.f32 %v313, 0.14285715
      %v343 = vadd.f32 %v339, %v341
      %v344 = vadd.f32 %v340, %v342
      %v345 = vmul.f32 %v304, 0.42857143
      %v346 = vmul.f32 %v307, 0.42857143
      %v347 = vmul.f32 %v310, 0.5714286
      %v348 = vmul.f32 %v313, 0.5714286
      %v349 = vadd.f32 %v345, %v347
      %v350 = vadd.f32 %v346, %v348
      %v351 = vmul.f32 %v304, 0.0
      %v352 = vmul.f32 %v307, 0.0
      %v353 = vadd.f32 %v351, %v310
      %v354 = vadd.f32 %v352, %v313
      %357 = vrot.lane.b32.xlu0 %v319, 64
      %v358 = vpop.permute.xlu0 %357
      %359 = vrot.lane.b32.xlu0 %v320, 64
      %v360 = vpop.permute.xlu0 %359
      %365 = vrot.lane.b32.xlu0 %v331, 64
      %v366 = vpop.permute.xlu0 %365
      %367 = vrot.lane.b32.xlu0 %v332, 64
      %v368 = vpop.permute.xlu0 %367
      %373 = vrot.lane.b32.xlu0 %v343, 64
      %v374 = vpop.permute.xlu0 %373
      %375 = vrot.lane.b32.xlu0 %v344, 64
      %v376 = vpop.permute.xlu0 %375
      %381 = vrot.lane.b32.xlu0 %v353, 64
      %v382 = vpop.permute.xlu0 %381
      %383 = vrot.lane.b32.xlu0 %v354, 64
      %v384 = vpop.permute.xlu0 %383
      %vm387 = vcmask 523264
      %v388 = vsel %vm387, %v292, %v358
      %v389 = vsel %vm387, %v295, %v360
      %v390 = vsel %vm387, %v325, %v366
      %v391 = vsel %vm387, %v326, %v368
      %v392 = vsel %vm387, %v337, %v374
      %v393 = vsel %vm387, %v338, %v376
      %v394 = vsel %vm387, %v349, %v382
      %v395 = vsel %vm387, %v350, %v384
      %396 = vrot.lane.b32.xlu0 %v388, 73
      %v397 = vpop.permute.xlu0 %396
      %398 = vrot.lane.b32.xlu0 %v389, 73
      %v399 = vpop.permute.xlu0 %398
      %400 = vrot.lane.b32.xlu0 %v390, 73
      %v401 = vpop.permute.xlu0 %400
      %402 = vrot.lane.b32.xlu0 %v391, 73
      %v403 = vpop.permute.xlu0 %402
      %404 = vrot.lane.b32.xlu0 %v392, 73
      %v405 = vpop.permute.xlu0 %404
      %406 = vrot.lane.b32.xlu0 %v393, 73
      %v407 = vpop.permute.xlu0 %406
      %408 = vrot.lane.b32.xlu0 %v394, 73
      %v409 = vpop.permute.xlu0 %408
      %410 = vrot.lane.b32.xlu0 %v395, 73
      %v411 = vpop.permute.xlu0 %410
      %v412 = vlaneseq
      %v413 = vand.u32 %v412, 127
      %vm414 = vcmp.lt.s32.totalorder %v413, 73
      %v415 = vsel %vm414, %v405, %v409
      %v416 = vsel %vm414, %v407, %v411
      %v417 = vsel %vm414, %v401, %v405
      %v418 = vsel %vm414, %v403, %v407
      %v419 = vsel %vm414, %v397, %v401
      %v420 = vsel %vm414, %v399, %v403
      %v421 = vsel %vm414, %v409, %v397
      %v422 = vsel %vm414, %v411, %v399
      %v423 = vld [vmem:[%s2] ss:$8 sm:$0xf]
      %v425 = vperm.slane %v423, 0
      %v426 = vperm.slane %v423, 1
      %v427 = vperm.slane %v423, 2
      %v428 = vperm.slane %v423, 3
      %v433 = vmul.f32 %v421, %v425
      %v434 = vmul.f32 %v419, %v426
      %v435 = vmul.f32 %v417, %v427
      %v436 = vmul.f32 %v415, %v428
      %v437 = vmul.f32 %v422, %v425
      %v438 = vmul.f32 %v420, %v426
      %v439 = vmul.f32 %v418, %v427
      %v440 = vmul.f32 %v416, %v428
      %v441 = vpack.c.bf16 %v434, %v433
      %v442 = vpack.c.bf16 %v436, %v435
      %v443 = vpack.c.bf16 %v438, %v437
      %v444 = vpack.c.bf16 %v440, %v439
      %445 = vst [vmem:[#allocation2] sm:$0xff] %v441
      %446 = vst [vmem:[#allocation2 + $0x8] sm:$0xff] %v442
      %447 = vst [vmem:[#allocation2 + $0x10] sm:$0xff] %v443
      %448 = vst [vmem:[#allocation2 + $0x18] sm:$0xff] %v444
      %449 = vrot.lane.b32.xlu0 %v388, 72
      %v450 = vpop.permute.xlu0 %449
      %451 = vrot.lane.b32.xlu0 %v389, 72
      %v452 = vpop.permute.xlu0 %451
      %453 = vrot.lane.b32.xlu0 %v390, 72
      %v454 = vpop.permute.xlu0 %453
      %455 = vrot.lane.b32.xlu0 %v391, 72
      %v456 = vpop.permute.xlu0 %455
      %457 = vrot.lane.b32.xlu0 %v392, 72
      %v458 = vpop.permute.xlu0 %457
      %459 = vrot.lane.b32.xlu0 %v393, 72
      %v460 = vpop.permute.xlu0 %459
      %461 = vrot.lane.b32.xlu0 %v394, 72
      %v462 = vpop.permute.xlu0 %461
      %463 = vrot.lane.b32.xlu0 %v395, 72
      %v464 = vpop.permute.xlu0 %463
      %vm465 = vcmp.lt.s32.totalorder %v413, 72
      %v466 = vsel %vm465, %v458, %v462
      %v467 = vsel %vm465, %v460, %v464
      %v468 = vsel %vm465, %v454, %v458
      %v469 = vsel %vm465, %v456, %v460
      %v470 = vsel %vm465, %v450, %v454
      %v471 = vsel %vm465, %v452, %v456
      %v472 = vsel %vm465, %v462, %v450
      %v473 = vsel %vm465, %v464, %v452
      %s474 = scalar_lea.vmem %s2, 1
      %v475 = vld [vmem:[%s474] ss:$8 sm:$0xf]
      %v477 = vperm.slane %v475, 0
      %v478 = vperm.slane %v475, 1
      %v479 = vperm.slane %v475, 2
      %v480 = vperm.slane %v475, 3
      %v485 = vmul.f32 %v472, %v477
      %v486 = vmul.f32 %v470, %v478
      %v487 = vmul.f32 %v468, %v479
      %v488 = vmul.f32 %v466, %v480
      %v489 = vmul.f32 %v473, %v477
      %v490 = vmul.f32 %v471, %v478
      %v491 = vmul.f32 %v469, %v479
      %v492 = vmul.f32 %v467, %v480
      %v493 = vpack.c.bf16 %v486, %v485
      %v494 = vpack.c.bf16 %v488, %v487
      %v495 = vpack.c.bf16 %v490, %v489
      %v496 = vpack.c.bf16 %v492, %v491
      %497 = vst [vmem:[#allocation2 + $0x20] sm:$0xff] %v493
      %498 = vst [vmem:[#allocation2 + $0x28] sm:$0xff] %v494
      %499 = vst [vmem:[#allocation2 + $0x30] sm:$0xff] %v495
      %500 = vst [vmem:[#allocation2 + $0x38] sm:$0xff] %v496
      %501 = vrot.lane.b32.xlu0 %v388, 71
      %v502 = vpop.permute.xlu0 %501
      %503 = vrot.lane.b32.xlu0 %v389, 71
      %v504 = vpop.permute.xlu0 %503
      %505 = vrot.lane.b32.xlu0 %v390, 71
      %v506 = vpop.permute.xlu0 %505
      %507 = vrot.lane.b32.xlu0 %v391, 71
      %v508 = vpop.permute.xlu0 %507
      %509 = vrot.lane.b32.xlu0 %v392, 71
      %v510 = vpop.permute.xlu0 %509
      %511 = vrot.lane.b32.xlu0 %v393, 71
      %v512 = vpop.permute.xlu0 %511
      %513 = vrot.lane.b32.xlu0 %v394, 71
      %v514 = vpop.permute.xlu0 %513
      %515 = vrot.lane.b32.xlu0 %v395, 71
      %v516 = vpop.permute.xlu0 %515
      %vm517 = vcmp.lt.s32.totalorder %v413, 71
      %v518 = vsel %vm517, %v510, %v514
      %v519 = vsel %vm517, %v512, %v516
      %v520 = vsel %vm517, %v506, %v510
      %v521 = vsel %vm517, %v508, %v512
      %v522 = vsel %vm517, %v502, %v506
      %v523 = vsel %vm517, %v504, %v508
      %v524 = vsel %vm517, %v514, %v502
      %v525 = vsel %vm517, %v516, %v504
      %s526 = scalar_lea.vmem %s2, 2
      %v527 = vld [vmem:[%s526] ss:$8 sm:$0xf]
      %v529 = vperm.slane %v527, 0
      %v530 = vperm.slane %v527, 1
      %v531 = vperm.slane %v527, 2
      %v532 = vperm.slane %v527, 3
      %v537 = vmul.f32 %v524, %v529
      %v538 = vmul.f32 %v522, %v530
      %v539 = vmul.f32 %v520, %v531
      %v540 = vmul.f32 %v518, %v532
      %v541 = vmul.f32 %v525, %v529
      %v542 = vmul.f32 %v523, %v530
      %v543 = vmul.f32 %v521, %v531
      %v544 = vmul.f32 %v519, %v532
      %v545 = vpack.c.bf16 %v538, %v537
      %v546 = vpack.c.bf16 %v540, %v539
      %v547 = vpack.c.bf16 %v542, %v541
      %v548 = vpack.c.bf16 %v544, %v543
      %549 = vst [vmem:[#allocation2 + $0x40] sm:$0xff] %v545
      %550 = vst [vmem:[#allocation2 + $0x48] sm:$0xff] %v546
      %551 = vst [vmem:[#allocation2 + $0x50] sm:$0xff] %v547
      %552 = vst [vmem:[#allocation2 + $0x58] sm:$0xff] %v548
      %553 = vrot.lane.b32.xlu0 %v388, 65
      %v554 = vpop.permute.xlu0 %553
      %555 = vrot.lane.b32.xlu0 %v389, 65
      %v556 = vpop.permute.xlu0 %555
      %557 = vrot.lane.b32.xlu0 %v390, 65
      %v558 = vpop.permute.xlu0 %557
      %559 = vrot.lane.b32.xlu0 %v391, 65
      %v560 = vpop.permute.xlu0 %559
      %561 = vrot.lane.b32.xlu0 %v392, 65
      %v562 = vpop.permute.xlu0 %561
      %563 = vrot.lane.b32.xlu0 %v393, 65
      %v564 = vpop.permute.xlu0 %563
      %565 = vrot.lane.b32.xlu0 %v394, 65
      %v566 = vpop.permute.xlu0 %565
      %567 = vrot.lane.b32.xlu0 %v395, 65
      %v568 = vpop.permute.xlu0 %567
      %vm569 = vcmp.lt.s32.totalorder %v413, 65
      %v570 = vsel %vm569, %v562, %v566
      %v571 = vsel %vm569, %v564, %v568
      %v572 = vsel %vm569, %v558, %v562
      %v573 = vsel %vm569, %v560, %v564
      %v574 = vsel %vm569, %v554, %v558
      %v575 = vsel %vm569, %v556, %v560
      %v576 = vsel %vm569, %v566, %v554
      %v577 = vsel %vm569, %v568, %v556
      %s578 = scalar_lea.vmem %s2, 3
      %v579 = vld [vmem:[%s578] ss:$8 sm:$0xf]
      %v581 = vperm.slane %v579, 0
      %v582 = vperm.slane %v579, 1
      %v583 = vperm.slane %v579, 2
      %v584 = vperm.slane %v579, 3
      %v589 = vmul.f32 %v576, %v581
      %v590 = vmul.f32 %v574, %v582
      %v591 = vmul.f32 %v572, %v583
      %v592 = vmul.f32 %v570, %v584
      %v593 = vmul.f32 %v577, %v581
      %v594 = vmul.f32 %v575, %v582
      %v595 = vmul.f32 %v573, %v583
      %v596 = vmul.f32 %v571, %v584
      %v597 = vpack.c.bf16 %v590, %v589
      %v598 = vpack.c.bf16 %v592, %v591
      %v599 = vpack.c.bf16 %v594, %v593
      %v600 = vpack.c.bf16 %v596, %v595
      %601 = vst [vmem:[#allocation2 + $0x60] sm:$0xff] %v597
      %602 = vst [vmem:[#allocation2 + $0x68] sm:$0xff] %v598
      %603 = vst [vmem:[#allocation2 + $0x70] sm:$0xff] %v599
      %604 = vst [vmem:[#allocation2 + $0x78] sm:$0xff] %v600
      %605 = vrot.lane.b32.xlu0 %v388, 64
      %v606 = vpop.permute.xlu0 %605
      %607 = vrot.lane.b32.xlu0 %v389, 64
      %v608 = vpop.permute.xlu0 %607
      %609 = vrot.lane.b32.xlu0 %v390, 64
      %v610 = vpop.permute.xlu0 %609
      %611 = vrot.lane.b32.xlu0 %v391, 64
      %v612 = vpop.permute.xlu0 %611
      %613 = vrot.lane.b32.xlu0 %v392, 64
      %v614 = vpop.permute.xlu0 %613
      %615 = vrot.lane.b32.xlu0 %v393, 64
      %v616 = vpop.permute.xlu0 %615
      %617 = vrot.lane.b32.xlu0 %v394, 64
      %v618 = vpop.permute.xlu0 %617
      %619 = vrot.lane.b32.xlu0 %v395, 64
      %v620 = vpop.permute.xlu0 %619
      %vm621 = vcmp.lt.s32.totalorder %v413, 64
      %v622 = vsel %vm621, %v614, %v618
      %v623 = vsel %vm621, %v616, %v620
      %v624 = vsel %vm621, %v610, %v614
      %v625 = vsel %vm621, %v612, %v616
      %v626 = vsel %vm621, %v606, %v610
      %v627 = vsel %vm621, %v608, %v612
      %v628 = vsel %vm621, %v618, %v606
      %v629 = vsel %vm621, %v620, %v608
      %s630 = scalar_lea.vmem %s2, 4
      %v631 = vld [vmem:[%s630] ss:$8 sm:$0xf]
      %v633 = vperm.slane %v631, 0
      %v634 = vperm.slane %v631, 1
      %v635 = vperm.slane %v631, 2
      %v636 = vperm.slane %v631, 3
      %v641 = vmul.f32 %v628, %v633
      %v642 = vmul.f32 %v626, %v634
      %v643 = vmul.f32 %v624, %v635
      %v644 = vmul.f32 %v622, %v636
      %v645 = vmul.f32 %v629, %v633
      %v646 = vmul.f32 %v627, %v634
      %v647 = vmul.f32 %v625, %v635
      %v648 = vmul.f32 %v623, %v636
      %v649 = vpack.c.bf16 %v642, %v641
      %v650 = vpack.c.bf16 %v644, %v643
      %v651 = vpack.c.bf16 %v646, %v645
      %v652 = vpack.c.bf16 %v648, %v647
      %653 = vst [vmem:[#allocation2 + $0x80] sm:$0xff] %v649
      %654 = vst [vmem:[#allocation2 + $0x88] sm:$0xff] %v650
      %655 = vst [vmem:[#allocation2 + $0x90] sm:$0xff] %v651
      %656 = vst [vmem:[#allocation2 + $0x98] sm:$0xff] %v652
      %657 = vrot.lane.b32.xlu0 %v388, 63
      %v658 = vpop.permute.xlu0 %657
      %659 = vrot.lane.b32.xlu0 %v389, 63
      %v660 = vpop.permute.xlu0 %659
      %661 = vrot.lane.b32.xlu0 %v390, 63
      %v662 = vpop.permute.xlu0 %661
      %663 = vrot.lane.b32.xlu0 %v391, 63
      %v664 = vpop.permute.xlu0 %663
      %665 = vrot.lane.b32.xlu0 %v392, 63
      %v666 = vpop.permute.xlu0 %665
      %667 = vrot.lane.b32.xlu0 %v393, 63
      %v668 = vpop.permute.xlu0 %667
      %669 = vrot.lane.b32.xlu0 %v394, 63
      %v670 = vpop.permute.xlu0 %669
      %671 = vrot.lane.b32.xlu0 %v395, 63
      %v672 = vpop.permute.xlu0 %671
      %vm673 = vcmp.lt.s32.totalorder %v413, 63
      %v674 = vsel %vm673, %v666, %v670
      %v675 = vsel %vm673, %v668, %v672
      %v676 = vsel %vm673, %v662, %v666
      %v677 = vsel %vm673, %v664, %v668
      %v678 = vsel %vm673, %v658, %v662
      %v679 = vsel %vm673, %v660, %v664
      %v680 = vsel %vm673, %v670, %v658
      %v681 = vsel %vm673, %v672, %v660
      %s682 = scalar_lea.vmem %s2, 5
      %v683 = vld [vmem:[%s682] ss:$8 sm:$0xf]
      %v685 = vperm.slane %v683, 0
      %v686 = vperm.slane %v683, 1
      %v687 = vperm.slane %v683, 2
      %v688 = vperm.slane %v683, 3
      %v693 = vmul.f32 %v680, %v685
      %v694 = vmul.f32 %v678, %v686
      %v695 = vmul.f32 %v676, %v687
      %v696 = vmul.f32 %v674, %v688
      %v697 = vmul.f32 %v681, %v685
      %v698 = vmul.f32 %v679, %v686
      %v699 = vmul.f32 %v677, %v687
      %v700 = vmul.f32 %v675, %v688
      %v701 = vpack.c.bf16 %v694, %v693
      %v702 = vpack.c.bf16 %v696, %v695
      %v703 = vpack.c.bf16 %v698, %v697
      %v704 = vpack.c.bf16 %v700, %v699
      %705 = vst [vmem:[#allocation2 + $0xa0] sm:$0xff] %v701
      %706 = vst [vmem:[#allocation2 + $0xa8] sm:$0xff] %v702
      %707 = vst [vmem:[#allocation2 + $0xb0] sm:$0xff] %v703
      %708 = vst [vmem:[#allocation2 + $0xb8] sm:$0xff] %v704
      %709 = vrot.lane.b32.xlu0 %v388, 57
      %v710 = vpop.permute.xlu0 %709
      %711 = vrot.lane.b32.xlu0 %v389, 57
      %v712 = vpop.permute.xlu0 %711
      %713 = vrot.lane.b32.xlu0 %v390, 57
      %v714 = vpop.permute.xlu0 %713
      %715 = vrot.lane.b32.xlu0 %v391, 57
      %v716 = vpop.permute.xlu0 %715
      %717 = vrot.lane.b32.xlu0 %v392, 57
      %v718 = vpop.permute.xlu0 %717
      %719 = vrot.lane.b32.xlu0 %v393, 57
      %v720 = vpop.permute.xlu0 %719
      %721 = vrot.lane.b32.xlu0 %v394, 57
      %v722 = vpop.permute.xlu0 %721
      %723 = vrot.lane.b32.xlu0 %v395, 57
      %v724 = vpop.permute.xlu0 %723
      %vm725 = vcmp.lt.s32.totalorder %v413, 57
      %v726 = vsel %vm725, %v718, %v722
      %v727 = vsel %vm725, %v720, %v724
      %v728 = vsel %vm725, %v714, %v718
      %v729 = vsel %vm725, %v716, %v720
      %v730 = vsel %vm725, %v710, %v714
      %v731 = vsel %vm725, %v712, %v716
      %v732 = vsel %vm725, %v722, %v710
      %v733 = vsel %vm725, %v724, %v712
      %s734 = scalar_lea.vmem %s2, 6
      %v735 = vld [vmem:[%s734] ss:$8 sm:$0xf]
      %v737 = vperm.slane %v735, 0
      %v738 = vperm.slane %v735, 1
      %v739 = vperm.slane %v735, 2
      %v740 = vperm.slane %v735, 3
      %v745 = vmul.f32 %v732, %v737
      %v746 = vmul.f32 %v730, %v738
      %v747 = vmul.f32 %v728, %v739
      %v748 = vmul.f32 %v726, %v740
      %v749 = vmul.f32 %v733, %v737
      %v750 = vmul.f32 %v731, %v738
      %v751 = vmul.f32 %v729, %v739
      %v752 = vmul.f32 %v727, %v740
      %v753 = vpack.c.bf16 %v746, %v745
      %v754 = vpack.c.bf16 %v748, %v747
      %v755 = vpack.c.bf16 %v750, %v749
      %v756 = vpack.c.bf16 %v752, %v751
      %757 = vst [vmem:[#allocation2 + $0xc0] sm:$0xff] %v753
      %758 = vst [vmem:[#allocation2 + $0xc8] sm:$0xff] %v754
      %759 = vst [vmem:[#allocation2 + $0xd0] sm:$0xff] %v755
      %760 = vst [vmem:[#allocation2 + $0xd8] sm:$0xff] %v756
      %761 = vrot.lane.b32.xlu0 %v388, 56
      %v762 = vpop.permute.xlu0 %761
      %763 = vrot.lane.b32.xlu0 %v389, 56
      %v764 = vpop.permute.xlu0 %763
      %765 = vrot.lane.b32.xlu0 %v390, 56
      %v766 = vpop.permute.xlu0 %765
      %767 = vrot.lane.b32.xlu0 %v391, 56
      %v768 = vpop.permute.xlu0 %767
      %769 = vrot.lane.b32.xlu0 %v392, 56
      %v770 = vpop.permute.xlu0 %769
      %771 = vrot.lane.b32.xlu0 %v393, 56
      %v772 = vpop.permute.xlu0 %771
      %773 = vrot.lane.b32.xlu0 %v394, 56
      %v774 = vpop.permute.xlu0 %773
      %775 = vrot.lane.b32.xlu0 %v395, 56
      %v776 = vpop.permute.xlu0 %775
      %vm777 = vcmp.lt.s32.totalorder %v413, 56
      %v778 = vsel %vm777, %v770, %v774
      %v779 = vsel %vm777, %v772, %v776
      %v780 = vsel %vm777, %v766, %v770
      %v781 = vsel %vm777, %v768, %v772
      %v782 = vsel %vm777, %v762, %v766
      %v783 = vsel %vm777, %v764, %v768
      %v784 = vsel %vm777, %v774, %v762
      %v785 = vsel %vm777, %v776, %v764
      %s786 = scalar_lea.vmem %s2, 7
      %v787 = vld [vmem:[%s786] ss:$8 sm:$0xf]
      %v789 = vperm.slane %v787, 0
      %v790 = vperm.slane %v787, 1
      %v791 = vperm.slane %v787, 2
      %v792 = vperm.slane %v787, 3
      %v797 = vmul.f32 %v784, %v789
      %v798 = vmul.f32 %v782, %v790
      %v799 = vmul.f32 %v780, %v791
      %v800 = vmul.f32 %v778, %v792
      %v801 = vmul.f32 %v785, %v789
      %v802 = vmul.f32 %v783, %v790
      %v803 = vmul.f32 %v781, %v791
      %v804 = vmul.f32 %v779, %v792
      %v805 = vpack.c.bf16 %v798, %v797
      %v806 = vpack.c.bf16 %v800, %v799
      %v807 = vpack.c.bf16 %v802, %v801
      %v808 = vpack.c.bf16 %v804, %v803
      %809 = vst [vmem:[#allocation2 + $0xe0] sm:$0xff] %v805
      %810 = vst [vmem:[#allocation2 + $0xe8] sm:$0xff] %v806
      %811 = vst [vmem:[#allocation2 + $0xf0] sm:$0xff] %v807
      %812 = vst [vmem:[#allocation2 + $0xf8] sm:$0xff] %v808
      %813 = vrot.lane.b32.xlu0 %v388, 55
      %v814 = vpop.permute.xlu0 %813
      %815 = vrot.lane.b32.xlu0 %v389, 55
      %v816 = vpop.permute.xlu0 %815
      %817 = vrot.lane.b32.xlu0 %v390, 55
      %v818 = vpop.permute.xlu0 %817
      %819 = vrot.lane.b32.xlu0 %v391, 55
      %v820 = vpop.permute.xlu0 %819
      %821 = vrot.lane.b32.xlu0 %v392, 55
      %v822 = vpop.permute.xlu0 %821
      %823 = vrot.lane.b32.xlu0 %v393, 55
      %v824 = vpop.permute.xlu0 %823
      %825 = vrot.lane.b32.xlu0 %v394, 55
      %v826 = vpop.permute.xlu0 %825
      %827 = vrot.lane.b32.xlu0 %v395, 55
      %v828 = vpop.permute.xlu0 %827
      %vm829 = vcmp.lt.s32.totalorder %v413, 55
      %v830 = vsel %vm829, %v822, %v826
      %v831 = vsel %vm829, %v824, %v828
      %v832 = vsel %vm829, %v818, %v822
      %v833 = vsel %vm829, %v820, %v824
      %v834 = vsel %vm829, %v814, %v818
      %v835 = vsel %vm829, %v816, %v820
      %v836 = vsel %vm829, %v826, %v814
      %v837 = vsel %vm829, %v828, %v816
      %s838 = scalar_lea.vmem %s2, 32
      %v839 = vld [vmem:[%s838] ss:$8 sm:$0xf]
      %v841 = vperm.slane %v839, 0
      %v842 = vperm.slane %v839, 1
      %v843 = vperm.slane %v839, 2
      %v844 = vperm.slane %v839, 3
      %v849 = vmul.f32 %v836, %v841
      %v850 = vmul.f32 %v834, %v842
      %v851 = vmul.f32 %v832, %v843
      %v852 = vmul.f32 %v830, %v844
      %v853 = vmul.f32 %v837, %v841
      %v854 = vmul.f32 %v835, %v842
      %v855 = vmul.f32 %v833, %v843
      %v856 = vmul.f32 %v831, %v844
      %v857 = vpack.c.bf16 %v850, %v849
      %v858 = vpack.c.bf16 %v852, %v851
      %v859 = vpack.c.bf16 %v854, %v853
      %v860 = vpack.c.bf16 %v856, %v855
      %861 = vst [vmem:[#allocation2 + $0x100] sm:$0xff] %v857
      %862 = vst [vmem:[#allocation2 + $0x108] sm:$0xff] %v858
      %863 = vst [vmem:[#allocation2 + $0x110] sm:$0xff] %v859
      %864 = vst [vmem:[#allocation2 + $0x118] sm:$0xff] %v860
      %865 = vrot.lane.b32.xlu0 %v388, 9
      %v866 = vpop.permute.xlu0 %865
      %867 = vrot.lane.b32.xlu0 %v389, 9
      %v868 = vpop.permute.xlu0 %867
      %869 = vrot.lane.b32.xlu0 %v390, 9
      %v870 = vpop.permute.xlu0 %869
      %871 = vrot.lane.b32.xlu0 %v391, 9
      %v872 = vpop.permute.xlu0 %871
      %873 = vrot.lane.b32.xlu0 %v392, 9
      %v874 = vpop.permute.xlu0 %873
      %875 = vrot.lane.b32.xlu0 %v393, 9
      %v876 = vpop.permute.xlu0 %875
      %877 = vrot.lane.b32.xlu0 %v394, 9
      %v878 = vpop.permute.xlu0 %877
      %879 = vrot.lane.b32.xlu0 %v395, 9
      %v880 = vpop.permute.xlu0 %879
      %vm881 = vcmp.lt.s32.totalorder %v413, 9
      %v882 = vsel %vm881, %v874, %v878
      %v883 = vsel %vm881, %v876, %v880
      %v884 = vsel %vm881, %v870, %v874
      %v885 = vsel %vm881, %v872, %v876
      %v886 = vsel %vm881, %v866, %v870
      %v887 = vsel %vm881, %v868, %v872
      %v888 = vsel %vm881, %v878, %v866
      %v889 = vsel %vm881, %v880, %v868
      %s890 = scalar_lea.vmem %s2, 33
      %v891 = vld [vmem:[%s890] ss:$8 sm:$0xf]
      %v893 = vperm.slane %v891, 0
      %v894 = vperm.slane %v891, 1
      %v895 = vperm.slane %v891, 2
      %v896 = vperm.slane %v891, 3
      %v901 = vmul.f32 %v888, %v893
      %v902 = vmul.f32 %v886, %v894
      %v903 = vmul.f32 %v884, %v895
      %v904 = vmul.f32 %v882, %v896
      %v905 = vmul.f32 %v889, %v893
      %v906 = vmul.f32 %v887, %v894
      %v907 = vmul.f32 %v885, %v895
      %v908 = vmul.f32 %v883, %v896
      %v909 = vpack.c.bf16 %v902, %v901
      %v910 = vpack.c.bf16 %v904, %v903
      %v911 = vpack.c.bf16 %v906, %v905
      %v912 = vpack.c.bf16 %v908, %v907
      %913 = vst [vmem:[#allocation2 + $0x120] sm:$0xff] %v909
      %914 = vst [vmem:[#allocation2 + $0x128] sm:$0xff] %v910
      %915 = vst [vmem:[#allocation2 + $0x130] sm:$0xff] %v911
      %916 = vst [vmem:[#allocation2 + $0x138] sm:$0xff] %v912
      %917 = vrot.lane.b32.xlu0 %v388, 8
      %v918 = vpop.permute.xlu0 %917
      %919 = vrot.lane.b32.xlu0 %v389, 8
      %v920 = vpop.permute.xlu0 %919
      %921 = vrot.lane.b32.xlu0 %v390, 8
      %v922 = vpop.permute.xlu0 %921
      %923 = vrot.lane.b32.xlu0 %v391, 8
      %v924 = vpop.permute.xlu0 %923
      %925 = vrot.lane.b32.xlu0 %v392, 8
      %v926 = vpop.permute.xlu0 %925
      %927 = vrot.lane.b32.xlu0 %v393, 8
      %v928 = vpop.permute.xlu0 %927
      %929 = vrot.lane.b32.xlu0 %v394, 8
      %v930 = vpop.permute.xlu0 %929
      %931 = vrot.lane.b32.xlu0 %v395, 8
      %v932 = vpop.permute.xlu0 %931
      %vm933 = vcmp.lt.s32.totalorder %v413, 8
      %v934 = vsel %vm933, %v926, %v930
      %v935 = vsel %vm933, %v928, %v932
      %v936 = vsel %vm933, %v922, %v926
      %v937 = vsel %vm933, %v924, %v928
      %v938 = vsel %vm933, %v918, %v922
      %v939 = vsel %vm933, %v920, %v924
      %v940 = vsel %vm933, %v930, %v918
      %v941 = vsel %vm933, %v932, %v920
      %s942 = scalar_lea.vmem %s2, 34
      %v943 = vld [vmem:[%s942] ss:$8 sm:$0xf]
      %v945 = vperm.slane %v943, 0
      %v946 = vperm.slane %v943, 1
      %v947 = vperm.slane %v943, 2
      %v948 = vperm.slane %v943, 3
      %v953 = vmul.f32 %v940, %v945
      %v954 = vmul.f32 %v938, %v946
      %v955 = vmul.f32 %v936, %v947
      %v956 = vmul.f32 %v934, %v948
      %v957 = vmul.f32 %v941, %v945
      %v958 = vmul.f32 %v939, %v946
      %v959 = vmul.f32 %v937, %v947
      %v960 = vmul.f32 %v935, %v948
      %v961 = vpack.c.bf16 %v954, %v953
      %v962 = vpack.c.bf16 %v956, %v955
      %v963 = vpack.c.bf16 %v958, %v957
      %v964 = vpack.c.bf16 %v960, %v959
      %965 = vst [vmem:[#allocation2 + $0x140] sm:$0xff] %v961
      %966 = vst [vmem:[#allocation2 + $0x148] sm:$0xff] %v962
      %967 = vst [vmem:[#allocation2 + $0x150] sm:$0xff] %v963
      %968 = vst [vmem:[#allocation2 + $0x158] sm:$0xff] %v964
      %969 = vrot.lane.b32.xlu0 %v388, 7
      %v970 = vpop.permute.xlu0 %969
      %971 = vrot.lane.b32.xlu0 %v389, 7
      %v972 = vpop.permute.xlu0 %971
      %973 = vrot.lane.b32.xlu0 %v390, 7
      %v974 = vpop.permute.xlu0 %973
      %975 = vrot.lane.b32.xlu0 %v391, 7
      %v976 = vpop.permute.xlu0 %975
      %977 = vrot.lane.b32.xlu0 %v392, 7
      %v978 = vpop.permute.xlu0 %977
      %979 = vrot.lane.b32.xlu0 %v393, 7
      %v980 = vpop.permute.xlu0 %979
      %981 = vrot.lane.b32.xlu0 %v394, 7
      %v982 = vpop.permute.xlu0 %981
      %983 = vrot.lane.b32.xlu0 %v395, 7
      %v984 = vpop.permute.xlu0 %983
      %vm985 = vcmp.lt.s32.totalorder %v413, 7
      %v986 = vsel %vm985, %v978, %v982
      %v987 = vsel %vm985, %v980, %v984
      %v988 = vsel %vm985, %v974, %v978
      %v989 = vsel %vm985, %v976, %v980
      %v990 = vsel %vm985, %v970, %v974
      %v991 = vsel %vm985, %v972, %v976
      %v992 = vsel %vm985, %v982, %v970
      %v993 = vsel %vm985, %v984, %v972
      %s994 = scalar_lea.vmem %s2, 35
      %v995 = vld [vmem:[%s994] ss:$8 sm:$0xf]
      %v997 = vperm.slane %v995, 0
      %v998 = vperm.slane %v995, 1
      %v999 = vperm.slane %v995, 2
      %v1000 = vperm.slane %v995, 3
      %v1005 = vmul.f32 %v992, %v997
      %v1006 = vmul.f32 %v990, %v998
      %v1007 = vmul.f32 %v988, %v999
      %v1008 = vmul.f32 %v986, %v1000
      %v1009 = vmul.f32 %v993, %v997
      %v1010 = vmul.f32 %v991, %v998
      %v1011 = vmul.f32 %v989, %v999
      %v1012 = vmul.f32 %v987, %v1000
      %v1013 = vpack.c.bf16 %v1006, %v1005
      %v1014 = vpack.c.bf16 %v1008, %v1007
      %v1015 = vpack.c.bf16 %v1010, %v1009
      %v1016 = vpack.c.bf16 %v1012, %v1011
      %1017 = vst [vmem:[#allocation2 + $0x160] sm:$0xff] %v1013
      %1018 = vst [vmem:[#allocation2 + $0x168] sm:$0xff] %v1014
      %1019 = vst [vmem:[#allocation2 + $0x170] sm:$0xff] %v1015
      %1020 = vst [vmem:[#allocation2 + $0x178] sm:$0xff] %v1016
      %1021 = vrot.lane.b32.xlu0 %v388, 1
      %v1022 = vpop.permute.xlu0 %1021
      %1023 = vrot.lane.b32.xlu0 %v389, 1
      %v1024 = vpop.permute.xlu0 %1023
      %1025 = vrot.lane.b32.xlu0 %v390, 1
      %v1026 = vpop.permute.xlu0 %1025
      %1027 = vrot.lane.b32.xlu0 %v391, 1
      %v1028 = vpop.permute.xlu0 %1027
      %1029 = vrot.lane.b32.xlu0 %v392, 1
      %v1030 = vpop.permute.xlu0 %1029
      %1031 = vrot.lane.b32.xlu0 %v393, 1
      %v1032 = vpop.permute.xlu0 %1031
      %1033 = vrot.lane.b32.xlu0 %v394, 1
      %v1034 = vpop.permute.xlu0 %1033
      %1035 = vrot.lane.b32.xlu0 %v395, 1
      %v1036 = vpop.permute.xlu0 %1035
      %vm1037 = vcmp.lt.s32.totalorder %v413, 1
      %v1038 = vsel %vm1037, %v1030, %v1034
      %v1039 = vsel %vm1037, %v1032, %v1036
      %v1040 = vsel %vm1037, %v1026, %v1030
      %v1041 = vsel %vm1037, %v1028, %v1032
      %v1042 = vsel %vm1037, %v1022, %v1026
      %v1043 = vsel %vm1037, %v1024, %v1028
      %v1044 = vsel %vm1037, %v1034, %v1022
      %v1045 = vsel %vm1037, %v1036, %v1024
      %s1046 = scalar_lea.vmem %s2, 36
      %v1047 = vld [vmem:[%s1046] ss:$8 sm:$0xf]
      %v1049 = vperm.slane %v1047, 0
      %v1050 = vperm.slane %v1047, 1
      %v1051 = vperm.slane %v1047, 2
      %v1052 = vperm.slane %v1047, 3
      %v1057 = vmul.f32 %v1044, %v1049
      %v1058 = vmul.f32 %v1042, %v1050
      %v1059 = vmul.f32 %v1040, %v1051
      %v1060 = vmul.f32 %v1038, %v1052
      %v1061 = vmul.f32 %v1045, %v1049
      %v1062 = vmul.f32 %v1043, %v1050
      %v1063 = vmul.f32 %v1041, %v1051
      %v1064 = vmul.f32 %v1039, %v1052
      %v1065 = vpack.c.bf16 %v1058, %v1057
      %v1066 = vpack.c.bf16 %v1060, %v1059
      %v1067 = vpack.c.bf16 %v1062, %v1061
      %v1068 = vpack.c.bf16 %v1064, %v1063
      %1069 = vst [vmem:[#allocation2 + $0x180] sm:$0xff] %v1065
      %1070 = vst [vmem:[#allocation2 + $0x188] sm:$0xff] %v1066
      %1071 = vst [vmem:[#allocation2 + $0x190] sm:$0xff] %v1067
      %1072 = vst [vmem:[#allocation2 + $0x198] sm:$0xff] %v1068
      %s1073 = scalar_lea.vmem %s2, 37
      %v1074 = vld [vmem:[%s1073] ss:$8 sm:$0xf]
      %v1076 = vperm.slane %v1074, 0
      %v1077 = vperm.slane %v1074, 1
      %v1078 = vperm.slane %v1074, 2
      %v1079 = vperm.slane %v1074, 3
      %v1084 = vmul.f32 %v388, %v1076
      %v1085 = vmul.f32 %v390, %v1077
      %v1086 = vmul.f32 %v392, %v1078
      %v1087 = vmul.f32 %v394, %v1079
      %v1088 = vmul.f32 %v389, %v1076
      %v1089 = vmul.f32 %v391, %v1077
      %v1090 = vmul.f32 %v393, %v1078
      %v1091 = vmul.f32 %v395, %v1079
      %v1092 = vpack.c.bf16 %v1085, %v1084
      %v1093 = vpack.c.bf16 %v1087, %v1086
      %v1094 = vpack.c.bf16 %v1089, %v1088
      %v1095 = vpack.c.bf16 %v1091, %v1090
      %1096 = vst [vmem:[#allocation2 + $0x1a0] sm:$0xff] %v1092
      %1097 = vst [vmem:[#allocation2 + $0x1a8] sm:$0xff] %v1093
      %1098 = vst [vmem:[#allocation2 + $0x1b0] sm:$0xff] %v1094
      %1099 = vst [vmem:[#allocation2 + $0x1b8] sm:$0xff] %v1095
      %1100 = vrot.lane.b32.xlu0 %v388, 127
      %v1101 = vpop.permute.xlu0 %1100
      %1102 = vrot.lane.b32.xlu0 %v389, 127
      %v1103 = vpop.permute.xlu0 %1102
      %1104 = vrot.lane.b32.xlu0 %v390, 127
      %v1105 = vpop.permute.xlu0 %1104
      %1106 = vrot.lane.b32.xlu0 %v391, 127
      %v1107 = vpop.permute.xlu0 %1106
      %1108 = vrot.lane.b32.xlu0 %v392, 127
      %v1109 = vpop.permute.xlu0 %1108
      %1110 = vrot.lane.b32.xlu0 %v393, 127
      %v1111 = vpop.permute.xlu0 %1110
      %1112 = vrot.lane.b32.xlu0 %v394, 127
      %v1113 = vpop.permute.xlu0 %1112
      %1114 = vrot.lane.b32.xlu0 %v395, 127
      %v1115 = vpop.permute.xlu0 %1114
      %vm1116 = vcmp.lt.s32.totalorder %v413, 127
      %v1117 = vsel %vm1116, %v1109, %v1113
      %v1118 = vsel %vm1116, %v1111, %v1115
      %v1119 = vsel %vm1116, %v1105, %v1109
      %v1120 = vsel %vm1116, %v1107, %v1111
      %v1121 = vsel %vm1116, %v1101, %v1105
      %v1122 = vsel %vm1116, %v1103, %v1107
      %v1123 = vsel %vm1116, %v1113, %v1101
      %v1124 = vsel %vm1116, %v1115, %v1103
      %s1125 = scalar_lea.vmem %s2, 38
      %v1126 = vld [vmem:[%s1125] ss:$8 sm:$0xf]
      %v1128 = vperm.slane %v1126, 0
      %v1129 = vperm.slane %v1126, 1
      %v1130 = vperm.slane %v1126, 2
      %v1131 = vperm.slane %v1126, 3
      %v1136 = vmul.f32 %v1121, %v1128
      %v1137 = vmul.f32 %v1119, %v1129
      %v1138 = vmul.f32 %v1117, %v1130
      %v1139 = vmul.f32 %v1123, %v1131
      %v1140 = vmul.f32 %v1122, %v1128
      %v1141 = vmul.f32 %v1120, %v1129
      %v1142 = vmul.f32 %v1118, %v1130
      %v1143 = vmul.f32 %v1124, %v1131
      %v1144 = vpack.c.bf16 %v1137, %v1136
      %v1145 = vpack.c.bf16 %v1139, %v1138
      %v1146 = vpack.c.bf16 %v1141, %v1140
      %v1147 = vpack.c.bf16 %v1143, %v1142
      %1148 = vst [vmem:[#allocation2 + $0x1c0] sm:$0xff] %v1144
      %1149 = vst [vmem:[#allocation2 + $0x1c8] sm:$0xff] %v1145
      %1150 = vst [vmem:[#allocation2 + $0x1d0] sm:$0xff] %v1146
      %1151 = vst [vmem:[#allocation2 + $0x1d8] sm:$0xff] %v1147
      %1152 = vrot.lane.b32.xlu0 %v388, 121
      %v1153 = vpop.permute.xlu0 %1152
      %1154 = vrot.lane.b32.xlu0 %v389, 121
      %v1155 = vpop.permute.xlu0 %1154
      %1156 = vrot.lane.b32.xlu0 %v390, 121
      %v1157 = vpop.permute.xlu0 %1156
      %1158 = vrot.lane.b32.xlu0 %v391, 121
      %v1159 = vpop.permute.xlu0 %1158
      %1160 = vrot.lane.b32.xlu0 %v392, 121
      %v1161 = vpop.permute.xlu0 %1160
      %1162 = vrot.lane.b32.xlu0 %v393, 121
      %v1163 = vpop.permute.xlu0 %1162
      %1164 = vrot.lane.b32.xlu0 %v394, 121
      %v1165 = vpop.permute.xlu0 %1164
      %1166 = vrot.lane.b32.xlu0 %v395, 121
      %v1167 = vpop.permute.xlu0 %1166
      %vm1168 = vcmp.lt.s32.totalorder %v413, 121
      %v1169 = vsel %vm1168, %v1161, %v1165
      %v1170 = vsel %vm1168, %v1163, %v1167
      %v1171 = vsel %vm1168, %v1157, %v1161
      %v1172 = vsel %vm1168, %v1159, %v1163
      %v1173 = vsel %vm1168, %v1153, %v1157
      %v1174 = vsel %vm1168, %v1155, %v1159
      %v1175 = vsel %vm1168, %v1165, %v1153
      %v1176 = vsel %vm1168, %v1167, %v1155
      %s1177 = scalar_lea.vmem %s2, 39
      %v1178 = vld [vmem:[%s1177] ss:$8 sm:$0xf]
      %v1180 = vperm.slane %v1178, 0
      %v1181 = vperm.slane %v1178, 1
      %v1182 = vperm.slane %v1178, 2
      %v1183 = vperm.slane %v1178, 3
      %v1188 = vmul.f32 %v1173, %v1180
      %v1189 = vmul.f32 %v1171, %v1181
      %v1190 = vmul.f32 %v1169, %v1182
      %v1191 = vmul.f32 %v1175, %v1183
      %v1192 = vmul.f32 %v1174, %v1180
      %v1193 = vmul.f32 %v1172, %v1181
      %v1194 = vmul.f32 %v1170, %v1182
      %v1195 = vmul.f32 %v1176, %v1183
      %v1196 = vpack.c.bf16 %v1189, %v1188
      %v1197 = vpack.c.bf16 %v1191, %v1190
      %v1198 = vpack.c.bf16 %v1193, %v1192
      %v1199 = vpack.c.bf16 %v1195, %v1194
      %1200 = vst [vmem:[#allocation2 + $0x1e0] sm:$0xff] %v1196
      %1201 = vst [vmem:[#allocation2 + $0x1e8] sm:$0xff] %v1197
      %1202 = vst [vmem:[#allocation2 + $0x1f0] sm:$0xff] %v1198
      %1203 = vst [vmem:[#allocation2 + $0x1f8] sm:$0xff] %v1199
      %1204 = vrot.lane.b32.xlu0 %v388, 120
      %v1205 = vpop.permute.xlu0 %1204
      %1206 = vrot.lane.b32.xlu0 %v389, 120
      %v1207 = vpop.permute.xlu0 %1206
      %1208 = vrot.lane.b32.xlu0 %v390, 120
      %v1209 = vpop.permute.xlu0 %1208
      %1210 = vrot.lane.b32.xlu0 %v391, 120
      %v1211 = vpop.permute.xlu0 %1210
      %1212 = vrot.lane.b32.xlu0 %v392, 120
      %v1213 = vpop.permute.xlu0 %1212
      %1214 = vrot.lane.b32.xlu0 %v393, 120
      %v1215 = vpop.permute.xlu0 %1214
      %1216 = vrot.lane.b32.xlu0 %v394, 120
      %v1217 = vpop.permute.xlu0 %1216
      %1218 = vrot.lane.b32.xlu0 %v395, 120
      %v1219 = vpop.permute.xlu0 %1218
      %vm1220 = vcmp.lt.s32.totalorder %v413, 120
      %v1221 = vsel %vm1220, %v1213, %v1217
      %v1222 = vsel %vm1220, %v1215, %v1219
      %v1223 = vsel %vm1220, %v1209, %v1213
      %v1224 = vsel %vm1220, %v1211, %v1215
      %v1225 = vsel %vm1220, %v1205, %v1209
      %v1226 = vsel %vm1220, %v1207, %v1211
      %v1227 = vsel %vm1220, %v1217, %v1205
      %v1228 = vsel %vm1220, %v1219, %v1207
      %s1229 = scalar_lea.vmem %s2, 64
      %v1230 = vld [vmem:[%s1229] ss:$8 sm:$0xf]
      %v1232 = vperm.slane %v1230, 0
      %v1233 = vperm.slane %v1230, 1
      %v1234 = vperm.slane %v1230, 2
      %v1235 = vperm.slane %v1230, 3
      %v1240 = vmul.f32 %v1225, %v1232
      %v1241 = vmul.f32 %v1223, %v1233
      %v1242 = vmul.f32 %v1221, %v1234
      %v1243 = vmul.f32 %v1227, %v1235
      %v1244 = vmul.f32 %v1226, %v1232
      %v1245 = vmul.f32 %v1224, %v1233
      %v1246 = vmul.f32 %v1222, %v1234
      %v1247 = vmul.f32 %v1228, %v1235
      %v1248 = vpack.c.bf16 %v1241, %v1240
      %v1249 = vpack.c.bf16 %v1243, %v1242
      %v1250 = vpack.c.bf16 %v1245, %v1244
      %v1251 = vpack.c.bf16 %v1247, %v1246
      %1252 = vst [vmem:[#allocation2 + $0x200] sm:$0xff] %v1248
      %1253 = vst [vmem:[#allocation2 + $0x208] sm:$0xff] %v1249
      %1254 = vst [vmem:[#allocation2 + $0x210] sm:$0xff] %v1250
      %1255 = vst [vmem:[#allocation2 + $0x218] sm:$0xff] %v1251
      %1256 = vrot.lane.b32.xlu0 %v388, 119
      %v1257 = vpop.permute.xlu0 %1256
      %1258 = vrot.lane.b32.xlu0 %v389, 119
      %v1259 = vpop.permute.xlu0 %1258
      %1260 = vrot.lane.b32.xlu0 %v390, 119
      %v1261 = vpop.permute.xlu0 %1260
      %1262 = vrot.lane.b32.xlu0 %v391, 119
      %v1263 = vpop.permute.xlu0 %1262
      %1264 = vrot.lane.b32.xlu0 %v392, 119
      %v1265 = vpop.permute.xlu0 %1264
      %1266 = vrot.lane.b32.xlu0 %v393, 119
      %v1267 = vpop.permute.xlu0 %1266
      %1268 = vrot.lane.b32.xlu0 %v394, 119
      %v1269 = vpop.permute.xlu0 %1268
      %1270 = vrot.lane.b32.xlu0 %v395, 119
      %v1271 = vpop.permute.xlu0 %1270
      %vm1272 = vcmp.lt.s32.totalorder %v413, 119
      %v1273 = vsel %vm1272, %v1265, %v1269
      %v1274 = vsel %vm1272, %v1267, %v1271
      %v1275 = vsel %vm1272, %v1261, %v1265
      %v1276 = vsel %vm1272, %v1263, %v1267
      %v1277 = vsel %vm1272, %v1257, %v1261
      %v1278 = vsel %vm1272, %v1259, %v1263
      %v1279 = vsel %vm1272, %v1269, %v1257
      %v1280 = vsel %vm1272, %v1271, %v1259
      %s1281 = scalar_lea.vmem %s2, 65
      %v1282 = vld [vmem:[%s1281] ss:$8 sm:$0xf]
      %v1284 = vperm.slane %v1282, 0
      %v1285 = vperm.slane %v1282, 1
      %v1286 = vperm.slane %v1282, 2
      %v1287 = vperm.slane %v1282, 3
      %v1292 = vmul.f32 %v1277, %v1284
      %v1293 = vmul.f32 %v1275, %v1285
      %v1294 = vmul.f32 %v1273, %v1286
      %v1295 = vmul.f32 %v1279, %v1287
      %v1296 = vmul.f32 %v1278, %v1284
      %v1297 = vmul.f32 %v1276, %v1285
      %v1298 = vmul.f32 %v1274, %v1286
      %v1299 = vmul.f32 %v1280, %v1287
      %v1300 = vpack.c.bf16 %v1293, %v1292
      %v1301 = vpack.c.bf16 %v1295, %v1294
      %v1302 = vpack.c.bf16 %v1297, %v1296
      %v1303 = vpack.c.bf16 %v1299, %v1298
      %1304 = vst [vmem:[#allocation2 + $0x220] sm:$0xff] %v1300
      %1305 = vst [vmem:[#allocation2 + $0x228] sm:$0xff] %v1301
      %1306 = vst [vmem:[#allocation2 + $0x230] sm:$0xff] %v1302
      %1307 = vst [vmem:[#allocation2 + $0x238] sm:$0xff] %v1303
      %s1308 = scalar_lea.vmem %s2, 66
      %v1309 = vld [vmem:[%s1308] ss:$8 sm:$0xf]
      %v1311 = vperm.slane %v1309, 0
      %v1312 = vperm.slane %v1309, 1
      %v1313 = vperm.slane %v1309, 2
      %v1314 = vperm.slane %v1309, 3
      %v1319 = vmul.f32 %v419, %v1311
      %v1320 = vmul.f32 %v417, %v1312
      %v1321 = vmul.f32 %v415, %v1313
      %v1322 = vmul.f32 %v421, %v1314
      %v1323 = vmul.f32 %v420, %v1311
      %v1324 = vmul.f32 %v418, %v1312
      %v1325 = vmul.f32 %v416, %v1313
      %v1326 = vmul.f32 %v422, %v1314
      %v1327 = vpack.c.bf16 %v1320, %v1319
      %v1328 = vpack.c.bf16 %v1322, %v1321
      %v1329 = vpack.c.bf16 %v1324, %v1323
      %v1330 = vpack.c.bf16 %v1326, %v1325
      %1331 = vst [vmem:[#allocation2 + $0x240] sm:$0xff] %v1327
      %1332 = vst [vmem:[#allocation2 + $0x248] sm:$0xff] %v1328
      %1333 = vst [vmem:[#allocation2 + $0x250] sm:$0xff] %v1329
      %1334 = vst [vmem:[#allocation2 + $0x258] sm:$0xff] %v1330
      %s1335 = scalar_lea.vmem %s2, 67
      %v1336 = vld [vmem:[%s1335] ss:$8 sm:$0xf]
      %v1338 = vperm.slane %v1336, 0
      %v1339 = vperm.slane %v1336, 1
      %v1340 = vperm.slane %v1336, 2
      %v1341 = vperm.slane %v1336, 3
      %v1346 = vmul.f32 %v470, %v1338
      %v1347 = vmul.f32 %v468, %v1339
      %v1348 = vmul.f32 %v466, %v1340
      %v1349 = vmul.f32 %v472, %v1341
      %v1350 = vmul.f32 %v471, %v1338
      %v1351 = vmul.f32 %v469, %v1339
      %v1352 = vmul.f32 %v467, %v1340
      %v1353 = vmul.f32 %v473, %v1341
      %v1354 = vpack.c.bf16 %v1347, %v1346
      %v1355 = vpack.c.bf16 %v1349, %v1348
      %v1356 = vpack.c.bf16 %v1351, %v1350
      %v1357 = vpack.c.bf16 %v1353, %v1352
      %1358 = vst [vmem:[#allocation2 + $0x260] sm:$0xff] %v1354
      %1359 = vst [vmem:[#allocation2 + $0x268] sm:$0xff] %v1355
      %1360 = vst [vmem:[#allocation2 + $0x270] sm:$0xff] %v1356
      %1361 = vst [vmem:[#allocation2 + $0x278] sm:$0xff] %v1357
      %s1362 = scalar_lea.vmem %s2, 68
      %v1363 = vld [vmem:[%s1362] ss:$8 sm:$0xf]
      %v1365 = vperm.slane %v1363, 0
      %v1366 = vperm.slane %v1363, 1
      %v1367 = vperm.slane %v1363, 2
      %v1368 = vperm.slane %v1363, 3
      %v1373 = vmul.f32 %v522, %v1365
      %v1374 = vmul.f32 %v520, %v1366
      %v1375 = vmul.f32 %v518, %v1367
      %v1376 = vmul.f32 %v524, %v1368
      %v1377 = vmul.f32 %v523, %v1365
      %v1378 = vmul.f32 %v521, %v1366
      %v1379 = vmul.f32 %v519, %v1367
      %v1380 = vmul.f32 %v525, %v1368
      %v1381 = vpack.c.bf16 %v1374, %v1373
      %v1382 = vpack.c.bf16 %v1376, %v1375
      %v1383 = vpack.c.bf16 %v1378, %v1377
      %v1384 = vpack.c.bf16 %v1380, %v1379
      %1385 = vst [vmem:[#allocation2 + $0x280] sm:$0xff] %v1381
      %1386 = vst [vmem:[#allocation2 + $0x288] sm:$0xff] %v1382
      %1387 = vst [vmem:[#allocation2 + $0x290] sm:$0xff] %v1383
      %1388 = vst [vmem:[#allocation2 + $0x298] sm:$0xff] %v1384
      %s1389 = scalar_lea.vmem %s2, 69
      %v1390 = vld [vmem:[%s1389] ss:$8 sm:$0xf]
      %v1392 = vperm.slane %v1390, 0
      %v1393 = vperm.slane %v1390, 1
      %v1394 = vperm.slane %v1390, 2
      %v1395 = vperm.slane %v1390, 3
      %v1400 = vmul.f32 %v574, %v1392
      %v1401 = vmul.f32 %v572, %v1393
      %v1402 = vmul.f32 %v570, %v1394
      %v1403 = vmul.f32 %v576, %v1395
      %v1404 = vmul.f32 %v575, %v1392
      %v1405 = vmul.f32 %v573, %v1393
      %v1406 = vmul.f32 %v571, %v1394
      %v1407 = vmul.f32 %v577, %v1395
      %v1408 = vpack.c.bf16 %v1401, %v1400
      %v1409 = vpack.c.bf16 %v1403, %v1402
      %v1410 = vpack.c.bf16 %v1405, %v1404
      %v1411 = vpack.c.bf16 %v1407, %v1406
      %1412 = vst [vmem:[#allocation2 + $0x2a0] sm:$0xff] %v1408
      %1413 = vst [vmem:[#allocation2 + $0x2a8] sm:$0xff] %v1409
      %1414 = vst [vmem:[#allocation2 + $0x2b0] sm:$0xff] %v1410
      %1415 = vst [vmem:[#allocation2 + $0x2b8] sm:$0xff] %v1411
      %s1416 = scalar_lea.vmem %s2, 70
      %v1417 = vld [vmem:[%s1416] ss:$8 sm:$0xf]
      %v1419 = vperm.slane %v1417, 0
      %v1420 = vperm.slane %v1417, 1
      %v1421 = vperm.slane %v1417, 2
      %v1422 = vperm.slane %v1417, 3
      %v1427 = vmul.f32 %v626, %v1419
      %v1428 = vmul.f32 %v624, %v1420
      %v1429 = vmul.f32 %v622, %v1421
      %v1430 = vmul.f32 %v628, %v1422
      %v1431 = vmul.f32 %v627, %v1419
      %v1432 = vmul.f32 %v625, %v1420
      %v1433 = vmul.f32 %v623, %v1421
      %v1434 = vmul.f32 %v629, %v1422
      %v1435 = vpack.c.bf16 %v1428, %v1427
      %v1436 = vpack.c.bf16 %v1430, %v1429
      %v1437 = vpack.c.bf16 %v1432, %v1431
      %v1438 = vpack.c.bf16 %v1434, %v1433
      %1439 = vst [vmem:[#allocation2 + $0x2c0] sm:$0xff] %v1435
      %1440 = vst [vmem:[#allocation2 + $0x2c8] sm:$0xff] %v1436
      %1441 = vst [vmem:[#allocation2 + $0x2d0] sm:$0xff] %v1437
      %1442 = vst [vmem:[#allocation2 + $0x2d8] sm:$0xff] %v1438
      %s1443 = scalar_lea.vmem %s2, 71
      %v1444 = vld [vmem:[%s1443] ss:$8 sm:$0xf]
      %v1446 = vperm.slane %v1444, 0
      %v1447 = vperm.slane %v1444, 1
      %v1448 = vperm.slane %v1444, 2
      %v1449 = vperm.slane %v1444, 3
      %v1454 = vmul.f32 %v678, %v1446
      %v1455 = vmul.f32 %v676, %v1447
      %v1456 = vmul.f32 %v674, %v1448
      %v1457 = vmul.f32 %v680, %v1449
      %v1458 = vmul.f32 %v679, %v1446
      %v1459 = vmul.f32 %v677, %v1447
      %v1460 = vmul.f32 %v675, %v1448
      %v1461 = vmul.f32 %v681, %v1449
      %v1462 = vpack.c.bf16 %v1455, %v1454
      %v1463 = vpack.c.bf16 %v1457, %v1456
      %v1464 = vpack.c.bf16 %v1459, %v1458
      %v1465 = vpack.c.bf16 %v1461, %v1460
      %1466 = vst [vmem:[#allocation2 + $0x2e0] sm:$0xff] %v1462
      %1467 = vst [vmem:[#allocation2 + $0x2e8] sm:$0xff] %v1463
      %1468 = vst [vmem:[#allocation2 + $0x2f0] sm:$0xff] %v1464
      %1469 = vst [vmem:[#allocation2 + $0x2f8] sm:$0xff] %v1465
      %s1470 = scalar_lea.vmem %s2, 96
      %v1471 = vld [vmem:[%s1470] ss:$8 sm:$0xf]
      %v1473 = vperm.slane %v1471, 0
      %v1474 = vperm.slane %v1471, 1
      %v1475 = vperm.slane %v1471, 2
      %v1476 = vperm.slane %v1471, 3
      %v1481 = vmul.f32 %v730, %v1473
      %v1482 = vmul.f32 %v728, %v1474
      %v1483 = vmul.f32 %v726, %v1475
      %v1484 = vmul.f32 %v732, %v1476
      %v1485 = vmul.f32 %v731, %v1473
      %v1486 = vmul.f32 %v729, %v1474
      %v1487 = vmul.f32 %v727, %v1475
      %v1488 = vmul.f32 %v733, %v1476
      %v1489 = vpack.c.bf16 %v1482, %v1481
      %v1490 = vpack.c.bf16 %v1484, %v1483
      %v1491 = vpack.c.bf16 %v1486, %v1485
      %v1492 = vpack.c.bf16 %v1488, %v1487
      %1493 = vst [vmem:[#allocation2 + $0x300] sm:$0xff] %v1489
      %1494 = vst [vmem:[#allocation2 + $0x308] sm:$0xff] %v1490
      %1495 = vst [vmem:[#allocation2 + $0x310] sm:$0xff] %v1491
      %1496 = vst [vmem:[#allocation2 + $0x318] sm:$0xff] %v1492
      %s1497 = scalar_lea.vmem %s2, 97
      %v1498 = vld [vmem:[%s1497] ss:$8 sm:$0xf]
      %v1500 = vperm.slane %v1498, 0
      %v1501 = vperm.slane %v1498, 1
      %v1502 = vperm.slane %v1498, 2
      %v1503 = vperm.slane %v1498, 3
      %v1508 = vmul.f32 %v782, %v1500
      %v1509 = vmul.f32 %v780, %v1501
      %v1510 = vmul.f32 %v778, %v1502
      %v1511 = vmul.f32 %v784, %v1503
      %v1512 = vmul.f32 %v783, %v1500
      %v1513 = vmul.f32 %v781, %v1501
      %v1514 = vmul.f32 %v779, %v1502
      %v1515 = vmul.f32 %v785, %v1503
      %v1516 = vpack.c.bf16 %v1509, %v1508
      %v1517 = vpack.c.bf16 %v1511, %v1510
      %v1518 = vpack.c.bf16 %v1513, %v1512
      %v1519 = vpack.c.bf16 %v1515, %v1514
      %1520 = vst [vmem:[#allocation2 + $0x320] sm:$0xff] %v1516
      %1521 = vst [vmem:[#allocation2 + $0x328] sm:$0xff] %v1517
      %1522 = vst [vmem:[#allocation2 + $0x330] sm:$0xff] %v1518
      %1523 = vst [vmem:[#allocation2 + $0x338] sm:$0xff] %v1519
      %s1524 = scalar_lea.vmem %s2, 98
      %v1525 = vld [vmem:[%s1524] ss:$8 sm:$0xf]
      %v1527 = vperm.slane %v1525, 0
      %v1528 = vperm.slane %v1525, 1
      %v1529 = vperm.slane %v1525, 2
      %v1530 = vperm.slane %v1525, 3
      %v1535 = vmul.f32 %v834, %v1527
      %v1536 = vmul.f32 %v832, %v1528
      %v1537 = vmul.f32 %v830, %v1529
      %v1538 = vmul.f32 %v836, %v1530
      %v1539 = vmul.f32 %v835, %v1527
      %v1540 = vmul.f32 %v833, %v1528
      %v1541 = vmul.f32 %v831, %v1529
      %v1542 = vmul.f32 %v837, %v1530
      %v1543 = vpack.c.bf16 %v1536, %v1535
      %v1544 = vpack.c.bf16 %v1538, %v1537
      %v1545 = vpack.c.bf16 %v1540, %v1539
      %v1546 = vpack.c.bf16 %v1542, %v1541
      %1547 = vst [vmem:[#allocation2 + $0x340] sm:$0xff] %v1543
      %1548 = vst [vmem:[#allocation2 + $0x348] sm:$0xff] %v1544
      %1549 = vst [vmem:[#allocation2 + $0x350] sm:$0xff] %v1545
      %1550 = vst [vmem:[#allocation2 + $0x358] sm:$0xff] %v1546
      %v1551 = vld [vmem:[%s3] sm:$0xff]
      %v1552 = vld [vmem:[%s3 + $0x8] sm:$0xff]
      %v1553 = vld [vmem:[%s3 + $0x10] sm:$0xff]
      %v1554 = vld [vmem:[%s3 + $0x18] sm:$0xff]
      %v1555 = vld [vmem:[#allocation2] sm:$0xff]
      %v1556 = vld [vmem:[#allocation2 + $0x8] sm:$0xff]
      %v1557 = vld [vmem:[#allocation2 + $0x10] sm:$0xff]
      %v1558 = vld [vmem:[#allocation2 + $0x18] sm:$0xff]
      %v1559 = vld [vmem:[#allocation2 + $0x20] sm:$0xff]
      %v1560 = vld [vmem:[#allocation2 + $0x28] sm:$0xff]
      %v1561 = vld [vmem:[#allocation2 + $0x30] sm:$0xff]
      %v1562 = vld [vmem:[#allocation2 + $0x38] sm:$0xff]
      %v1563 = vld [vmem:[#allocation2 + $0x40] sm:$0xff]
      %v1564 = vld [vmem:[#allocation2 + $0x48] sm:$0xff]
      %v1565 = vld [vmem:[#allocation2 + $0x50] sm:$0xff]
      %v1566 = vld [vmem:[#allocation2 + $0x58] sm:$0xff]
      %v1567 = vld [vmem:[#allocation2 + $0x60] sm:$0xff]
      %v1568 = vld [vmem:[#allocation2 + $0x68] sm:$0xff]
      %v1569 = vld [vmem:[#allocation2 + $0x70] sm:$0xff]
      %v1570 = vld [vmem:[#allocation2 + $0x78] sm:$0xff]
      %v1571 = vld [vmem:[#allocation2 + $0x80] sm:$0xff]
      %v1572 = vld [vmem:[#allocation2 + $0x88] sm:$0xff]
      %v1573 = vld [vmem:[#allocation2 + $0x90] sm:$0xff]
      %v1574 = vld [vmem:[#allocation2 + $0x98] sm:$0xff]
      %v1575 = vld [vmem:[#allocation2 + $0xa0] sm:$0xff]
      %v1576 = vld [vmem:[#allocation2 + $0xa8] sm:$0xff]
      %v1577 = vld [vmem:[#allocation2 + $0xb0] sm:$0xff]
      %v1578 = vld [vmem:[#allocation2 + $0xb8] sm:$0xff]
      %v1579 = vld [vmem:[#allocation2 + $0xc0] sm:$0xff]
      %v1580 = vld [vmem:[#allocation2 + $0xc8] sm:$0xff]
      %v1581 = vld [vmem:[#allocation2 + $0xd0] sm:$0xff]
      %v1582 = vld [vmem:[#allocation2 + $0xd8] sm:$0xff]
      %v1583 = vld [vmem:[#allocation2 + $0xe0] sm:$0xff]
      %v1584 = vld [vmem:[#allocation2 + $0xe8] sm:$0xff]
      %v1585 = vld [vmem:[#allocation2 + $0xf0] sm:$0xff]
      %v1586 = vld [vmem:[#allocation2 + $0xf8] sm:$0xff]
      %v1587 = vld [vmem:[#allocation2 + $0x100] sm:$0xff]
      %v1588 = vld [vmem:[#allocation2 + $0x108] sm:$0xff]
      %v1589 = vld [vmem:[#allocation2 + $0x110] sm:$0xff]
      %v1590 = vld [vmem:[#allocation2 + $0x118] sm:$0xff]
      %v1591 = vld [vmem:[#allocation2 + $0x120] sm:$0xff]
      %v1592 = vld [vmem:[#allocation2 + $0x128] sm:$0xff]
      %v1593 = vld [vmem:[#allocation2 + $0x130] sm:$0xff]
      %v1594 = vld [vmem:[#allocation2 + $0x138] sm:$0xff]
      %v1595 = vld [vmem:[#allocation2 + $0x140] sm:$0xff]
      %v1596 = vld [vmem:[#allocation2 + $0x148] sm:$0xff]
      %v1597 = vld [vmem:[#allocation2 + $0x150] sm:$0xff]
      %v1598 = vld [vmem:[#allocation2 + $0x158] sm:$0xff]
      %v1599 = vld [vmem:[#allocation2 + $0x160] sm:$0xff]
      %v1600 = vld [vmem:[#allocation2 + $0x168] sm:$0xff]
      %v1601 = vld [vmem:[#allocation2 + $0x170] sm:$0xff]
      %v1602 = vld [vmem:[#allocation2 + $0x178] sm:$0xff]
      %v1603 = vld [vmem:[#allocation2 + $0x180] sm:$0xff]
      %v1604 = vld [vmem:[#allocation2 + $0x188] sm:$0xff]
      %v1605 = vld [vmem:[#allocation2 + $0x190] sm:$0xff]
      %v1606 = vld [vmem:[#allocation2 + $0x198] sm:$0xff]
      %v1607 = vld [vmem:[#allocation2 + $0x1a0] sm:$0xff]
      %v1608 = vld [vmem:[#allocation2 + $0x1a8] sm:$0xff]
      %v1609 = vld [vmem:[#allocation2 + $0x1b0] sm:$0xff]
      %v1610 = vld [vmem:[#allocation2 + $0x1b8] sm:$0xff]
      %v1611 = vld [vmem:[#allocation2 + $0x1c0] sm:$0xff]
      %v1612 = vld [vmem:[#allocation2 + $0x1c8] sm:$0xff]
      %v1613 = vld [vmem:[#allocation2 + $0x1d0] sm:$0xff]
      %v1614 = vld [vmem:[#allocation2 + $0x1d8] sm:$0xff]
      %v1615 = vld [vmem:[#allocation2 + $0x1e0] sm:$0xff]
      %v1616 = vld [vmem:[#allocation2 + $0x1e8] sm:$0xff]
      %v1617 = vld [vmem:[#allocation2 + $0x1f0] sm:$0xff]
      %v1618 = vld [vmem:[#allocation2 + $0x1f8] sm:$0xff]
      %v1619 = vld [vmem:[#allocation2 + $0x200] sm:$0xff]
      %v1620 = vld [vmem:[#allocation2 + $0x208] sm:$0xff]
      %v1621 = vld [vmem:[#allocation2 + $0x210] sm:$0xff]
      %v1622 = vld [vmem:[#allocation2 + $0x218] sm:$0xff]
      %v1623 = vld [vmem:[#allocation2 + $0x220] sm:$0xff]
      %v1624 = vld [vmem:[#allocation2 + $0x228] sm:$0xff]
      %v1625 = vld [vmem:[#allocation2 + $0x230] sm:$0xff]
      %v1626 = vld [vmem:[#allocation2 + $0x238] sm:$0xff]
      %v1627 = vld [vmem:[#allocation2 + $0x240] sm:$0xff]
      %v1628 = vld [vmem:[#allocation2 + $0x248] sm:$0xff]
      %v1629 = vld [vmem:[#allocation2 + $0x250] sm:$0xff]
      %v1630 = vld [vmem:[#allocation2 + $0x258] sm:$0xff]
      %v1631 = vld [vmem:[#allocation2 + $0x260] sm:$0xff]
      %v1632 = vld [vmem:[#allocation2 + $0x268] sm:$0xff]
      %v1633 = vld [vmem:[#allocation2 + $0x270] sm:$0xff]
      %v1634 = vld [vmem:[#allocation2 + $0x278] sm:$0xff]
      %v1635 = vld [vmem:[#allocation2 + $0x280] sm:$0xff]
      %v1636 = vld [vmem:[#allocation2 + $0x288] sm:$0xff]
      %v1637 = vld [vmem:[#allocation2 + $0x290] sm:$0xff]
      %v1638 = vld [vmem:[#allocation2 + $0x298] sm:$0xff]
      %v1639 = vld [vmem:[#allocation2 + $0x2a0] sm:$0xff]
      %v1640 = vld [vmem:[#allocation2 + $0x2a8] sm:$0xff]
      %v1641 = vld [vmem:[#allocation2 + $0x2b0] sm:$0xff]
      %v1642 = vld [vmem:[#allocation2 + $0x2b8] sm:$0xff]
      %v1643 = vld [vmem:[#allocation2 + $0x2c0] sm:$0xff]
      %v1644 = vld [vmem:[#allocation2 + $0x2c8] sm:$0xff]
      %v1645 = vld [vmem:[#allocation2 + $0x2d0] sm:$0xff]
      %v1646 = vld [vmem:[#allocation2 + $0x2d8] sm:$0xff]
      %v1647 = vld [vmem:[#allocation2 + $0x2e0] sm:$0xff]
      %v1648 = vld [vmem:[#allocation2 + $0x2e8] sm:$0xff]
      %v1649 = vld [vmem:[#allocation2 + $0x2f0] sm:$0xff]
      %v1650 = vld [vmem:[#allocation2 + $0x2f8] sm:$0xff]
      %v1651 = vld [vmem:[#allocation2 + $0x300] sm:$0xff]
      %v1652 = vld [vmem:[#allocation2 + $0x308] sm:$0xff]
      %v1653 = vld [vmem:[#allocation2 + $0x310] sm:$0xff]
      %v1654 = vld [vmem:[#allocation2 + $0x318] sm:$0xff]
      %v1655 = vld [vmem:[#allocation2 + $0x320] sm:$0xff]
      %v1656 = vld [vmem:[#allocation2 + $0x328] sm:$0xff]
      %v1657 = vld [vmem:[#allocation2 + $0x330] sm:$0xff]
      %v1658 = vld [vmem:[#allocation2 + $0x338] sm:$0xff]
      %v1659 = vld [vmem:[#allocation2 + $0x340] sm:$0xff]
      %v1660 = vld [vmem:[#allocation2 + $0x348] sm:$0xff]
      %v1661 = vld [vmem:[#allocation2 + $0x350] sm:$0xff]
      %v1662 = vld [vmem:[#allocation2 + $0x358] sm:$0xff]
      %v1667 = vunpack.c.l.b16 %v1551
      %v1668 = vunpack.c.h.b16 %v1551
      %v1669 = vunpack.c.l.b16 %v1552
      %v1670 = vunpack.c.h.b16 %v1552
      %v1671 = vunpack.c.l.b16 %v1553
      %v1672 = vunpack.c.h.b16 %v1553
      %v1673 = vunpack.c.l.b16 %v1554
      %v1674 = vunpack.c.h.b16 %v1554
      %v1675 = vpack.c.b16 %v1671, %v1667
      %v1676 = vpack.c.b16 %v1672, %v1668
      %v1677 = vpack.c.b16 %v1673, %v1669
      %v1678 = vpack.c.b16 %v1674, %v1670
      %v1790 = vunpack.c.l.b16 %v1555
      %v1791 = vunpack.c.h.b16 %v1555
      %v1792 = vunpack.c.l.b16 %v1556
      %v1793 = vunpack.c.h.b16 %v1556
      %v1794 = vunpack.c.l.b16 %v1557
      %v1795 = vunpack.c.h.b16 %v1557
      %v1796 = vunpack.c.l.b16 %v1558
      %v1797 = vunpack.c.h.b16 %v1558
      %v1798 = vunpack.c.l.b16 %v1559
      %v1799 = vunpack.c.h.b16 %v1559
      %v1800 = vunpack.c.l.b16 %v1560
      %v1801 = vunpack.c.h.b16 %v1560
      %v1802 = vunpack.c.l.b16 %v1561
      %v1803 = vunpack.c.h.b16 %v1561
      %v1804 = vunpack.c.l.b16 %v1562
      %v1805 = vunpack.c.h.b16 %v1562
      %v1806 = vunpack.c.l.b16 %v1563
      %v1807 = vunpack.c.h.b16 %v1563
      %v1808 = vunpack.c.l.b16 %v1564
      %v1809 = vunpack.c.h.b16 %v1564
      %v1810 = vunpack.c.l.b16 %v1565
      %v1811 = vunpack.c.h.b16 %v1565
      %v1812 = vunpack.c.l.b16 %v1566
      %v1813 = vunpack.c.h.b16 %v1566
      %v1814 = vunpack.c.l.b16 %v1567
      %v1815 = vunpack.c.h.b16 %v1567
      %v1816 = vunpack.c.l.b16 %v1568
      %v1817 = vunpack.c.h.b16 %v1568
      %v1818 = vunpack.c.l.b16 %v1569
      %v1819 = vunpack.c.h.b16 %v1569
      %v1820 = vunpack.c.l.b16 %v1570
      %v1821 = vunpack.c.h.b16 %v1570
      %v1822 = vunpack.c.l.b16 %v1571
      %v1823 = vunpack.c.h.b16 %v1571
      %v1824 = vunpack.c.l.b16 %v1572
      %v1825 = vunpack.c.h.b16 %v1572
      %v1826 = vunpack.c.l.b16 %v1573
      %v1827 = vunpack.c.h.b16 %v1573
      %v1828 = vunpack.c.l.b16 %v1574
      %v1829 = vunpack.c.h.b16 %v1574
      %v1830 = vunpack.c.l.b16 %v1575
      %v1831 = vunpack.c.h.b16 %v1575
      %v1832 = vunpack.c.l.b16 %v1576
      %v1833 = vunpack.c.h.b16 %v1576
      %v1834 = vunpack.c.l.b16 %v1577
      %v1835 = vunpack.c.h.b16 %v1577
      %v1836 = vunpack.c.l.b16 %v1578
      %v1837 = vunpack.c.h.b16 %v1578
      %v1838 = vunpack.c.l.b16 %v1579
      %v1839 = vunpack.c.h.b16 %v1579
      %v1840 = vunpack.c.l.b16 %v1580
      %v1841 = vunpack.c.h.b16 %v1580
      %v1842 = vunpack.c.l.b16 %v1581
      %v1843 = vunpack.c.h.b16 %v1581
      %v1844 = vunpack.c.l.b16 %v1582
      %v1845 = vunpack.c.h.b16 %v1582
      %v1846 = vunpack.c.l.b16 %v1583
      %v1847 = vunpack.c.h.b16 %v1583
      %v1848 = vunpack.c.l.b16 %v1584
      %v1849 = vunpack.c.h.b16 %v1584
      %v1850 = vunpack.c.l.b16 %v1585
      %v1851 = vunpack.c.h.b16 %v1585
      %v1852 = vunpack.c.l.b16 %v1586
      %v1853 = vunpack.c.h.b16 %v1586
      %v1854 = vunpack.c.l.b16 %v1587
      %v1855 = vunpack.c.h.b16 %v1587
      %v1856 = vunpack.c.l.b16 %v1588
      %v1857 = vunpack.c.h.b16 %v1588
      %v1858 = vunpack.c.l.b16 %v1589
      %v1859 = vunpack.c.h.b16 %v1589
      %v1860 = vunpack.c.l.b16 %v1590
      %v1861 = vunpack.c.h.b16 %v1590
      %v1862 = vunpack.c.l.b16 %v1591
      %v1863 = vunpack.c.h.b16 %v1591
      %v1864 = vunpack.c.l.b16 %v1592
      %v1865 = vunpack.c.h.b16 %v1592
      %v1866 = vunpack.c.l.b16 %v1593
      %v1867 = vunpack.c.h.b16 %v1593
      %v1868 = vunpack.c.l.b16 %v1594
      %v1869 = vunpack.c.h.b16 %v1594
      %v1870 = vunpack.c.l.b16 %v1595
      %v1871 = vunpack.c.h.b16 %v1595
      %v1872 = vunpack.c.l.b16 %v1596
      %v1873 = vunpack.c.h.b16 %v1596
      %v1874 = vunpack.c.l.b16 %v1597
      %v1875 = vunpack.c.h.b16 %v1597
      %v1876 = vunpack.c.l.b16 %v1598
      %v1877 = vunpack.c.h.b16 %v1598
      %v1878 = vunpack.c.l.b16 %v1599
      %v1879 = vunpack.c.h.b16 %v1599
      %v1880 = vunpack.c.l.b16 %v1600
      %v1881 = vunpack.c.h.b16 %v1600
      %v1882 = vunpack.c.l.b16 %v1601
      %v1883 = vunpack.c.h.b16 %v1601
      %v1884 = vunpack.c.l.b16 %v1602
      %v1885 = vunpack.c.h.b16 %v1602
      %v1886 = vunpack.c.l.b16 %v1603
      %v1887 = vunpack.c.h.b16 %v1603
      %v1888 = vunpack.c.l.b16 %v1604
      %v1889 = vunpack.c.h.b16 %v1604
      %v1890 = vunpack.c.l.b16 %v1605
      %v1891 = vunpack.c.h.b16 %v1605
      %v1892 = vunpack.c.l.b16 %v1606
      %v1893 = vunpack.c.h.b16 %v1606
      %v1894 = vunpack.c.l.b16 %v1607
      %v1895 = vunpack.c.h.b16 %v1607
      %v1896 = vunpack.c.l.b16 %v1608
      %v1897 = vunpack.c.h.b16 %v1608
      %v1898 = vunpack.c.l.b16 %v1609
      %v1899 = vunpack.c.h.b16 %v1609
      %v1900 = vunpack.c.l.b16 %v1610
      %v1901 = vunpack.c.h.b16 %v1610
      %v1902 = vunpack.c.l.b16 %v1611
      %v1903 = vunpack.c.h.b16 %v1611
      %v1904 = vunpack.c.l.b16 %v1612
      %v1905 = vunpack.c.h.b16 %v1612
      %v1906 = vunpack.c.l.b16 %v1613
      %v1907 = vunpack.c.h.b16 %v1613
      %v1908 = vunpack.c.l.b16 %v1614
      %v1909 = vunpack.c.h.b16 %v1614
      %v1910 = vunpack.c.l.b16 %v1615
      %v1911 = vunpack.c.h.b16 %v1615
      %v1912 = vunpack.c.l.b16 %v1616
      %v1913 = vunpack.c.h.b16 %v1616
      %v1914 = vunpack.c.l.b16 %v1617
      %v1915 = vunpack.c.h.b16 %v1617
      %v1916 = vunpack.c.l.b16 %v1618
      %v1917 = vunpack.c.h.b16 %v1618
      %v1918 = vunpack.c.l.b16 %v1619
      %v1919 = vunpack.c.h.b16 %v1619
      %v1920 = vunpack.c.l.b16 %v1620
      %v1921 = vunpack.c.h.b16 %v1620
      %v1922 = vunpack.c.l.b16 %v1621
      %v1923 = vunpack.c.h.b16 %v1621
      %v1924 = vunpack.c.l.b16 %v1622
      %v1925 = vunpack.c.h.b16 %v1622
      %v1926 = vunpack.c.l.b16 %v1623
      %v1927 = vunpack.c.h.b16 %v1623
      %v1928 = vunpack.c.l.b16 %v1624
      %v1929 = vunpack.c.h.b16 %v1624
      %v1930 = vunpack.c.l.b16 %v1625
      %v1931 = vunpack.c.h.b16 %v1625
      %v1932 = vunpack.c.l.b16 %v1626
      %v1933 = vunpack.c.h.b16 %v1626
      %v1934 = vunpack.c.l.b16 %v1627
      %v1935 = vunpack.c.h.b16 %v1627
      %v1936 = vunpack.c.l.b16 %v1628
      %v1937 = vunpack.c.h.b16 %v1628
      %v1938 = vunpack.c.l.b16 %v1629
      %v1939 = vunpack.c.h.b16 %v1629
      %v1940 = vunpack.c.l.b16 %v1630
      %v1941 = vunpack.c.h.b16 %v1630
      %v1942 = vunpack.c.l.b16 %v1631
      %v1943 = vunpack.c.h.b16 %v1631
      %v1944 = vunpack.c.l.b16 %v1632
      %v1945 = vunpack.c.h.b16 %v1632
      %v1946 = vunpack.c.l.b16 %v1633
      %v1947 = vunpack.c.h.b16 %v1633
      %v1948 = vunpack.c.l.b16 %v1634
      %v1949 = vunpack.c.h.b16 %v1634
      %v1950 = vunpack.c.l.b16 %v1635
      %v1951 = vunpack.c.h.b16 %v1635
      %v1952 = vunpack.c.l.b16 %v1636
      %v1953 = vunpack.c.h.b16 %v1636
      %v1954 = vunpack.c.l.b16 %v1637
      %v1955 = vunpack.c.h.b16 %v1637
      %v1956 = vunpack.c.l.b16 %v1638
      %v1957 = vunpack.c.h.b16 %v1638
      %v1958 = vunpack.c.l.b16 %v1639
      %v1959 = vunpack.c.h.b16 %v1639
      %v1960 = vunpack.c.l.b16 %v1640
      %v1961 = vunpack.c.h.b16 %v1640
      %v1962 = vunpack.c.l.b16 %v1641
      %v1963 = vunpack.c.h.b16 %v1641
      %v1964 = vunpack.c.l.b16 %v1642
      %v1965 = vunpack.c.h.b16 %v1642
      %v1966 = vunpack.c.l.b16 %v1643
      %v1967 = vunpack.c.h.b16 %v1643
      %v1968 = vunpack.c.l.b16 %v1644
      %v1969 = vunpack.c.h.b16 %v1644
      %v1970 = vunpack.c.l.b16 %v1645
      %v1971 = vunpack.c.h.b16 %v1645
      %v1972 = vunpack.c.l.b16 %v1646
      %v1973 = vunpack.c.h.b16 %v1646
      %v1974 = vunpack.c.l.b16 %v1647
      %v1975 = vunpack.c.h.b16 %v1647
      %v1976 = vunpack.c.l.b16 %v1648
      %v1977 = vunpack.c.h.b16 %v1648
      %v1978 = vunpack.c.l.b16 %v1649
      %v1979 = vunpack.c.h.b16 %v1649
      %v1980 = vunpack.c.l.b16 %v1650
      %v1981 = vunpack.c.h.b16 %v1650
      %v1982 = vunpack.c.l.b16 %v1651
      %v1983 = vunpack.c.h.b16 %v1651
      %v1984 = vunpack.c.l.b16 %v1652
      %v1985 = vunpack.c.h.b16 %v1652
      %v1986 = vunpack.c.l.b16 %v1653
      %v1987 = vunpack.c.h.b16 %v1653
      %v1988 = vunpack.c.l.b16 %v1654
      %v1989 = vunpack.c.h.b16 %v1654
      %v1990 = vunpack.c.l.b16 %v1655
      %v1991 = vunpack.c.h.b16 %v1655
      %v1992 = vunpack.c.l.b16 %v1656
      %v1993 = vunpack.c.h.b16 %v1656
      %v1994 = vunpack.c.l.b16 %v1657
      %v1995 = vunpack.c.h.b16 %v1657
      %v1996 = vunpack.c.l.b16 %v1658
      %v1997 = vunpack.c.h.b16 %v1658
      %v1998 = vunpack.c.l.b16 %v1659
      %v1999 = vunpack.c.h.b16 %v1659
      %v2000 = vunpack.c.l.b16 %v1660
      %v2001 = vunpack.c.h.b16 %v1660
      %v2002 = vunpack.c.l.b16 %v1661
      %v2003 = vunpack.c.h.b16 %v1661
      %v2004 = vunpack.c.l.b16 %v1662
      %v2005 = vunpack.c.h.b16 %v1662
      %v2006 = vpack.c.b16 %v1794, %v1790
      %v2007 = vpack.c.b16 %v1795, %v1791
      %v2008 = vpack.c.b16 %v1796, %v1792
      %v2009 = vpack.c.b16 %v1797, %v1793
      %v2010 = vpack.c.b16 %v1802, %v1798
      %v2011 = vpack.c.b16 %v1803, %v1799
      %v2012 = vpack.c.b16 %v1804, %v1800
      %v2013 = vpack.c.b16 %v1805, %v1801
      %v2014 = vpack.c.b16 %v1810, %v1806
      %v2015 = vpack.c.b16 %v1811, %v1807
      %v2016 = vpack.c.b16 %v1812, %v1808
      %v2017 = vpack.c.b16 %v1813, %v1809
      %v2018 = vpack.c.b16 %v1818, %v1814
      %v2019 = vpack.c.b16 %v1819, %v1815
      %v2020 = vpack.c.b16 %v1820, %v1816
      %v2021 = vpack.c.b16 %v1821, %v1817
      %v2022 = vpack.c.b16 %v1826, %v1822
      %v2023 = vpack.c.b16 %v1827, %v1823
      %v2024 = vpack.c.b16 %v1828, %v1824
      %v2025 = vpack.c.b16 %v1829, %v1825
      %v2026 = vpack.c.b16 %v1834, %v1830
      %v2027 = vpack.c.b16 %v1835, %v1831
      %v2028 = vpack.c.b16 %v1836, %v1832
      %v2029 = vpack.c.b16 %v1837, %v1833
      %v2030 = vpack.c.b16 %v1842, %v1838
      %v2031 = vpack.c.b16 %v1843, %v1839
      %v2032 = vpack.c.b16 %v1844, %v1840
      %v2033 = vpack.c.b16 %v1845, %v1841
      %v2034 = vpack.c.b16 %v1850, %v1846
      %v2035 = vpack.c.b16 %v1851, %v1847
      %v2036 = vpack.c.b16 %v1852, %v1848
      %v2037 = vpack.c.b16 %v1853, %v1849
      %v2038 = vpack.c.b16 %v1858, %v1854
      %v2039 = vpack.c.b16 %v1859, %v1855
      %v2040 = vpack.c.b16 %v1860, %v1856
      %v2041 = vpack.c.b16 %v1861, %v1857
      %v2042 = vpack.c.b16 %v1866, %v1862
      %v2043 = vpack.c.b16 %v1867, %v1863
      %v2044 = vpack.c.b16 %v1868, %v1864
      %v2045 = vpack.c.b16 %v1869, %v1865
      %v2046 = vpack.c.b16 %v1874, %v1870
      %v2047 = vpack.c.b16 %v1875, %v1871
      %v2048 = vpack.c.b16 %v1876, %v1872
      %v2049 = vpack.c.b16 %v1877, %v1873
      %v2050 = vpack.c.b16 %v1882, %v1878
      %v2051 = vpack.c.b16 %v1883, %v1879
      %v2052 = vpack.c.b16 %v1884, %v1880
      %v2053 = vpack.c.b16 %v1885, %v1881
      %v2054 = vpack.c.b16 %v1890, %v1886
      %v2055 = vpack.c.b16 %v1891, %v1887
      %v2056 = vpack.c.b16 %v1892, %v1888
      %v2057 = vpack.c.b16 %v1893, %v1889
      %v2058 = vpack.c.b16 %v1898, %v1894
      %v2059 = vpack.c.b16 %v1899, %v1895
      %v2060 = vpack.c.b16 %v1900, %v1896
      %v2061 = vpack.c.b16 %v1901, %v1897
      %v2062 = vpack.c.b16 %v1906, %v1902
      %v2063 = vpack.c.b16 %v1907, %v1903
      %v2064 = vpack.c.b16 %v1908, %v1904
      %v2065 = vpack.c.b16 %v1909, %v1905
      %v2066 = vpack.c.b16 %v1914, %v1910
      %v2067 = vpack.c.b16 %v1915, %v1911
      %v2068 = vpack.c.b16 %v1916, %v1912
      %v2069 = vpack.c.b16 %v1917, %v1913
      %v2070 = vpack.c.b16 %v1922, %v1918
      %v2071 = vpack.c.b16 %v1923, %v1919
      %v2072 = vpack.c.b16 %v1924, %v1920
      %v2073 = vpack.c.b16 %v1925, %v1921
      %v2074 = vpack.c.b16 %v1930, %v1926
      %v2075 = vpack.c.b16 %v1931, %v1927
      %v2076 = vpack.c.b16 %v1932, %v1928
      %v2077 = vpack.c.b16 %v1933, %v1929
      %v2078 = vpack.c.b16 %v1938, %v1934
      %v2079 = vpack.c.b16 %v1939, %v1935
      %v2080 = vpack.c.b16 %v1940, %v1936
      %v2081 = vpack.c.b16 %v1941, %v1937
      %v2082 = vpack.c.b16 %v1946, %v1942
      %v2083 = vpack.c.b16 %v1947, %v1943
      %v2084 = vpack.c.b16 %v1948, %v1944
      %v2085 = vpack.c.b16 %v1949, %v1945
      %v2086 = vpack.c.b16 %v1954, %v1950
      %v2087 = vpack.c.b16 %v1955, %v1951
      %v2088 = vpack.c.b16 %v1956, %v1952
      %v2089 = vpack.c.b16 %v1957, %v1953
      %v2090 = vpack.c.b16 %v1962, %v1958
      %v2091 = vpack.c.b16 %v1963, %v1959
      %v2092 = vpack.c.b16 %v1964, %v1960
      %v2093 = vpack.c.b16 %v1965, %v1961
      %v2094 = vpack.c.b16 %v1970, %v1966
      %v2095 = vpack.c.b16 %v1971, %v1967
      %v2096 = vpack.c.b16 %v1972, %v1968
      %v2097 = vpack.c.b16 %v1973, %v1969
      %v2098 = vpack.c.b16 %v1978, %v1974
      %v2099 = vpack.c.b16 %v1979, %v1975
      %v2100 = vpack.c.b16 %v1980, %v1976
      %v2101 = vpack.c.b16 %v1981, %v1977
      %v2102 = vpack.c.b16 %v1986, %v1982
      %v2103 = vpack.c.b16 %v1987, %v1983
      %v2104 = vpack.c.b16 %v1988, %v1984
      %v2105 = vpack.c.b16 %v1989, %v1985
      %v2106 = vpack.c.b16 %v1994, %v1990
      %v2107 = vpack.c.b16 %v1995, %v1991
      %v2108 = vpack.c.b16 %v1996, %v1992
      %v2109 = vpack.c.b16 %v1997, %v1993
      %v2110 = vpack.c.b16 %v2002, %v1998
      %v2111 = vpack.c.b16 %v2003, %v1999
      %v2112 = vpack.c.b16 %v2004, %v2000
      %v2113 = vpack.c.b16 %v2005, %v2001
      %vm2222 = vcmask 392192
      %v2224 = vsel %vm2222, %v1678, 0
      %2226 = vmatpush.bf16.msra.mxu0 %v2034
      %2227 = vmatpush.bf16.msra.mxu0 %v2030
      %2228 = vmatpush.bf16.msra.mxu0 %v2026
      %2229 = vmatpush.bf16.msra.mxu0 %v2022
      %2230 = vmatpush.bf16.msra.mxu0 %v2018
      %2231 = vmatpush.bf16.msra.mxu0 %v2014
      %2232 = vmatpush.bf16.msra.mxu0 %v2010
      %2233 = vmatpush.bf16.msra.mxu0 %v2006
      %2234 = vmatmul.bf16.gmra.mxu0 %v1675
      %v2235 = vpop.f32.mrf.mxu0
      %v2236 = vadd.f32 0.0, %v2235
      %v2237 = vpop.f32.mrf.mxu0
      %v2238 = vadd.f32 0.0, %v2237
      %2239 = vdwg.mxu0
      %2240 = vmatpush.bf16.msra.mxu0 %v2066
      %2241 = vmatpush.bf16.msra.mxu0 %v2062
      %2242 = vmatpush.bf16.msra.mxu0 %v2058
      %2243 = vmatpush.bf16.msra.mxu0 %v2054
      %2244 = vmatpush.bf16.msra.mxu0 %v2050
      %2245 = vmatpush.bf16.msra.mxu0 %v2046
      %2246 = vmatpush.bf16.msra.mxu0 %v2042
      %2247 = vmatpush.bf16.msra.mxu0 %v2038
      %2248 = vmatmul.bf16.gmra.mxu0 %v1676
      %v2249 = vpop.f32.mrf.mxu0
      %v2250 = vadd.f32 %v2236, %v2249
      %v2251 = vpop.f32.mrf.mxu0
      %v2252 = vadd.f32 %v2238, %v2251
      %2253 = vdwg.mxu0
      %2254 = vmatpush.bf16.msra.mxu0 %v2098
      %2255 = vmatpush.bf16.msra.mxu0 %v2094
      %2256 = vmatpush.bf16.msra.mxu0 %v2090
      %2257 = vmatpush.bf16.msra.mxu0 %v2086
      %2258 = vmatpush.bf16.msra.mxu0 %v2082
      %2259 = vmatpush.bf16.msra.mxu0 %v2078
      %2260 = vmatpush.bf16.msra.mxu0 %v2074
      %2261 = vmatpush.bf16.msra.mxu0 %v2070
      %2262 = vmatmul.bf16.gmra.mxu0 %v1677
      %v2263 = vpop.f32.mrf.mxu0
      %v2264 = vadd.f32 %v2250, %v2263
      %v2265 = vpop.f32.mrf.mxu0
      %v2266 = vadd.f32 %v2252, %v2265
      %2267 = vdwg.mxu0
      %2268 = vmatpush.bf16.msra.mxu0 0
      %2269 = vmatpush.bf16.msra.mxu0 0
      %2270 = vmatpush.bf16.msra.mxu0 0
      %2271 = vmatpush.bf16.msra.mxu0 0
      %2272 = vmatpush.bf16.msra.mxu0 0
      %2273 = vmatpush.bf16.msra.mxu0 %v2110
      %2274 = vmatpush.bf16.msra.mxu0 %v2106
      %2275 = vmatpush.bf16.msra.mxu0 %v2102
      %2276 = vmatmul.bf16.gmra.mxu0 %v2224
      %v2277 = vpop.f32.mrf.mxu0
      %v2278 = vadd.f32 %v2264, %v2277
      %v2279 = vpop.f32.mrf.mxu0
      %v2280 = vadd.f32 %v2266, %v2279
      %2281 = vdwg.mxu0
      %2282 = vmatpush.bf16.msra.mxu0 %v2035
      %2283 = vmatpush.bf16.msra.mxu0 %v2031
      %2284 = vmatpush.bf16.msra.mxu0 %v2027
      %2285 = vmatpush.bf16.msra.mxu0 %v2023
      %2286 = vmatpush.bf16.msra.mxu0 %v2019
      %2287 = vmatpush.bf16.msra.mxu0 %v2015
      %2288 = vmatpush.bf16.msra.mxu0 %v2011
      %2289 = vmatpush.bf16.msra.mxu0 %v2007
      %2290 = vmatmul.bf16.gmra.mxu0 %v1675
      %v2291 = vpop.f32.mrf.mxu0
      %v2292 = vadd.f32 0.0, %v2291
      %v2293 = vpop.f32.mrf.mxu0
      %v2294 = vadd.f32 0.0, %v2293
      %2295 = vdwg.mxu0
      %2296 = vmatpush.bf16.msra.mxu0 %v2067
      %2297 = vmatpush.bf16.msra.mxu0 %v2063
      %2298 = vmatpush.bf16.msra.mxu0 %v2059
      %2299 = vmatpush.bf16.msra.mxu0 %v2055
      %2300 = vmatpush.bf16.msra.mxu0 %v2051
      %2301 = vmatpush.bf16.msra.mxu0 %v2047
      %2302 = vmatpush.bf16.msra.mxu0 %v2043
      %2303 = vmatpush.bf16.msra.mxu0 %v2039
      %2304 = vmatmul.bf16.gmra.mxu0 %v1676
      %v2305 = vpop.f32.mrf.mxu0
      %v2306 = vadd.f32 %v2292, %v2305
      %v2307 = vpop.f32.mrf.mxu0
      %v2308 = vadd.f32 %v2294, %v2307
      %2309 = vdwg.mxu0
      %2310 = vmatpush.bf16.msra.mxu0 %v2099
      %2311 = vmatpush.bf16.msra.mxu0 %v2095
      %2312 = vmatpush.bf16.msra.mxu0 %v2091
      %2313 = vmatpush.bf16.msra.mxu0 %v2087
      %2314 = vmatpush.bf16.msra.mxu0 %v2083
      %2315 = vmatpush.bf16.msra.mxu0 %v2079
      %2316 = vmatpush.bf16.msra.mxu0 %v2075
      %2317 = vmatpush.bf16.msra.mxu0 %v2071
      %2318 = vmatmul.bf16.gmra.mxu0 %v1677
      %v2319 = vpop.f32.mrf.mxu0
      %v2320 = vadd.f32 %v2306, %v2319
      %v2321 = vpop.f32.mrf.mxu0
      %v2322 = vadd.f32 %v2308, %v2321
      %2323 = vdwg.mxu0
      %2324 = vmatpush.bf16.msra.mxu0 0
      %2325 = vmatpush.bf16.msra.mxu0 0
      %2326 = vmatpush.bf16.msra.mxu0 0
      %2327 = vmatpush.bf16.msra.mxu0 0
      %2328 = vmatpush.bf16.msra.mxu0 0
      %2329 = vmatpush.bf16.msra.mxu0 %v2111
      %2330 = vmatpush.bf16.msra.mxu0 %v2107
      %2331 = vmatpush.bf16.msra.mxu0 %v2103
      %2332 = vmatmul.bf16.gmra.mxu0 %v2224
      %v2333 = vpop.f32.mrf.mxu0
      %v2334 = vadd.f32 %v2320, %v2333
      %v2335 = vpop.f32.mrf.mxu0
      %v2336 = vadd.f32 %v2322, %v2335
      %2337 = vdwg.mxu0
      %2338 = vmatpush.bf16.msra.mxu0 %v2036
      %2339 = vmatpush.bf16.msra.mxu0 %v2032
      %2340 = vmatpush.bf16.msra.mxu0 %v2028
      %2341 = vmatpush.bf16.msra.mxu0 %v2024
      %2342 = vmatpush.bf16.msra.mxu0 %v2020
      %2343 = vmatpush.bf16.msra.mxu0 %v2016
      %2344 = vmatpush.bf16.msra.mxu0 %v2012
      %2345 = vmatpush.bf16.msra.mxu0 %v2008
      %2346 = vmatmul.bf16.gmra.mxu0 %v1675
      %v2347 = vpop.f32.mrf.mxu0
      %v2348 = vadd.f32 0.0, %v2347
      %v2349 = vpop.f32.mrf.mxu0
      %v2350 = vadd.f32 0.0, %v2349
      %2351 = vdwg.mxu0
      %2352 = vmatpush.bf16.msra.mxu0 %v2068
      %2353 = vmatpush.bf16.msra.mxu0 %v2064
      %2354 = vmatpush.bf16.msra.mxu0 %v2060
      %2355 = vmatpush.bf16.msra.mxu0 %v2056
      %2356 = vmatpush.bf16.msra.mxu0 %v2052
      %2357 = vmatpush.bf16.msra.mxu0 %v2048
      %2358 = vmatpush.bf16.msra.mxu0 %v2044
      %2359 = vmatpush.bf16.msra.mxu0 %v2040
      %2360 = vmatmul.bf16.gmra.mxu0 %v1676
      %v2361 = vpop.f32.mrf.mxu0
      %v2362 = vadd.f32 %v2348, %v2361
      %v2363 = vpop.f32.mrf.mxu0
      %v2364 = vadd.f32 %v2350, %v2363
      %2365 = vdwg.mxu0
      %2366 = vmatpush.bf16.msra.mxu0 %v2100
      %2367 = vmatpush.bf16.msra.mxu0 %v2096
      %2368 = vmatpush.bf16.msra.mxu0 %v2092
      %2369 = vmatpush.bf16.msra.mxu0 %v2088
      %2370 = vmatpush.bf16.msra.mxu0 %v2084
      %2371 = vmatpush.bf16.msra.mxu0 %v2080
      %2372 = vmatpush.bf16.msra.mxu0 %v2076
      %2373 = vmatpush.bf16.msra.mxu0 %v2072
      %2374 = vmatmul.bf16.gmra.mxu0 %v1677
      %v2375 = vpop.f32.mrf.mxu0
      %v2376 = vadd.f32 %v2362, %v2375
      %v2377 = vpop.f32.mrf.mxu0
      %v2378 = vadd.f32 %v2364, %v2377
      %2379 = vdwg.mxu0
      %2380 = vmatpush.bf16.msra.mxu0 0
      %2381 = vmatpush.bf16.msra.mxu0 0
      %2382 = vmatpush.bf16.msra.mxu0 0
      %2383 = vmatpush.bf16.msra.mxu0 0
      %2384 = vmatpush.bf16.msra.mxu0 0
      %2385 = vmatpush.bf16.msra.mxu0 %v2112
      %2386 = vmatpush.bf16.msra.mxu0 %v2108
      %2387 = vmatpush.bf16.msra.mxu0 %v2104
      %2388 = vmatmul.bf16.gmra.mxu0 %v2224
      %v2389 = vpop.f32.mrf.mxu0
      %v2390 = vadd.f32 %v2376, %v2389
      %v2391 = vpop.f32.mrf.mxu0
      %v2392 = vadd.f32 %v2378, %v2391
      %2393 = vdwg.mxu0
      %2394 = vmatpush.bf16.msra.mxu0 %v2037
      %2395 = vmatpush.bf16.msra.mxu0 %v2033
      %2396 = vmatpush.bf16.msra.mxu0 %v2029
      %2397 = vmatpush.bf16.msra.mxu0 %v2025
      %2398 = vmatpush.bf16.msra.mxu0 %v2021
      %2399 = vmatpush.bf16.msra.mxu0 %v2017
      %2400 = vmatpush.bf16.msra.mxu0 %v2013
      %2401 = vmatpush.bf16.msra.mxu0 %v2009
      %2402 = vmatmul.bf16.gmra.mxu0 %v1675
      %v2403 = vpop.f32.mrf.mxu0
      %v2404 = vadd.f32 0.0, %v2403
      %v2405 = vpop.f32.mrf.mxu0
      %v2406 = vadd.f32 0.0, %v2405
      %2407 = vdwg.mxu0
      %2408 = vmatpush.bf16.msra.mxu0 %v2069
      %2409 = vmatpush.bf16.msra.mxu0 %v2065
      %2410 = vmatpush.bf16.msra.mxu0 %v2061
      %2411 = vmatpush.bf16.msra.mxu0 %v2057
      %2412 = vmatpush.bf16.msra.mxu0 %v2053
      %2413 = vmatpush.bf16.msra.mxu0 %v2049
      %2414 = vmatpush.bf16.msra.mxu0 %v2045
      %2415 = vmatpush.bf16.msra.mxu0 %v2041
      %2416 = vmatmul.bf16.gmra.mxu0 %v1676
      %v2417 = vpop.f32.mrf.mxu0
      %v2418 = vadd.f32 %v2404, %v2417
      %v2419 = vpop.f32.mrf.mxu0
      %v2420 = vadd.f32 %v2406, %v2419
      %2421 = vdwg.mxu0
      %2422 = vmatpush.bf16.msra.mxu0 %v2101
      %2423 = vmatpush.bf16.msra.mxu0 %v2097
      %2424 = vmatpush.bf16.msra.mxu0 %v2093
      %2425 = vmatpush.bf16.msra.mxu0 %v2089
      %2426 = vmatpush.bf16.msra.mxu0 %v2085
      %2427 = vmatpush.bf16.msra.mxu0 %v2081
      %2428 = vmatpush.bf16.msra.mxu0 %v2077
      %2429 = vmatpush.bf16.msra.mxu0 %v2073
      %2430 = vmatmul.bf16.gmra.mxu0 %v1677
      %v2431 = vpop.f32.mrf.mxu0
      %v2432 = vadd.f32 %v2418, %v2431
      %v2433 = vpop.f32.mrf.mxu0
      %v2434 = vadd.f32 %v2420, %v2433
      %2435 = vdwg.mxu0
      %2436 = vmatpush.bf16.msra.mxu0 0
      %2437 = vmatpush.bf16.msra.mxu0 0
      %2438 = vmatpush.bf16.msra.mxu0 0
      %2439 = vmatpush.bf16.msra.mxu0 0
      %2440 = vmatpush.bf16.msra.mxu0 0
      %2441 = vmatpush.bf16.msra.mxu0 %v2113
      %2442 = vmatpush.bf16.msra.mxu0 %v2109
      %2443 = vmatpush.bf16.msra.mxu0 %v2105
      %2444 = vmatmul.bf16.gmra.mxu0 %v2224
      %v2445 = vpop.f32.mrf.mxu0
      %v2446 = vadd.f32 %v2432, %v2445
      %v2447 = vpop.f32.mrf.mxu0
      %v2448 = vadd.f32 %v2434, %v2447
      %2449 = vdwg.mxu0
      %v2450 = vpack.c.bf16 %v2334, %v2278
      %v2451 = vpack.c.bf16 %v2446, %v2390
      %v2452 = vpack.c.bf16 %v2336, %v2280
      %v2453 = vpack.c.bf16 %v2448, %v2392
      %2454 = vst [vmem:[%s232] sm:$0xff] %v2450
      %2455 = vst [vmem:[%s232 + $0x8] sm:$0xff] %v2451
      %2456 = vst [vmem:[%s232 + $0x10] sm:$0xff] %v2452
      %2457 = vst [vmem:[%s232 + $0x18] sm:$0xff] %v2453
      %v2458 = vadd.f32 %v2278, %v2334
      %v2459 = vadd.f32 %v2458, %v2390
      %v2460 = vadd.f32 %v2459, %v2446
      %2461 = vadd.xlane.f32.xlu0 %v2460
      %v2462 = vpop.xlane.xlu0 %2461
      %v2463 = vadd.f32 %v2280, %v2336
      %v2464 = vadd.f32 %v2463, %v2392
      %v2465 = vadd.f32 %v2464, %v2448
      %2466 = vadd.xlane.f32.xlu0 %v2465
      %v2467 = vpop.xlane.xlu0 %2466
      %v2468 = vmul.f32 %v2278, %v2278
      %v2469 = vmul.f32 %v2334, %v2334
      %v2470 = vmul.f32 %v2390, %v2390
      %v2471 = vmul.f32 %v2446, %v2446
      %v2472 = vmul.f32 %v2280, %v2280
      %v2473 = vmul.f32 %v2336, %v2336
      %v2474 = vmul.f32 %v2392, %v2392
      %v2475 = vmul.f32 %v2448, %v2448
      %v2476 = vadd.f32 %v2468, %v2469
      %v2477 = vadd.f32 %v2476, %v2470
      %v2478 = vadd.f32 %v2477, %v2471
      %2479 = vadd.xlane.f32.xlu0 %v2478
      %v2480 = vpop.xlane.xlu0 %2479
      %v2481 = vadd.f32 %v2472, %v2473
      %v2482 = vadd.f32 %v2481, %v2474
      %v2483 = vadd.f32 %v2482, %v2475
      %2484 = vadd.xlane.f32.xlu0 %v2483
      %v2485 = vpop.xlane.xlu0 %2484
      %vm2486 = vcmask 7168
      %v2487 = vsel %vm2486, %v2462, %v2480
      %v2488 = vsel %vm2486, %v2467, %v2485
      %vm2489 = vcmask 15360
      %2490 = vst.msk [vmem:[%s237] sm:$0xff] %vm2489, %v2487
      %2491 = vst.msk [vmem:[%s237 + $0x8] sm:$0xff] %vm2489, %v2488
      %p2492 = scmp.lt.s32.totalorder %s17, 1
      %s2493 = scalar_select %p2492, %s17, 1
      %s2494 = smul.addr %s2493, 8
      %s2495 = smul.addr %s2494, 4
      %s2496 = scalar_lea.vmem %s4, %s2495
      %p2497 = scmp.lt.s32.totalorder %s17, 1
      %s2498 = scalar_select %p2497, %s17, 1
      %s2499 = smul.addr %s2498, 2
      %s2500 = smul.addr %s2499, 8
      %s2501 = scalar_lea.vmem %s5, %s2500
      // Predicated region
      $region37: #{up_3d_forward.3} parent=35 // pred_check
        %p2502 = pneg %p124
      $region38: #{up_3d_forward.3} parent=35 // pred_check_branch
        %2504 = sbr.rel (%p2502) target = $region40
      $region39: #{up_3d_forward.3} parent=35 // pred_region
        _
      $region40: #{up_3d_forward.3} parent=35 // pred_fallthru
        _
      // Predicated region
      $region41: #{up_3d_forward.3} parent=35 // pred_check
        %p2505 = pneg %p150
      $region42: #{up_3d_forward.3} parent=35 // pred_check_branch
        %2507 = sbr.rel (%p2505) target = $region44
      $region43: #{up_3d_forward.3} parent=35 // pred_region
        _
      $region44: #{up_3d_forward.3} parent=35 // pred_fallthru
        _
    $region36: #{up_3d_forward.3} parent=5 // pred_fallthru
      _
    %p2508 = scmp.le.s32.totalorder 2, %s12
    // Predicated region
    $region45: #{up_3d_forward.3} parent=5 // pred_check
      %p2509 = pneg %p2508
    $region46: #{up_3d_forward.3} parent=5 // pred_check_branch
      %2511 = sbr.rel (%p2509) target = $region48
    $region47: #{up_3d_forward.3} parent=5 // pred_region
      %s2512 = ssub.s32 %s12, 2
      // Predicated region
      $region49: #{up_3d_forward.3} parent=47 // pred_check
        %p2513 = pneg %p130
      $region50: #{up_3d_forward.3} parent=47 // pred_check_branch
        %2515 = sbr.rel (%p2513) target = $region52
      $region51: #{up_3d_forward.3} parent=47 // pred_region
        %p2516 = scmp.lt.s32.totalorder %s18, 1
        %s2517 = scalar_select %p2516, %s18, 1
        %s2518 = smul.addr %s2517, 8
        %s2519 = smul.addr %s2518, 4
        %s2520 = scalar_lea.vmem %s4, %s2519
      $region52: #{up_3d_forward.3} parent=47 // pred_fallthru
        _
      // Predicated region
      $region53: #{up_3d_forward.3} parent=47 // pred_check
        %p2521 = pneg %p156
      $region54: #{up_3d_forward.3} parent=47 // pred_check_branch
        %2523 = sbr.rel (%p2521) target = $region56
      $region55: #{up_3d_forward.3} parent=47 // pred_region
        %p2524 = scmp.lt.s32.totalorder %s18, 1
        %s2525 = scalar_select %p2524, %s18, 1
        %s2526 = smul.addr %s2525, 2
        %s2527 = smul.addr %s2526, 8
        %s2528 = scalar_lea.vmem %s5, %s2527
      $region56: #{up_3d_forward.3} parent=47 // pred_fallthru
        _
    $region48: #{up_3d_forward.3} parent=5 // pred_fallthru
      _
  $region6: #{up_3d_forward.3} parent=0 // loop_footer
    %s16 = sadd.s32 1, %s12
  $region7: #{up_3d_forward.3} parent=0 // loop_footer_branch
    %11 = sbr.rel target = $region3
  $region8: #{up_3d_forward.3} parent=0 // loop_exit
    _

</llo_original>
